<compile_context>
chip_gen: v7x
topology: tpu7x:2x2x1
jax: 0.10.0
libtpu: 0.0.40
codegen_flags: <defaults>
</compile_context>

<pallas_src>
import functools
import math

import jax
import jax.numpy as jnp
from jax.experimental import pallas as pl
from jax.experimental.pallas import tpu as pltpu


# --------------------------------------------------------------------------- #
# fused kernel: input_linear + L x TransformerEncoderLayer + last-row + fc    #
# --------------------------------------------------------------------------- #

def fused_forward_kernel(nhead, d_model, eps,
                         x_ref, win_ref, bin_ref,
                         wqkv_ref, bqkv_ref, wo_ref,
                         w1_ref, b1_ref, w2_ref, vecs_ref,
                         fcw_ref, fcb_ref, o_ref):
    """One batch element per grid step (grid=(B,), 'parallel').

    Shapes (DP = padded d_model, OP = padded output size, H = nhead, hd = D/H):
      x_ref    (1, S, In)        win_ref (In, DP)       bin_ref (1, DP)
      wqkv_ref (L, 3H, DP, hd)   bqkv_ref (L, 3H, 1, hd)
      wo_ref   (L, H, hd, DP)
      w1_ref   (L, DP, F)        b1_ref  (L, 1, F)      w2_ref  (L, F, DP)
      vecs_ref (L, 6, DP)  rows = [out_proj.b, linear2.b, g1, beta1, g2, beta2]
      fcw_ref  (DP, OP)          fcb_ref (1, OP)        o_ref   (1, 1, OP)
    Padded lanes (>= d_model) of every weight/bias are zero, which keeps the
    padded lanes of every activation exactly zero through the whole stack.
    """
    S = x_ref.shape[1]
    DP = win_ref.shape[1]
    L = wqkv_ref.shape[0]
    hd = wqkv_ref.shape[-1]
    scale = 1.0 / math.sqrt(hd)

    # lane mask selecting the real (unpadded) d_model features (for LayerNorm).
    lane = jax.lax.broadcasted_iota(jnp.int32, (1, DP), 1)
    feat_mask = (lane < d_model).astype(jnp.float32)
    inv_d = 1.0 / d_model

    def layer_norm(y, gamma, beta):
        mean = jnp.sum(y, axis=-1, keepdims=True) * inv_d
        diff = (y - mean) * feat_mask
        var = jnp.sum(diff * diff, axis=-1, keepdims=True) * inv_d
        return diff * jax.lax.rsqrt(var + eps) * gamma + beta

    # ---- input linear (padded output lanes stay zero) ------------------------
    h = jnp.dot(x_ref[0], win_ref[...],
                preferred_element_type=jnp.float32) + bin_ref[...]        # (S, DP)

    for l in range(L):                        # static unroll over encoder layers
        vecs = vecs_ref[l]                    # (6, DP)
        opb, b2 = vecs[0:1], vecs[1:2]
        g1, be1, g2, be2 = vecs[2:3], vecs[3:4], vecs[4:5], vecs[5:6]

        # ---- multi-head self-attention (head-major weights, no concat) -------
        attn = jnp.broadcast_to(opb, (S, DP))          # start from out_proj bias
        for hi in range(nhead):
            q = jnp.dot(h, wqkv_ref[l, hi],
                        preferred_element_type=jnp.float32) + bqkv_ref[l, hi]
            k = jnp.dot(h, wqkv_ref[l, nhead + hi],
                        preferred_element_type=jnp.float32) + bqkv_ref[l, nhead + hi]
            v = jnp.dot(h, wqkv_ref[l, 2 * nhead + hi],
                        preferred_element_type=jnp.float32) + bqkv_ref[l, 2 * nhead + hi]
            # scores = (q*scale) @ k^T  (contract last dims, no explicit transpose)
            s = jax.lax.dot_general(q * scale, k, (((1,), (1,)), ((), ())),
                                    preferred_element_type=jnp.float32)   # (S, S)
            s = s - jnp.max(s, axis=-1, keepdims=True)
            p = jnp.exp(s)
            p = p * pl.reciprocal(jnp.sum(p, axis=-1, keepdims=True), approx=True)
            ctx = jnp.dot(p, v, preferred_element_type=jnp.float32)       # (S, hd)
            # fold the out-projection in per head (no head concatenation)
            attn = attn + jnp.dot(ctx, wo_ref[l, hi],
                                  preferred_element_type=jnp.float32)     # (S, DP)

        h = layer_norm(h + attn, g1, be1)

        # ---- feed-forward -----------------------------------------------------
        h1 = jnp.dot(h, w1_ref[l], preferred_element_type=jnp.float32) + b1_ref[l]
        h1 = jnp.maximum(h1, 0.0)                                         # relu
        ff = jnp.dot(h1, w2_ref[l], preferred_element_type=jnp.float32) + b2
        h = layer_norm(h + ff, g2, be2)

    # ---- last timestep + final fc ---------------------------------------------
    last = h[S - 1:S, :]                                                  # (1, DP)
    o_ref[0] = jnp.dot(last, fcw_ref[...],
                       preferred_element_type=jnp.float32) + fcb_ref[...]


# --------------------------------------------------------------------------- #
# wrapper                                                                      #
# --------------------------------------------------------------------------- #

def _const_spec(arr):
    """Full-array block that never changes across grid steps (not re-DMA'd)."""
    shape = arr.shape
    idx = (0,) * len(shape)
    return pl.BlockSpec(shape, lambda b, _i=idx: _i)


def rowwise_transformer_forward(x, packed, *, nhead, d_model, output_size,
                                eps=1e-5):
    B, S, In = x.shape
    OP = packed["fc_w"].shape[1]

    weights = [packed[k] for k in ("win_t", "in_b", "wqkv", "bqkv", "wo",
                                   "w1", "b1", "w2", "vecs", "fc_w", "fc_b")]
    kern = functools.partial(fused_forward_kernel, nhead, d_model, eps)
    out = pl.pallas_call(
        kern,
        out_shape=jax.ShapeDtypeStruct((B, 1, OP), jnp.float32),
        grid=(B,),
        in_specs=[pl.BlockSpec((1, S, In), lambda b: (b, 0, 0))]
                 + [_const_spec(w) for w in weights],
        out_specs=pl.BlockSpec((1, 1, OP), lambda b: (b, 0, 0)),
        # NOTE: the (double-buffered) weight working set is only a few MiB here,
        # far under the scoped-VMEM default on v5e/v6e/v7x, so no
        # vmem_limit_bytes override is needed.  Revisit if D/F are scaled up
        # (v7x has only 64 MiB VMEM per core).
        compiler_params=pltpu.CompilerParams(dimension_semantics=("parallel",)),
    )(x, *weights)
    return out[:, 0, :output_size]


# --------------------------------------------------------------------------- #
# one-time parameter packing (hoisted out of the forward pass)                #
# --------------------------------------------------------------------------- #

def _pad_axis(a, size, axis):
    if a.shape[axis] == size:
        return a
    pad = [(0, 0)] * a.ndim
    pad[axis] = (0, size - a.shape[axis])
    return jnp.pad(a, pad)


def pack_params(params, nhead, lane=128):
    """Transpose, head-major-pack and zero-pad all weights ONCE."""
    D = params["input_w"].shape[0]
    Out = params["fc_w"].shape[0]
    hd = D // nhead
    F = params["layers"][0]["w1"].shape[0]
    DP = ((D + lane - 1) // lane) * lane
    OP = ((Out + lane - 1) // lane) * lane

    packed = {
        "win_t": _pad_axis(params["input_w"].T, DP, 1),                # (In, DP)
        "in_b": _pad_axis(params["input_b"].reshape(1, D), DP, 1),     # (1, DP)
        "fc_w": _pad_axis(_pad_axis(params["fc_w"].T, DP, 0), OP, 1),  # (DP, OP)
        "fc_b": _pad_axis(params["fc_b"].reshape(1, Out), OP, 1),      # (1, OP)
    }

    wqkv, bqkv, wo, w1, b1, w2, vecs = [], [], [], [], [], [], []
    for lp in params["layers"]:
        ipw, ipb, opw = lp["ipw"], lp["ipb"], lp["opw"]
        # head-major q/k/v projection weights: order [q0..qH-1, k0.., v0..]
        whm = ipw.reshape(3 * nhead, hd, D).transpose(0, 2, 1)         # (3H, D, hd)
        wqkv.append(_pad_axis(whm, DP, 1))                             # (3H, DP, hd)
        bqkv.append(ipb.reshape(3 * nhead, 1, hd))                     # (3H, 1, hd)
        # per-head slice of the out-projection (folds the head concat away)
        wo.append(_pad_axis(opw.T.reshape(nhead, hd, D), DP, 2))       # (H, hd, DP)
        w1.append(_pad_axis(lp["w1"].T, DP, 0))                        # (DP, F)
        b1.append(lp["b1"].reshape(1, F))                              # (1, F)
        w2.append(_pad_axis(lp["w2"].T, DP, 1))                        # (F, DP)
        vecs.append(_pad_axis(
            jnp.stack([lp["opb"], lp["b2"], lp["g1"], lp["be1"],
                       lp["g2"], lp["be2"]]), DP, 1))                  # (6, DP)

    packed.update({
        "wqkv": jnp.stack(wqkv), "bqkv": jnp.stack(bqkv), "wo": jnp.stack(wo),
        "w1": jnp.stack(w1), "b1": jnp.stack(b1), "w2": jnp.stack(w2),
        "vecs": jnp.stack(vecs),
    })
    return packed


# --------------------------------------------------------------------------- #
# parameter init + pure-JAX reference (for correctness check)                 #
# --------------------------------------------------------------------------- #

def init_params(key, input_size, hidden_size, output_size, num_layers,
                dim_feedforward=2048):
    def nrm(k, shape, fan_in):
        return jax.random.normal(k, shape, jnp.float32) / jnp.sqrt(float(fan_in))

    keys = jax.random.split(key, 3 + num_layers)
    D, F = hidden_size, dim_feedforward
    params = {
        "input_w": nrm(keys[0], (D, input_size), input_size),
        "input_b": 0.01 * jax.random.normal(keys[1], (D,), jnp.float32),
        "fc_w": nrm(keys[2], (output_size, D), D),
        "fc_b": jnp.zeros((output_size,), jnp.float32),
        "layers": [],
    }
    for li in range(num_layers):
        ks = jax.random.split(keys[3 + li], 6)
        params["layers"].append({
            "ipw": nrm(ks[0], (3 * D, D), D),
            "ipb": 0.01 * jax.random.normal(ks[1], (3 * D,), jnp.float32),
            "opw": nrm(ks[2], (D, D), D),
            "opb": jnp.zeros((D,), jnp.float32),
            "w1": nrm(ks[3], (F, D), D),
            "b1": 0.01 * jax.random.normal(ks[4], (F,), jnp.float32),
            "w2": nrm(ks[5], (D, F), F),
            "b2": jnp.zeros((D,), jnp.float32),
            "g1": jnp.ones((D,), jnp.float32),
            "be1": jnp.zeros((D,), jnp.float32),
            "g2": jnp.ones((D,), jnp.float32),
            "be2": jnp.zeros((D,), jnp.float32),
        })
    return params


def reference_forward(x, params, nhead, eps=1e-5):
    B, S, _ = x.shape
    D = params["input_w"].shape[0]
    hd = D // nhead

    def layer_norm(y, g, b):
        mean = jnp.mean(y, axis=-1, keepdims=True)
        var = jnp.mean((y - mean) ** 2, axis=-1, keepdims=True)
        return (y - mean) * jax.lax.rsqrt(var + eps) * g + b

    h = jnp.einsum("bsi,di->bsd", x, params["input_w"]) + params["input_b"]
    for lp in params["layers"]:
        qkv = jnp.einsum("bsd,ed->bse", h, lp["ipw"]) + lp["ipb"]
        q, k, v = qkv[..., :D], qkv[..., D:2 * D], qkv[..., 2 * D:]
        q = q.reshape(B, S, nhead, hd).transpose(0, 2, 1, 3) * (1.0 / math.sqrt(hd))
        k = k.reshape(B, S, nhead, hd).transpose(0, 2, 1, 3)
        v = v.reshape(B, S, nhead, hd).transpose(0, 2, 1, 3)
        s = jnp.einsum("bhqe,bhke->bhqk", q, k)
        s = s - jnp.max(s, axis=-1, keepdims=True)
        p = jnp.exp(s)
        p = p / jnp.sum(p, axis=-1, keepdims=True)
        ctx = jnp.einsum("bhqk,bhke->bhqe", p, v)
        ctx = ctx.transpose(0, 2, 1, 3).reshape(B, S, D)
        attn = jnp.einsum("bsd,ed->bse", ctx, lp["opw"]) + lp["opb"]
        h = layer_norm(h + attn, lp["g1"], lp["be1"])
        ff = jnp.maximum(jnp.einsum("bsd,fd->bsf", h, lp["w1"]) + lp["b1"], 0.0)
        ff = jnp.einsum("bsf,df->bsd", ff, lp["w2"]) + lp["b2"]
        h = layer_norm(h + ff, lp["g2"], lp["be2"])
    last = h[:, -1, :]
    return jnp.einsum("bd,od->bo", last, params["fc_w"]) + params["fc_b"]


# --------------------------------------------------------------------------- #
# main                                                                         #
# --------------------------------------------------------------------------- #

if __name__ == "__main__":
    # RowWise_RecurrentModel(input_size, hidden_size, output_size,
    #                        model_type='Transformer')
    # -> TransformerModel(..., num_layers=1, dropout=0, nhead=5); nhead=5
    #    requires hidden_size % 5 == 0.
    batch, seq = 2, 8
    input_size, hidden_size, output_size = 16, 40, 16
    nhead, num_layers = 5, 1

    key = jax.random.PRNGKey(0)
    k_x, k_p = jax.random.split(key)
    x = jax.random.normal(k_x, (batch, seq, input_size), jnp.float32)
    params = init_params(k_p, input_size, hidden_size, output_size, num_layers)

    packed = pack_params(params, nhead)           # one-time weight packing

    fwd = jax.jit(functools.partial(rowwise_transformer_forward, nhead=nhead,
                                    d_model=hidden_size,
                                    output_size=output_size))
    out = jax.block_until_ready(fwd(x, packed))

    assert out.shape == (batch, output_size)
    assert bool(jnp.all(jnp.isfinite(out)))
    ref = reference_forward(x, params, nhead)
    max_err = float(jnp.max(jnp.abs(out - ref)))
    assert max_err < 2e-2, f"mismatch vs reference: {max_err}"
    print("KERNEL_OK")
</pallas_src>

<mosaic_0001>
module attributes {stable_mosaic.version = 11 : i64} {
  func.func @fused_forward_kernel(%arg0: i32, %arg1: memref<1x8x16xf32, #tpu.memory_space<vmem>>, %arg2: memref<16x128xf32, #tpu.memory_space<vmem>>, %arg3: memref<1x128xf32, #tpu.memory_space<vmem>>, %arg4: memref<1x15x128x8xf32, #tpu.memory_space<vmem>>, %arg5: memref<1x15x1x8xf32, #tpu.memory_space<vmem>>, %arg6: memref<1x5x8x128xf32, #tpu.memory_space<vmem>>, %arg7: memref<1x128x2048xf32, #tpu.memory_space<vmem>>, %arg8: memref<1x1x2048xf32, #tpu.memory_space<vmem>>, %arg9: memref<1x2048x128xf32, #tpu.memory_space<vmem>>, %arg10: memref<1x6x128xf32, #tpu.memory_space<vmem>>, %arg11: memref<128x128xf32, #tpu.memory_space<vmem>>, %arg12: memref<1x128xf32, #tpu.memory_space<vmem>>, %arg13: memref<1x1x128xf32, #tpu.memory_space<vmem>>) attributes {dimension_semantics = [#tpu.dimension_semantics<parallel>], iteration_bounds = array<i64: 2>, scalar_prefetch = 0 : i64, scratch_operands = 0 : i64, tpu.core_type = #tpu.core_type<tc>, window_params = [{transform_indices = @transform_0, window_bounds = array<i64: 1, 8, 16>}, {pipeline_mode = #tpu.pipeline_mode<synchronous>, transform_indices = @transform_1, window_bounds = array<i64: 16, 128>}, {pipeline_mode = #tpu.pipeline_mode<synchronous>, transform_indices = @transform_2, window_bounds = array<i64: 1, 128>}, {pipeline_mode = #tpu.pipeline_mode<synchronous>, transform_indices = @transform_3, window_bounds = array<i64: 1, 15, 128, 8>}, {pipeline_mode = #tpu.pipeline_mode<synchronous>, transform_indices = @transform_4, window_bounds = array<i64: 1, 15, 1, 8>}, {pipeline_mode = #tpu.pipeline_mode<synchronous>, transform_indices = @transform_5, window_bounds = array<i64: 1, 5, 8, 128>}, {pipeline_mode = #tpu.pipeline_mode<synchronous>, transform_indices = @transform_6, window_bounds = array<i64: 1, 128, 2048>}, {pipeline_mode = #tpu.pipeline_mode<synchronous>, transform_indices = @transform_7, window_bounds = array<i64: 1, 1, 2048>}, {pipeline_mode = #tpu.pipeline_mode<synchronous>, transform_indices = @transform_8, window_bounds = array<i64: 1, 2048, 128>}, {pipeline_mode = #tpu.pipeline_mode<synchronous>, transform_indices = @transform_9, window_bounds = array<i64: 1, 6, 128>}, {pipeline_mode = #tpu.pipeline_mode<synchronous>, transform_indices = @transform_10, window_bounds = array<i64: 128, 128>}, {pipeline_mode = #tpu.pipeline_mode<synchronous>, transform_indices = @transform_11, window_bounds = array<i64: 1, 128>}, {transform_indices = @transform_12, window_bounds = array<i64: 1, 1, 128>}]} {
    %0 = tpu.iota {dimensions = array<i32: 1>} : vector<1x128xi32>
    %c40_i32 = arith.constant 40 : i32
    %1 = vector.broadcast %c40_i32 : i32 to vector<1x128xi32>
    %2 = arith.cmpi slt, %0, %1 : vector<1x128xi32>
    %3 = arith.extui %2 : vector<1x128xi1> to vector<1x128xi32>
    %4 = arith.sitofp %3 : vector<1x128xi32> to vector<1x128xf32>
    %c0 = arith.constant 0 : index
    %c0_0 = arith.constant 0 : index
    %c0_1 = arith.constant 0 : index
    %5 = vector.load %arg1[%c0, %c0_0, %c0_1] : memref<1x8x16xf32, #tpu.memory_space<vmem>>, vector<1x8x16xf32>
    %6 = vector.shape_cast %5 : vector<1x8x16xf32> to vector<8x16xf32>
    %c0_2 = arith.constant 0 : index
    %c0_3 = arith.constant 0 : index
    %7 = vector.load %arg2[%c0_2, %c0_3] : memref<16x128xf32, #tpu.memory_space<vmem>>, vector<16x128xf32>
    %cst = arith.constant dense<0.000000e+00> : vector<8x128xf32>
    %8 = tpu.matmul %6, %7, %cst {dimension_numbers = #tpu.dot_dimension_numbers<[1], [0], [0], [1], [0, 0, 1, 1], [], []>} : vector<8x16xf32>, vector<16x128xf32>, vector<8x128xf32> -> vector<8x128xf32>
    %c0_4 = arith.constant 0 : index
    %c0_5 = arith.constant 0 : index
    %9 = vector.load %arg3[%c0_4, %c0_5] : memref<1x128xf32, #tpu.memory_space<vmem>>, vector<1x128xf32>
    %10 = vector.broadcast %9 : vector<1x128xf32> to vector<8x128xf32>
    %11 = arith.addf %8, %10 : vector<8x128xf32>
    %c0_6 = arith.constant 0 : index
    %c0_7 = arith.constant 0 : index
    %c0_8 = arith.constant 0 : index
    %12 = vector.load %arg10[%c0_6, %c0_7, %c0_8] : memref<1x6x128xf32, #tpu.memory_space<vmem>>, vector<1x6x128xf32>
    %13 = vector.shape_cast %12 : vector<1x6x128xf32> to vector<6x128xf32>
    %14 = vector.extract_strided_slice %13 {offsets = [0, 0], sizes = [1, 128], strides = [1, 1]} : vector<6x128xf32> to vector<1x128xf32>
    %15 = vector.extract_strided_slice %13 {offsets = [1, 0], sizes = [1, 128], strides = [1, 1]} : vector<6x128xf32> to vector<1x128xf32>
    %16 = vector.extract_strided_slice %13 {offsets = [2, 0], sizes = [1, 128], strides = [1, 1]} : vector<6x128xf32> to vector<1x128xf32>
    %17 = vector.extract_strided_slice %13 {offsets = [3, 0], sizes = [1, 128], strides = [1, 1]} : vector<6x128xf32> to vector<1x128xf32>
    %18 = vector.extract_strided_slice %13 {offsets = [4, 0], sizes = [1, 128], strides = [1, 1]} : vector<6x128xf32> to vector<1x128xf32>
    %19 = vector.extract_strided_slice %13 {offsets = [5, 0], sizes = [1, 128], strides = [1, 1]} : vector<6x128xf32> to vector<1x128xf32>
    %20 = vector.shape_cast %14 : vector<1x128xf32> to vector<1x128xf32>
    %21 = vector.broadcast %20 : vector<1x128xf32> to vector<8x128xf32>
    %c0_9 = arith.constant 0 : index
    %c0_10 = arith.constant 0 : index
    %c0_11 = arith.constant 0 : index
    %c0_12 = arith.constant 0 : index
    %22 = vector.load %arg4[%c0_9, %c0_10, %c0_11, %c0_12] : memref<1x15x128x8xf32, #tpu.memory_space<vmem>>, vector<1x1x128x8xf32>
    %23 = vector.shape_cast %22 : vector<1x1x128x8xf32> to vector<128x8xf32>
    %cst_13 = arith.constant dense<0.000000e+00> : vector<8x8xf32>
    %24 = tpu.matmul %11, %23, %cst_13 {dimension_numbers = #tpu.dot_dimension_numbers<[1], [0], [0], [1], [0, 0, 1, 1], [], []>} : vector<8x128xf32>, vector<128x8xf32>, vector<8x8xf32> -> vector<8x8xf32>
    %c0_14 = arith.constant 0 : index
    %c0_15 = arith.constant 0 : index
    %c0_16 = arith.constant 0 : index
    %c0_17 = arith.constant 0 : index
    %25 = vector.load %arg5[%c0_14, %c0_15, %c0_16, %c0_17] : memref<1x15x1x8xf32, #tpu.memory_space<vmem>>, vector<1x1x1x8xf32>
    %26 = vector.shape_cast %25 : vector<1x1x1x8xf32> to vector<1x8xf32>
    %27 = vector.broadcast %26 : vector<1x8xf32> to vector<8x8xf32>
    %28 = arith.addf %24, %27 : vector<8x8xf32>
    %c0_18 = arith.constant 0 : index
    %c5 = arith.constant 5 : index
    %c0_19 = arith.constant 0 : index
    %c0_20 = arith.constant 0 : index
    %29 = vector.load %arg4[%c0_18, %c5, %c0_19, %c0_20] : memref<1x15x128x8xf32, #tpu.memory_space<vmem>>, vector<1x1x128x8xf32>
    %30 = vector.shape_cast %29 : vector<1x1x128x8xf32> to vector<128x8xf32>
    %cst_21 = arith.constant dense<0.000000e+00> : vector<8x8xf32>
    %31 = tpu.matmul %11, %30, %cst_21 {dimension_numbers = #tpu.dot_dimension_numbers<[1], [0], [0], [1], [0, 0, 1, 1], [], []>} : vector<8x128xf32>, vector<128x8xf32>, vector<8x8xf32> -> vector<8x8xf32>
    %c0_22 = arith.constant 0 : index
    %c5_23 = arith.constant 5 : index
    %c0_24 = arith.constant 0 : index
    %c0_25 = arith.constant 0 : index
    %32 = vector.load %arg5[%c0_22, %c5_23, %c0_24, %c0_25] : memref<1x15x1x8xf32, #tpu.memory_space<vmem>>, vector<1x1x1x8xf32>
    %33 = vector.shape_cast %32 : vector<1x1x1x8xf32> to vector<1x8xf32>
    %34 = vector.broadcast %33 : vector<1x8xf32> to vector<8x8xf32>
    %35 = arith.addf %31, %34 : vector<8x8xf32>
    %c0_26 = arith.constant 0 : index
    %c10 = arith.constant 10 : index
    %c0_27 = arith.constant 0 : index
    %c0_28 = arith.constant 0 : index
    %36 = vector.load %arg4[%c0_26, %c10, %c0_27, %c0_28] : memref<1x15x128x8xf32, #tpu.memory_space<vmem>>, vector<1x1x128x8xf32>
    %37 = vector.shape_cast %36 : vector<1x1x128x8xf32> to vector<128x8xf32>
    %cst_29 = arith.constant dense<0.000000e+00> : vector<8x8xf32>
    %38 = tpu.matmul %11, %37, %cst_29 {dimension_numbers = #tpu.dot_dimension_numbers<[1], [0], [0], [1], [0, 0, 1, 1], [], []>} : vector<8x128xf32>, vector<128x8xf32>, vector<8x8xf32> -> vector<8x8xf32>
    %c0_30 = arith.constant 0 : index
    %c10_31 = arith.constant 10 : index
    %c0_32 = arith.constant 0 : index
    %c0_33 = arith.constant 0 : index
    %39 = vector.load %arg5[%c0_30, %c10_31, %c0_32, %c0_33] : memref<1x15x1x8xf32, #tpu.memory_space<vmem>>, vector<1x1x1x8xf32>
    %40 = vector.shape_cast %39 : vector<1x1x1x8xf32> to vector<1x8xf32>
    %41 = vector.broadcast %40 : vector<1x8xf32> to vector<8x8xf32>
    %42 = arith.addf %38, %41 : vector<8x8xf32>
    %cst_34 = arith.constant 0.353553385 : f32
    %43 = vector.broadcast %cst_34 : f32 to vector<8x8xf32>
    %44 = arith.mulf %28, %43 : vector<8x8xf32>
    %cst_35 = arith.constant dense<0.000000e+00> : vector<8x8xf32>
    %45 = tpu.matmul %44, %35, %cst_35 {dimension_numbers = #tpu.dot_dimension_numbers<[1], [1], [0], [0], [0, 0, 1, 0], [], []>} : vector<8x8xf32>, vector<8x8xf32>, vector<8x8xf32> -> vector<8x8xf32>
    %cst_36 = arith.constant dense<0xFF800000> : vector<8xf32>
    %46 = vector.multi_reduction <maximumf>, %45, %cst_36 [1] : vector<8x8xf32> to vector<8xf32>
    %47 = vector.shape_cast %46 : vector<8xf32> to vector<8x1xf32>
    %48 = vector.broadcast %47 : vector<8x1xf32> to vector<8x8xf32>
    %49 = arith.subf %45, %48 : vector<8x8xf32>
    %50 = math.exp %49 : vector<8x8xf32>
    %cst_37 = arith.constant dense<0.000000e+00> : vector<8xf32>
    %51 = vector.multi_reduction <add>, %50, %cst_37 [1] : vector<8x8xf32> to vector<8xf32>
    %52 = vector.shape_cast %51 : vector<8xf32> to vector<8x1xf32>
    %53 = tpu.reciprocal %52 {approx = true} : vector<8x1xf32> -> vector<8x1xf32>
    %54 = vector.broadcast %53 : vector<8x1xf32> to vector<8x8xf32>
    %55 = arith.mulf %50, %54 : vector<8x8xf32>
    %cst_38 = arith.constant dense<0.000000e+00> : vector<8x8xf32>
    %56 = tpu.matmul %55, %42, %cst_38 {dimension_numbers = #tpu.dot_dimension_numbers<[1], [0], [0], [1], [0, 0, 1, 1], [], []>} : vector<8x8xf32>, vector<8x8xf32>, vector<8x8xf32> -> vector<8x8xf32>
    %c0_39 = arith.constant 0 : index
    %c0_40 = arith.constant 0 : index
    %c0_41 = arith.constant 0 : index
    %c0_42 = arith.constant 0 : index
    %57 = vector.load %arg6[%c0_39, %c0_40, %c0_41, %c0_42] : memref<1x5x8x128xf32, #tpu.memory_space<vmem>>, vector<1x1x8x128xf32>
    %58 = vector.shape_cast %57 : vector<1x1x8x128xf32> to vector<8x128xf32>
    %cst_43 = arith.constant dense<0.000000e+00> : vector<8x128xf32>
    %59 = tpu.matmul %56, %58, %cst_43 {dimension_numbers = #tpu.dot_dimension_numbers<[1], [0], [0], [1], [0, 0, 1, 1], [], []>} : vector<8x8xf32>, vector<8x128xf32>, vector<8x128xf32> -> vector<8x128xf32>
    %60 = arith.addf %21, %59 : vector<8x128xf32>
    %c0_44 = arith.constant 0 : index
    %c1 = arith.constant 1 : index
    %c0_45 = arith.constant 0 : index
    %c0_46 = arith.constant 0 : index
    %61 = vector.load %arg4[%c0_44, %c1, %c0_45, %c0_46] : memref<1x15x128x8xf32, #tpu.memory_space<vmem>>, vector<1x1x128x8xf32>
    %62 = vector.shape_cast %61 : vector<1x1x128x8xf32> to vector<128x8xf32>
    %cst_47 = arith.constant dense<0.000000e+00> : vector<8x8xf32>
    %63 = tpu.matmul %11, %62, %cst_47 {dimension_numbers = #tpu.dot_dimension_numbers<[1], [0], [0], [1], [0, 0, 1, 1], [], []>} : vector<8x128xf32>, vector<128x8xf32>, vector<8x8xf32> -> vector<8x8xf32>
    %c0_48 = arith.constant 0 : index
    %c1_49 = arith.constant 1 : index
    %c0_50 = arith.constant 0 : index
    %c0_51 = arith.constant 0 : index
    %64 = vector.load %arg5[%c0_48, %c1_49, %c0_50, %c0_51] : memref<1x15x1x8xf32, #tpu.memory_space<vmem>>, vector<1x1x1x8xf32>
    %65 = vector.shape_cast %64 : vector<1x1x1x8xf32> to vector<1x8xf32>
    %66 = vector.broadcast %65 : vector<1x8xf32> to vector<8x8xf32>
    %67 = arith.addf %63, %66 : vector<8x8xf32>
    %c0_52 = arith.constant 0 : index
    %c6 = arith.constant 6 : index
    %c0_53 = arith.constant 0 : index
    %c0_54 = arith.constant 0 : index
    %68 = vector.load %arg4[%c0_52, %c6, %c0_53, %c0_54] : memref<1x15x128x8xf32, #tpu.memory_space<vmem>>, vector<1x1x128x8xf32>
    %69 = vector.shape_cast %68 : vector<1x1x128x8xf32> to vector<128x8xf32>
    %cst_55 = arith.constant dense<0.000000e+00> : vector<8x8xf32>
    %70 = tpu.matmul %11, %69, %cst_55 {dimension_numbers = #tpu.dot_dimension_numbers<[1], [0], [0], [1], [0, 0, 1, 1], [], []>} : vector<8x128xf32>, vector<128x8xf32>, vector<8x8xf32> -> vector<8x8xf32>
    %c0_56 = arith.constant 0 : index
    %c6_57 = arith.constant 6 : index
    %c0_58 = arith.constant 0 : index
    %c0_59 = arith.constant 0 : index
    %71 = vector.load %arg5[%c0_56, %c6_57, %c0_58, %c0_59] : memref<1x15x1x8xf32, #tpu.memory_space<vmem>>, vector<1x1x1x8xf32>
    %72 = vector.shape_cast %71 : vector<1x1x1x8xf32> to vector<1x8xf32>
    %73 = vector.broadcast %72 : vector<1x8xf32> to vector<8x8xf32>
    %74 = arith.addf %70, %73 : vector<8x8xf32>
    %c0_60 = arith.constant 0 : index
    %c11 = arith.constant 11 : index
    %c0_61 = arith.constant 0 : index
    %c0_62 = arith.constant 0 : index
    %75 = vector.load %arg4[%c0_60, %c11, %c0_61, %c0_62] : memref<1x15x128x8xf32, #tpu.memory_space<vmem>>, vector<1x1x128x8xf32>
    %76 = vector.shape_cast %75 : vector<1x1x128x8xf32> to vector<128x8xf32>
    %cst_63 = arith.constant dense<0.000000e+00> : vector<8x8xf32>
    %77 = tpu.matmul %11, %76, %cst_63 {dimension_numbers = #tpu.dot_dimension_numbers<[1], [0], [0], [1], [0, 0, 1, 1], [], []>} : vector<8x128xf32>, vector<128x8xf32>, vector<8x8xf32> -> vector<8x8xf32>
    %c0_64 = arith.constant 0 : index
    %c11_65 = arith.constant 11 : index
    %c0_66 = arith.constant 0 : index
    %c0_67 = arith.constant 0 : index
    %78 = vector.load %arg5[%c0_64, %c11_65, %c0_66, %c0_67] : memref<1x15x1x8xf32, #tpu.memory_space<vmem>>, vector<1x1x1x8xf32>
    %79 = vector.shape_cast %78 : vector<1x1x1x8xf32> to vector<1x8xf32>
    %80 = vector.broadcast %79 : vector<1x8xf32> to vector<8x8xf32>
    %81 = arith.addf %77, %80 : vector<8x8xf32>
    %cst_68 = arith.constant 0.353553385 : f32
    %82 = vector.broadcast %cst_68 : f32 to vector<8x8xf32>
    %83 = arith.mulf %67, %82 : vector<8x8xf32>
    %cst_69 = arith.constant dense<0.000000e+00> : vector<8x8xf32>
    %84 = tpu.matmul %83, %74, %cst_69 {dimension_numbers = #tpu.dot_dimension_numbers<[1], [1], [0], [0], [0, 0, 1, 0], [], []>} : vector<8x8xf32>, vector<8x8xf32>, vector<8x8xf32> -> vector<8x8xf32>
    %cst_70 = arith.constant dense<0xFF800000> : vector<8xf32>
    %85 = vector.multi_reduction <maximumf>, %84, %cst_70 [1] : vector<8x8xf32> to vector<8xf32>
    %86 = vector.shape_cast %85 : vector<8xf32> to vector<8x1xf32>
    %87 = vector.broadcast %86 : vector<8x1xf32> to vector<8x8xf32>
    %88 = arith.subf %84, %87 : vector<8x8xf32>
    %89 = math.exp %88 : vector<8x8xf32>
    %cst_71 = arith.constant dense<0.000000e+00> : vector<8xf32>
    %90 = vector.multi_reduction <add>, %89, %cst_71 [1] : vector<8x8xf32> to vector<8xf32>
    %91 = vector.shape_cast %90 : vector<8xf32> to vector<8x1xf32>
    %92 = tpu.reciprocal %91 {approx = true} : vector<8x1xf32> -> vector<8x1xf32>
    %93 = vector.broadcast %92 : vector<8x1xf32> to vector<8x8xf32>
    %94 = arith.mulf %89, %93 : vector<8x8xf32>
    %cst_72 = arith.constant dense<0.000000e+00> : vector<8x8xf32>
    %95 = tpu.matmul %94, %81, %cst_72 {dimension_numbers = #tpu.dot_dimension_numbers<[1], [0], [0], [1], [0, 0, 1, 1], [], []>} : vector<8x8xf32>, vector<8x8xf32>, vector<8x8xf32> -> vector<8x8xf32>
    %c0_73 = arith.constant 0 : index
    %c1_74 = arith.constant 1 : index
    %c0_75 = arith.constant 0 : index
    %c0_76 = arith.constant 0 : index
    %96 = vector.load %arg6[%c0_73, %c1_74, %c0_75, %c0_76] : memref<1x5x8x128xf32, #tpu.memory_space<vmem>>, vector<1x1x8x128xf32>
    %97 = vector.shape_cast %96 : vector<1x1x8x128xf32> to vector<8x128xf32>
    %cst_77 = arith.constant dense<0.000000e+00> : vector<8x128xf32>
    %98 = tpu.matmul %95, %97, %cst_77 {dimension_numbers = #tpu.dot_dimension_numbers<[1], [0], [0], [1], [0, 0, 1, 1], [], []>} : vector<8x8xf32>, vector<8x128xf32>, vector<8x128xf32> -> vector<8x128xf32>
    %99 = arith.addf %60, %98 : vector<8x128xf32>
    %c0_78 = arith.constant 0 : index
    %c2 = arith.constant 2 : index
    %c0_79 = arith.constant 0 : index
    %c0_80 = arith.constant 0 : index
    %100 = vector.load %arg4[%c0_78, %c2, %c0_79, %c0_80] : memref<1x15x128x8xf32, #tpu.memory_space<vmem>>, vector<1x1x128x8xf32>
    %101 = vector.shape_cast %100 : vector<1x1x128x8xf32> to vector<128x8xf32>
    %cst_81 = arith.constant dense<0.000000e+00> : vector<8x8xf32>
    %102 = tpu.matmul %11, %101, %cst_81 {dimension_numbers = #tpu.dot_dimension_numbers<[1], [0], [0], [1], [0, 0, 1, 1], [], []>} : vector<8x128xf32>, vector<128x8xf32>, vector<8x8xf32> -> vector<8x8xf32>
    %c0_82 = arith.constant 0 : index
    %c2_83 = arith.constant 2 : index
    %c0_84 = arith.constant 0 : index
    %c0_85 = arith.constant 0 : index
    %103 = vector.load %arg5[%c0_82, %c2_83, %c0_84, %c0_85] : memref<1x15x1x8xf32, #tpu.memory_space<vmem>>, vector<1x1x1x8xf32>
    %104 = vector.shape_cast %103 : vector<1x1x1x8xf32> to vector<1x8xf32>
    %105 = vector.broadcast %104 : vector<1x8xf32> to vector<8x8xf32>
    %106 = arith.addf %102, %105 : vector<8x8xf32>
    %c0_86 = arith.constant 0 : index
    %c7 = arith.constant 7 : index
    %c0_87 = arith.constant 0 : index
    %c0_88 = arith.constant 0 : index
    %107 = vector.load %arg4[%c0_86, %c7, %c0_87, %c0_88] : memref<1x15x128x8xf32, #tpu.memory_space<vmem>>, vector<1x1x128x8xf32>
    %108 = vector.shape_cast %107 : vector<1x1x128x8xf32> to vector<128x8xf32>
    %cst_89 = arith.constant dense<0.000000e+00> : vector<8x8xf32>
    %109 = tpu.matmul %11, %108, %cst_89 {dimension_numbers = #tpu.dot_dimension_numbers<[1], [0], [0], [1], [0, 0, 1, 1], [], []>} : vector<8x128xf32>, vector<128x8xf32>, vector<8x8xf32> -> vector<8x8xf32>
    %c0_90 = arith.constant 0 : index
    %c7_91 = arith.constant 7 : index
    %c0_92 = arith.constant 0 : index
    %c0_93 = arith.constant 0 : index
    %110 = vector.load %arg5[%c0_90, %c7_91, %c0_92, %c0_93] : memref<1x15x1x8xf32, #tpu.memory_space<vmem>>, vector<1x1x1x8xf32>
    %111 = vector.shape_cast %110 : vector<1x1x1x8xf32> to vector<1x8xf32>
    %112 = vector.broadcast %111 : vector<1x8xf32> to vector<8x8xf32>
    %113 = arith.addf %109, %112 : vector<8x8xf32>
    %c0_94 = arith.constant 0 : index
    %c12 = arith.constant 12 : index
    %c0_95 = arith.constant 0 : index
    %c0_96 = arith.constant 0 : index
    %114 = vector.load %arg4[%c0_94, %c12, %c0_95, %c0_96] : memref<1x15x128x8xf32, #tpu.memory_space<vmem>>, vector<1x1x128x8xf32>
    %115 = vector.shape_cast %114 : vector<1x1x128x8xf32> to vector<128x8xf32>
    %cst_97 = arith.constant dense<0.000000e+00> : vector<8x8xf32>
    %116 = tpu.matmul %11, %115, %cst_97 {dimension_numbers = #tpu.dot_dimension_numbers<[1], [0], [0], [1], [0, 0, 1, 1], [], []>} : vector<8x128xf32>, vector<128x8xf32>, vector<8x8xf32> -> vector<8x8xf32>
    %c0_98 = arith.constant 0 : index
    %c12_99 = arith.constant 12 : index
    %c0_100 = arith.constant 0 : index
    %c0_101 = arith.constant 0 : index
    %117 = vector.load %arg5[%c0_98, %c12_99, %c0_100, %c0_101] : memref<1x15x1x8xf32, #tpu.memory_space<vmem>>, vector<1x1x1x8xf32>
    %118 = vector.shape_cast %117 : vector<1x1x1x8xf32> to vector<1x8xf32>
    %119 = vector.broadcast %118 : vector<1x8xf32> to vector<8x8xf32>
    %120 = arith.addf %116, %119 : vector<8x8xf32>
    %cst_102 = arith.constant 0.353553385 : f32
    %121 = vector.broadcast %cst_102 : f32 to vector<8x8xf32>
    %122 = arith.mulf %106, %121 : vector<8x8xf32>
    %cst_103 = arith.constant dense<0.000000e+00> : vector<8x8xf32>
    %123 = tpu.matmul %122, %113, %cst_103 {dimension_numbers = #tpu.dot_dimension_numbers<[1], [1], [0], [0], [0, 0, 1, 0], [], []>} : vector<8x8xf32>, vector<8x8xf32>, vector<8x8xf32> -> vector<8x8xf32>
    %cst_104 = arith.constant dense<0xFF800000> : vector<8xf32>
    %124 = vector.multi_reduction <maximumf>, %123, %cst_104 [1] : vector<8x8xf32> to vector<8xf32>
    %125 = vector.shape_cast %124 : vector<8xf32> to vector<8x1xf32>
    %126 = vector.broadcast %125 : vector<8x1xf32> to vector<8x8xf32>
    %127 = arith.subf %123, %126 : vector<8x8xf32>
    %128 = math.exp %127 : vector<8x8xf32>
    %cst_105 = arith.constant dense<0.000000e+00> : vector<8xf32>
    %129 = vector.multi_reduction <add>, %128, %cst_105 [1] : vector<8x8xf32> to vector<8xf32>
    %130 = vector.shape_cast %129 : vector<8xf32> to vector<8x1xf32>
    %131 = tpu.reciprocal %130 {approx = true} : vector<8x1xf32> -> vector<8x1xf32>
    %132 = vector.broadcast %131 : vector<8x1xf32> to vector<8x8xf32>
    %133 = arith.mulf %128, %132 : vector<8x8xf32>
    %cst_106 = arith.constant dense<0.000000e+00> : vector<8x8xf32>
    %134 = tpu.matmul %133, %120, %cst_106 {dimension_numbers = #tpu.dot_dimension_numbers<[1], [0], [0], [1], [0, 0, 1, 1], [], []>} : vector<8x8xf32>, vector<8x8xf32>, vector<8x8xf32> -> vector<8x8xf32>
    %c0_107 = arith.constant 0 : index
    %c2_108 = arith.constant 2 : index
    %c0_109 = arith.constant 0 : index
    %c0_110 = arith.constant 0 : index
    %135 = vector.load %arg6[%c0_107, %c2_108, %c0_109, %c0_110] : memref<1x5x8x128xf32, #tpu.memory_space<vmem>>, vector<1x1x8x128xf32>
    %136 = vector.shape_cast %135 : vector<1x1x8x128xf32> to vector<8x128xf32>
    %cst_111 = arith.constant dense<0.000000e+00> : vector<8x128xf32>
    %137 = tpu.matmul %134, %136, %cst_111 {dimension_numbers = #tpu.dot_dimension_numbers<[1], [0], [0], [1], [0, 0, 1, 1], [], []>} : vector<8x8xf32>, vector<8x128xf32>, vector<8x128xf32> -> vector<8x128xf32>
    %138 = arith.addf %99, %137 : vector<8x128xf32>
    %c0_112 = arith.constant 0 : index
    %c3 = arith.constant 3 : index
    %c0_113 = arith.constant 0 : index
    %c0_114 = arith.constant 0 : index
    %139 = vector.load %arg4[%c0_112, %c3, %c0_113, %c0_114] : memref<1x15x128x8xf32, #tpu.memory_space<vmem>>, vector<1x1x128x8xf32>
    %140 = vector.shape_cast %139 : vector<1x1x128x8xf32> to vector<128x8xf32>
    %cst_115 = arith.constant dense<0.000000e+00> : vector<8x8xf32>
    %141 = tpu.matmul %11, %140, %cst_115 {dimension_numbers = #tpu.dot_dimension_numbers<[1], [0], [0], [1], [0, 0, 1, 1], [], []>} : vector<8x128xf32>, vector<128x8xf32>, vector<8x8xf32> -> vector<8x8xf32>
    %c0_116 = arith.constant 0 : index
    %c3_117 = arith.constant 3 : index
    %c0_118 = arith.constant 0 : index
    %c0_119 = arith.constant 0 : index
    %142 = vector.load %arg5[%c0_116, %c3_117, %c0_118, %c0_119] : memref<1x15x1x8xf32, #tpu.memory_space<vmem>>, vector<1x1x1x8xf32>
    %143 = vector.shape_cast %142 : vector<1x1x1x8xf32> to vector<1x8xf32>
    %144 = vector.broadcast %143 : vector<1x8xf32> to vector<8x8xf32>
    %145 = arith.addf %141, %144 : vector<8x8xf32>
    %c0_120 = arith.constant 0 : index
    %c8 = arith.constant 8 : index
    %c0_121 = arith.constant 0 : index
    %c0_122 = arith.constant 0 : index
    %146 = vector.load %arg4[%c0_120, %c8, %c0_121, %c0_122] : memref<1x15x128x8xf32, #tpu.memory_space<vmem>>, vector<1x1x128x8xf32>
    %147 = vector.shape_cast %146 : vector<1x1x128x8xf32> to vector<128x8xf32>
    %cst_123 = arith.constant dense<0.000000e+00> : vector<8x8xf32>
    %148 = tpu.matmul %11, %147, %cst_123 {dimension_numbers = #tpu.dot_dimension_numbers<[1], [0], [0], [1], [0, 0, 1, 1], [], []>} : vector<8x128xf32>, vector<128x8xf32>, vector<8x8xf32> -> vector<8x8xf32>
    %c0_124 = arith.constant 0 : index
    %c8_125 = arith.constant 8 : index
    %c0_126 = arith.constant 0 : index
    %c0_127 = arith.constant 0 : index
    %149 = vector.load %arg5[%c0_124, %c8_125, %c0_126, %c0_127] : memref<1x15x1x8xf32, #tpu.memory_space<vmem>>, vector<1x1x1x8xf32>
    %150 = vector.shape_cast %149 : vector<1x1x1x8xf32> to vector<1x8xf32>
    %151 = vector.broadcast %150 : vector<1x8xf32> to vector<8x8xf32>
    %152 = arith.addf %148, %151 : vector<8x8xf32>
    %c0_128 = arith.constant 0 : index
    %c13 = arith.constant 13 : index
    %c0_129 = arith.constant 0 : index
    %c0_130 = arith.constant 0 : index
    %153 = vector.load %arg4[%c0_128, %c13, %c0_129, %c0_130] : memref<1x15x128x8xf32, #tpu.memory_space<vmem>>, vector<1x1x128x8xf32>
    %154 = vector.shape_cast %153 : vector<1x1x128x8xf32> to vector<128x8xf32>
    %cst_131 = arith.constant dense<0.000000e+00> : vector<8x8xf32>
    %155 = tpu.matmul %11, %154, %cst_131 {dimension_numbers = #tpu.dot_dimension_numbers<[1], [0], [0], [1], [0, 0, 1, 1], [], []>} : vector<8x128xf32>, vector<128x8xf32>, vector<8x8xf32> -> vector<8x8xf32>
    %c0_132 = arith.constant 0 : index
    %c13_133 = arith.constant 13 : index
    %c0_134 = arith.constant 0 : index
    %c0_135 = arith.constant 0 : index
    %156 = vector.load %arg5[%c0_132, %c13_133, %c0_134, %c0_135] : memref<1x15x1x8xf32, #tpu.memory_space<vmem>>, vector<1x1x1x8xf32>
    %157 = vector.shape_cast %156 : vector<1x1x1x8xf32> to vector<1x8xf32>
    %158 = vector.broadcast %157 : vector<1x8xf32> to vector<8x8xf32>
    %159 = arith.addf %155, %158 : vector<8x8xf32>
    %cst_136 = arith.constant 0.353553385 : f32
    %160 = vector.broadcast %cst_136 : f32 to vector<8x8xf32>
    %161 = arith.mulf %145, %160 : vector<8x8xf32>
    %cst_137 = arith.constant dense<0.000000e+00> : vector<8x8xf32>
    %162 = tpu.matmul %161, %152, %cst_137 {dimension_numbers = #tpu.dot_dimension_numbers<[1], [1], [0], [0], [0, 0, 1, 0], [], []>} : vector<8x8xf32>, vector<8x8xf32>, vector<8x8xf32> -> vector<8x8xf32>
    %cst_138 = arith.constant dense<0xFF800000> : vector<8xf32>
    %163 = vector.multi_reduction <maximumf>, %162, %cst_138 [1] : vector<8x8xf32> to vector<8xf32>
    %164 = vector.shape_cast %163 : vector<8xf32> to vector<8x1xf32>
    %165 = vector.broadcast %164 : vector<8x1xf32> to vector<8x8xf32>
    %166 = arith.subf %162, %165 : vector<8x8xf32>
    %167 = math.exp %166 : vector<8x8xf32>
    %cst_139 = arith.constant dense<0.000000e+00> : vector<8xf32>
    %168 = vector.multi_reduction <add>, %167, %cst_139 [1] : vector<8x8xf32> to vector<8xf32>
    %169 = vector.shape_cast %168 : vector<8xf32> to vector<8x1xf32>
    %170 = tpu.reciprocal %169 {approx = true} : vector<8x1xf32> -> vector<8x1xf32>
    %171 = vector.broadcast %170 : vector<8x1xf32> to vector<8x8xf32>
    %172 = arith.mulf %167, %171 : vector<8x8xf32>
    %cst_140 = arith.constant dense<0.000000e+00> : vector<8x8xf32>
    %173 = tpu.matmul %172, %159, %cst_140 {dimension_numbers = #tpu.dot_dimension_numbers<[1], [0], [0], [1], [0, 0, 1, 1], [], []>} : vector<8x8xf32>, vector<8x8xf32>, vector<8x8xf32> -> vector<8x8xf32>
    %c0_141 = arith.constant 0 : index
    %c3_142 = arith.constant 3 : index
    %c0_143 = arith.constant 0 : index
    %c0_144 = arith.constant 0 : index
    %174 = vector.load %arg6[%c0_141, %c3_142, %c0_143, %c0_144] : memref<1x5x8x128xf32, #tpu.memory_space<vmem>>, vector<1x1x8x128xf32>
    %175 = vector.shape_cast %174 : vector<1x1x8x128xf32> to vector<8x128xf32>
    %cst_145 = arith.constant dense<0.000000e+00> : vector<8x128xf32>
    %176 = tpu.matmul %173, %175, %cst_145 {dimension_numbers = #tpu.dot_dimension_numbers<[1], [0], [0], [1], [0, 0, 1, 1], [], []>} : vector<8x8xf32>, vector<8x128xf32>, vector<8x128xf32> -> vector<8x128xf32>
    %177 = arith.addf %138, %176 : vector<8x128xf32>
    %c0_146 = arith.constant 0 : index
    %c4 = arith.constant 4 : index
    %c0_147 = arith.constant 0 : index
    %c0_148 = arith.constant 0 : index
    %178 = vector.load %arg4[%c0_146, %c4, %c0_147, %c0_148] : memref<1x15x128x8xf32, #tpu.memory_space<vmem>>, vector<1x1x128x8xf32>
    %179 = vector.shape_cast %178 : vector<1x1x128x8xf32> to vector<128x8xf32>
    %cst_149 = arith.constant dense<0.000000e+00> : vector<8x8xf32>
    %180 = tpu.matmul %11, %179, %cst_149 {dimension_numbers = #tpu.dot_dimension_numbers<[1], [0], [0], [1], [0, 0, 1, 1], [], []>} : vector<8x128xf32>, vector<128x8xf32>, vector<8x8xf32> -> vector<8x8xf32>
    %c0_150 = arith.constant 0 : index
    %c4_151 = arith.constant 4 : index
    %c0_152 = arith.constant 0 : index
    %c0_153 = arith.constant 0 : index
    %181 = vector.load %arg5[%c0_150, %c4_151, %c0_152, %c0_153] : memref<1x15x1x8xf32, #tpu.memory_space<vmem>>, vector<1x1x1x8xf32>
    %182 = vector.shape_cast %181 : vector<1x1x1x8xf32> to vector<1x8xf32>
    %183 = vector.broadcast %182 : vector<1x8xf32> to vector<8x8xf32>
    %184 = arith.addf %180, %183 : vector<8x8xf32>
    %c0_154 = arith.constant 0 : index
    %c9 = arith.constant 9 : index
    %c0_155 = arith.constant 0 : index
    %c0_156 = arith.constant 0 : index
    %185 = vector.load %arg4[%c0_154, %c9, %c0_155, %c0_156] : memref<1x15x128x8xf32, #tpu.memory_space<vmem>>, vector<1x1x128x8xf32>
    %186 = vector.shape_cast %185 : vector<1x1x128x8xf32> to vector<128x8xf32>
    %cst_157 = arith.constant dense<0.000000e+00> : vector<8x8xf32>
    %187 = tpu.matmul %11, %186, %cst_157 {dimension_numbers = #tpu.dot_dimension_numbers<[1], [0], [0], [1], [0, 0, 1, 1], [], []>} : vector<8x128xf32>, vector<128x8xf32>, vector<8x8xf32> -> vector<8x8xf32>
    %c0_158 = arith.constant 0 : index
    %c9_159 = arith.constant 9 : index
    %c0_160 = arith.constant 0 : index
    %c0_161 = arith.constant 0 : index
    %188 = vector.load %arg5[%c0_158, %c9_159, %c0_160, %c0_161] : memref<1x15x1x8xf32, #tpu.memory_space<vmem>>, vector<1x1x1x8xf32>
    %189 = vector.shape_cast %188 : vector<1x1x1x8xf32> to vector<1x8xf32>
    %190 = vector.broadcast %189 : vector<1x8xf32> to vector<8x8xf32>
    %191 = arith.addf %187, %190 : vector<8x8xf32>
    %c0_162 = arith.constant 0 : index
    %c14 = arith.constant 14 : index
    %c0_163 = arith.constant 0 : index
    %c0_164 = arith.constant 0 : index
    %192 = vector.load %arg4[%c0_162, %c14, %c0_163, %c0_164] : memref<1x15x128x8xf32, #tpu.memory_space<vmem>>, vector<1x1x128x8xf32>
    %193 = vector.shape_cast %192 : vector<1x1x128x8xf32> to vector<128x8xf32>
    %cst_165 = arith.constant dense<0.000000e+00> : vector<8x8xf32>
    %194 = tpu.matmul %11, %193, %cst_165 {dimension_numbers = #tpu.dot_dimension_numbers<[1], [0], [0], [1], [0, 0, 1, 1], [], []>} : vector<8x128xf32>, vector<128x8xf32>, vector<8x8xf32> -> vector<8x8xf32>
    %c0_166 = arith.constant 0 : index
    %c14_167 = arith.constant 14 : index
    %c0_168 = arith.constant 0 : index
    %c0_169 = arith.constant 0 : index
    %195 = vector.load %arg5[%c0_166, %c14_167, %c0_168, %c0_169] : memref<1x15x1x8xf32, #tpu.memory_space<vmem>>, vector<1x1x1x8xf32>
    %196 = vector.shape_cast %195 : vector<1x1x1x8xf32> to vector<1x8xf32>
    %197 = vector.broadcast %196 : vector<1x8xf32> to vector<8x8xf32>
    %198 = arith.addf %194, %197 : vector<8x8xf32>
    %cst_170 = arith.constant 0.353553385 : f32
    %199 = vector.broadcast %cst_170 : f32 to vector<8x8xf32>
    %200 = arith.mulf %184, %199 : vector<8x8xf32>
    %cst_171 = arith.constant dense<0.000000e+00> : vector<8x8xf32>
    %201 = tpu.matmul %200, %191, %cst_171 {dimension_numbers = #tpu.dot_dimension_numbers<[1], [1], [0], [0], [0, 0, 1, 0], [], []>} : vector<8x8xf32>, vector<8x8xf32>, vector<8x8xf32> -> vector<8x8xf32>
    %cst_172 = arith.constant dense<0xFF800000> : vector<8xf32>
    %202 = vector.multi_reduction <maximumf>, %201, %cst_172 [1] : vector<8x8xf32> to vector<8xf32>
    %203 = vector.shape_cast %202 : vector<8xf32> to vector<8x1xf32>
    %204 = vector.broadcast %203 : vector<8x1xf32> to vector<8x8xf32>
    %205 = arith.subf %201, %204 : vector<8x8xf32>
    %206 = math.exp %205 : vector<8x8xf32>
    %cst_173 = arith.constant dense<0.000000e+00> : vector<8xf32>
    %207 = vector.multi_reduction <add>, %206, %cst_173 [1] : vector<8x8xf32> to vector<8xf32>
    %208 = vector.shape_cast %207 : vector<8xf32> to vector<8x1xf32>
    %209 = tpu.reciprocal %208 {approx = true} : vector<8x1xf32> -> vector<8x1xf32>
    %210 = vector.broadcast %209 : vector<8x1xf32> to vector<8x8xf32>
    %211 = arith.mulf %206, %210 : vector<8x8xf32>
    %cst_174 = arith.constant dense<0.000000e+00> : vector<8x8xf32>
    %212 = tpu.matmul %211, %198, %cst_174 {dimension_numbers = #tpu.dot_dimension_numbers<[1], [0], [0], [1], [0, 0, 1, 1], [], []>} : vector<8x8xf32>, vector<8x8xf32>, vector<8x8xf32> -> vector<8x8xf32>
    %c0_175 = arith.constant 0 : index
    %c4_176 = arith.constant 4 : index
    %c0_177 = arith.constant 0 : index
    %c0_178 = arith.constant 0 : index
    %213 = vector.load %arg6[%c0_175, %c4_176, %c0_177, %c0_178] : memref<1x5x8x128xf32, #tpu.memory_space<vmem>>, vector<1x1x8x128xf32>
    %214 = vector.shape_cast %213 : vector<1x1x8x128xf32> to vector<8x128xf32>
    %cst_179 = arith.constant dense<0.000000e+00> : vector<8x128xf32>
    %215 = tpu.matmul %212, %214, %cst_179 {dimension_numbers = #tpu.dot_dimension_numbers<[1], [0], [0], [1], [0, 0, 1, 1], [], []>} : vector<8x8xf32>, vector<8x128xf32>, vector<8x128xf32> -> vector<8x128xf32>
    %216 = arith.addf %177, %215 : vector<8x128xf32>
    %217 = arith.addf %11, %216 : vector<8x128xf32>
    %cst_180 = arith.constant dense<0.000000e+00> : vector<8xf32>
    %218 = vector.multi_reduction <add>, %217, %cst_180 [1] : vector<8x128xf32> to vector<8xf32>
    %219 = vector.shape_cast %218 : vector<8xf32> to vector<8x1xf32>
    %cst_181 = arith.constant 2.500000e-02 : f32
    %220 = vector.broadcast %cst_181 : f32 to vector<8x1xf32>
    %221 = arith.mulf %219, %220 : vector<8x1xf32>
    %222 = vector.broadcast %221 : vector<8x1xf32> to vector<8x128xf32>
    %223 = arith.subf %217, %222 : vector<8x128xf32>
    %224 = vector.broadcast %4 : vector<1x128xf32> to vector<8x128xf32>
    %225 = arith.mulf %223, %224 : vector<8x128xf32>
    %226 = arith.mulf %225, %225 : vector<8x128xf32>
    %cst_182 = arith.constant dense<0.000000e+00> : vector<8xf32>
    %227 = vector.multi_reduction <add>, %226, %cst_182 [1] : vector<8x128xf32> to vector<8xf32>
    %228 = vector.shape_cast %227 : vector<8xf32> to vector<8x1xf32>
    %cst_183 = arith.constant 2.500000e-02 : f32
    %229 = vector.broadcast %cst_183 : f32 to vector<8x1xf32>
    %230 = arith.mulf %228, %229 : vector<8x1xf32>
    %cst_184 = arith.constant 9.99999974E-6 : f32
    %231 = vector.broadcast %cst_184 : f32 to vector<8x1xf32>
    %232 = arith.addf %230, %231 : vector<8x1xf32>
    %233 = math.rsqrt %232 : vector<8x1xf32>
    %234 = vector.broadcast %233 : vector<8x1xf32> to vector<8x128xf32>
    %235 = arith.mulf %225, %234 : vector<8x128xf32>
    %236 = vector.broadcast %16 : vector<1x128xf32> to vector<8x128xf32>
    %237 = arith.mulf %235, %236 : vector<8x128xf32>
    %238 = vector.broadcast %17 : vector<1x128xf32> to vector<8x128xf32>
    %239 = arith.addf %237, %238 : vector<8x128xf32>
    %c0_185 = arith.constant 0 : index
    %c0_186 = arith.constant 0 : index
    %c0_187 = arith.constant 0 : index
    %240 = vector.load %arg7[%c0_185, %c0_186, %c0_187] : memref<1x128x2048xf32, #tpu.memory_space<vmem>>, vector<1x128x2048xf32>
    %241 = vector.shape_cast %240 : vector<1x128x2048xf32> to vector<128x2048xf32>
    %cst_188 = arith.constant dense<0.000000e+00> : vector<8x2048xf32>
    %242 = tpu.matmul %239, %241, %cst_188 {dimension_numbers = #tpu.dot_dimension_numbers<[1], [0], [0], [1], [0, 0, 1, 1], [], []>} : vector<8x128xf32>, vector<128x2048xf32>, vector<8x2048xf32> -> vector<8x2048xf32>
    %c0_189 = arith.constant 0 : index
    %c0_190 = arith.constant 0 : index
    %c0_191 = arith.constant 0 : index
    %243 = vector.load %arg8[%c0_189, %c0_190, %c0_191] : memref<1x1x2048xf32, #tpu.memory_space<vmem>>, vector<1x1x2048xf32>
    %244 = vector.shape_cast %243 : vector<1x1x2048xf32> to vector<1x2048xf32>
    %245 = vector.broadcast %244 : vector<1x2048xf32> to vector<8x2048xf32>
    %246 = arith.addf %242, %245 : vector<8x2048xf32>
    %cst_192 = arith.constant 0.000000e+00 : f32
    %247 = vector.broadcast %cst_192 : f32 to vector<8x2048xf32>
    %248 = arith.maximumf %246, %247 : vector<8x2048xf32>
    %c0_193 = arith.constant 0 : index
    %c0_194 = arith.constant 0 : index
    %c0_195 = arith.constant 0 : index
    %249 = vector.load %arg9[%c0_193, %c0_194, %c0_195] : memref<1x2048x128xf32, #tpu.memory_space<vmem>>, vector<1x2048x128xf32>
    %250 = vector.shape_cast %249 : vector<1x2048x128xf32> to vector<2048x128xf32>
    %cst_196 = arith.constant dense<0.000000e+00> : vector<8x128xf32>
    %251 = tpu.matmul %248, %250, %cst_196 {dimension_numbers = #tpu.dot_dimension_numbers<[1], [0], [0], [1], [0, 0, 1, 1], [], []>} : vector<8x2048xf32>, vector<2048x128xf32>, vector<8x128xf32> -> vector<8x128xf32>
    %252 = vector.broadcast %15 : vector<1x128xf32> to vector<8x128xf32>
    %253 = arith.addf %251, %252 : vector<8x128xf32>
    %254 = arith.addf %239, %253 : vector<8x128xf32>
    %cst_197 = arith.constant dense<0.000000e+00> : vector<8xf32>
    %255 = vector.multi_reduction <add>, %254, %cst_197 [1] : vector<8x128xf32> to vector<8xf32>
    %256 = vector.shape_cast %255 : vector<8xf32> to vector<8x1xf32>
    %cst_198 = arith.constant 2.500000e-02 : f32
    %257 = vector.broadcast %cst_198 : f32 to vector<8x1xf32>
    %258 = arith.mulf %256, %257 : vector<8x1xf32>
    %259 = vector.broadcast %258 : vector<8x1xf32> to vector<8x128xf32>
    %260 = arith.subf %254, %259 : vector<8x128xf32>
    %261 = vector.broadcast %4 : vector<1x128xf32> to vector<8x128xf32>
    %262 = arith.mulf %260, %261 : vector<8x128xf32>
    %263 = arith.mulf %262, %262 : vector<8x128xf32>
    %cst_199 = arith.constant dense<0.000000e+00> : vector<8xf32>
    %264 = vector.multi_reduction <add>, %263, %cst_199 [1] : vector<8x128xf32> to vector<8xf32>
    %265 = vector.shape_cast %264 : vector<8xf32> to vector<8x1xf32>
    %cst_200 = arith.constant 2.500000e-02 : f32
    %266 = vector.broadcast %cst_200 : f32 to vector<8x1xf32>
    %267 = arith.mulf %265, %266 : vector<8x1xf32>
    %cst_201 = arith.constant 9.99999974E-6 : f32
    %268 = vector.broadcast %cst_201 : f32 to vector<8x1xf32>
    %269 = arith.addf %267, %268 : vector<8x1xf32>
    %270 = math.rsqrt %269 : vector<8x1xf32>
    %271 = vector.broadcast %270 : vector<8x1xf32> to vector<8x128xf32>
    %272 = arith.mulf %262, %271 : vector<8x128xf32>
    %273 = vector.broadcast %18 : vector<1x128xf32> to vector<8x128xf32>
    %274 = arith.mulf %272, %273 : vector<8x128xf32>
    %275 = vector.broadcast %19 : vector<1x128xf32> to vector<8x128xf32>
    %276 = arith.addf %274, %275 : vector<8x128xf32>
    %277 = vector.extract_strided_slice %276 {offsets = [7, 0], sizes = [1, 128], strides = [1, 1]} : vector<8x128xf32> to vector<1x128xf32>
    %c0_202 = arith.constant 0 : index
    %c0_203 = arith.constant 0 : index
    %278 = vector.load %arg11[%c0_202, %c0_203] : memref<128x128xf32, #tpu.memory_space<vmem>>, vector<128x128xf32>
    %cst_204 = arith.constant dense<0.000000e+00> : vector<1x128xf32>
    %279 = tpu.matmul %277, %278, %cst_204 {dimension_numbers = #tpu.dot_dimension_numbers<[1], [0], [0], [1], [0, 0, 1, 1], [], []>} : vector<1x128xf32>, vector<128x128xf32>, vector<1x128xf32> -> vector<1x128xf32>
    %c0_205 = arith.constant 0 : index
    %c0_206 = arith.constant 0 : index
    %280 = vector.load %arg12[%c0_205, %c0_206] : memref<1x128xf32, #tpu.memory_space<vmem>>, vector<1x128xf32>
    %281 = arith.addf %279, %280 : vector<1x128xf32>
    %c0_207 = arith.constant 0 : index
    %c0_208 = arith.constant 0 : index
    %c0_209 = arith.constant 0 : index
    %282 = vector.load %arg13[%c0_207, %c0_208, %c0_209] : memref<1x1x128xf32, #tpu.memory_space<vmem>>, vector<1x1x128xf32>
    %283 = vector.shape_cast %282 : vector<1x1x128xf32> to vector<1x128xf32>
    %284 = vector.shape_cast %281 : vector<1x128xf32> to vector<1x1x128xf32>
    tpu.vector_store %arg13[%c0_207, %c0_208, %c0_209], %284 {strides = array<i32>} : memref<1x1x128xf32, #tpu.memory_space<vmem>>, vector<1x1x128xf32>,
    return
  }
  func.func @transform_0(%arg0: i32) -> (i32, i32, i32) {
    %c0_i32 = arith.constant 0 : i32
    %c0_i32_0 = arith.constant 0 : i32
    %c0_i32_1 = arith.constant 0 : i32
    return %arg0, %c0_i32, %c0_i32_0 : i32, i32, i32
  }
  func.func @transform_1(%arg0: i32) -> (i32, i32) {
    %c0_i32 = arith.constant 0 : i32
    %c0_i32_0 = arith.constant 0 : i32
    %c0_i32_1 = arith.constant 0 : i32
    return %c0_i32, %c0_i32_0 : i32, i32
  }
  func.func @transform_2(%arg0: i32) -> (i32, i32) {
    %c0_i32 = arith.constant 0 : i32
    %c0_i32_0 = arith.constant 0 : i32
    %c0_i32_1 = arith.constant 0 : i32
    return %c0_i32, %c0_i32_0 : i32, i32
  }
  func.func @transform_3(%arg0: i32) -> (i32, i32, i32, i32) {
    %c0_i32 = arith.constant 0 : i32
    %c0_i32_0 = arith.constant 0 : i32
    %c0_i32_1 = arith.constant 0 : i32
    %c0_i32_2 = arith.constant 0 : i32
    %c0_i32_3 = arith.constant 0 : i32
    return %c0_i32, %c0_i32_0, %c0_i32_1, %c0_i32_2 : i32, i32, i32, i32
  }
  func.func @transform_4(%arg0: i32) -> (i32, i32, i32, i32) {
    %c0_i32 = arith.constant 0 : i32
    %c0_i32_0 = arith.constant 0 : i32
    %c0_i32_1 = arith.constant 0 : i32
    %c0_i32_2 = arith.constant 0 : i32
    %c0_i32_3 = arith.constant 0 : i32
    return %c0_i32, %c0_i32_0, %c0_i32_1, %c0_i32_2 : i32, i32, i32, i32
  }
  func.func @transform_5(%arg0: i32) -> (i32, i32, i32, i32) {
    %c0_i32 = arith.constant 0 : i32
    %c0_i32_0 = arith.constant 0 : i32
    %c0_i32_1 = arith.constant 0 : i32
    %c0_i32_2 = arith.constant 0 : i32
    %c0_i32_3 = arith.constant 0 : i32
    return %c0_i32, %c0_i32_0, %c0_i32_1, %c0_i32_2 : i32, i32, i32, i32
  }
  func.func @transform_6(%arg0: i32) -> (i32, i32, i32) {
    %c0_i32 = arith.constant 0 : i32
    %c0_i32_0 = arith.constant 0 : i32
    %c0_i32_1 = arith.constant 0 : i32
    %c0_i32_2 = arith.constant 0 : i32
    return %c0_i32, %c0_i32_0, %c0_i32_1 : i32, i32, i32
  }
  func.func @transform_7(%arg0: i32) -> (i32, i32, i32) {
    %c0_i32 = arith.constant 0 : i32
    %c0_i32_0 = arith.constant 0 : i32
    %c0_i32_1 = arith.constant 0 : i32
    %c0_i32_2 = arith.constant 0 : i32
    return %c0_i32, %c0_i32_0, %c0_i32_1 : i32, i32, i32
  }
  func.func @transform_8(%arg0: i32) -> (i32, i32, i32) {
    %c0_i32 = arith.constant 0 : i32
    %c0_i32_0 = arith.constant 0 : i32
    %c0_i32_1 = arith.constant 0 : i32
    %c0_i32_2 = arith.constant 0 : i32
    return %c0_i32, %c0_i32_0, %c0_i32_1 : i32, i32, i32
  }
  func.func @transform_9(%arg0: i32) -> (i32, i32, i32) {
    %c0_i32 = arith.constant 0 : i32
    %c0_i32_0 = arith.constant 0 : i32
    %c0_i32_1 = arith.constant 0 : i32
    %c0_i32_2 = arith.constant 0 : i32
    return %c0_i32, %c0_i32_0, %c0_i32_1 : i32, i32, i32
  }
  func.func @transform_10(%arg0: i32) -> (i32, i32) {
    %c0_i32 = arith.constant 0 : i32
    %c0_i32_0 = arith.constant 0 : i32
    %c0_i32_1 = arith.constant 0 : i32
    return %c0_i32, %c0_i32_0 : i32, i32
  }
  func.func @transform_11(%arg0: i32) -> (i32, i32) {
    %c0_i32 = arith.constant 0 : i32
    %c0_i32_0 = arith.constant 0 : i32
    %c0_i32_1 = arith.constant 0 : i32
    return %c0_i32, %c0_i32_0 : i32, i32
  }
  func.func @transform_12(%arg0: i32) -> (i32, i32, i32) {
    %c0_i32 = arith.constant 0 : i32
    %c0_i32_0 = arith.constant 0 : i32
    %c0_i32_1 = arith.constant 0 : i32
    return %arg0, %c0_i32, %c0_i32_0 : i32, i32, i32
  }
}

</mosaic_0001>

<llo_original>
// kernel: rowwise_transformer_forward.1
$region0: #{rowwise_transformer_forward.1}
  #allocation0 [shape = 'u32[]', space=smem, size = 0x4, offset = 0x4, fixed_abs, tag = 'smem constant byte address 0x4 - core index']
  #allocation1 [shape = 'u32[144,128]{1,0:T(1,128)}', space=vmem, size = 0x12000, scoped, tag = 'internal scratch']
  %s0 = inlined_call_operand.hbm [shape: f32[2,8,16], index: 0, kind: input, shape index: {}]
  %s1 = inlined_call_operand.vmem [shape: f32[16,128], index: 1, kind: input, shape index: {}]
  %s2 = inlined_call_operand.vmem [shape: f32[1,128], index: 2, kind: input, shape index: {}]
  %s3 = inlined_call_operand.vmem [shape: f32[1,15,128,8], index: 3, kind: input, shape index: {}]
  %s4 = inlined_call_operand.vmem [shape: f32[1,15,1,8], index: 4, kind: input, shape index: {}]
  %s5 = inlined_call_operand.vmem [shape: f32[1,5,8,128], index: 5, kind: input, shape index: {}]
  %s6 = inlined_call_operand.vmem [shape: f32[1,128,2048], index: 6, kind: input, shape index: {}]
  %s7 = inlined_call_operand.hbm [shape: f32[1,1,2048], index: 7, kind: input, shape index: {}]
  %s8 = inlined_call_operand.hbm [shape: f32[1,2048,128], index: 8, kind: input, shape index: {}]
  %s9 = inlined_call_operand.vmem [shape: f32[1,6,128], index: 9, kind: input, shape index: {}]
  %s10 = inlined_call_operand.hbm [shape: f32[128,128], index: 10, kind: input, shape index: {}]
  %s11 = inlined_call_operand.vmem [shape: f32[1,128], index: 11, kind: input, shape index: {}]
  %s12 = inlined_call_operand.hbm [shape: f32[2,1,128], index: 12, kind: output, shape index: {}]
  %s13 = sld [smem:[#allocation0]]
  $region97: #{rowwise_transformer_forward.1} parent=0
    _
  %s15 = ssub.s32 1, %s13
  %s16 = scalar_select 0, %s15, %s13
  $region1: #{rowwise_transformer_forward.1} parent=0
    #allocation2 [shape = 'u8[8192]{0}', space=vmem, size = 0x2000, scoped, tag = 'input window, operand 0']
    #allocation3 [shape = 's32[2]{0}', space=sflag, size = 0x8, scoped, tag = 'scoped memory for rowwise_transformer_forward.1']
    #allocation4 [shape = 's32[2]{0}', space=sflag, size = 0x8, scoped, tag = 'scoped memory for rowwise_transformer_forward.1']
    #allocation5 [shape = 'u8[8192]{0}', space=vmem, size = 0x2000, scoped, tag = 'input window, operand 7, single buffered']
    #allocation6 [shape = 's32[1]{0}', space=sflag, size = 0x4, scoped, tag = 'scoped memory for rowwise_transformer_forward.1']
    #allocation7 [shape = 'u8[1048576]{0}', space=vmem, size = 0x100000, scoped, tag = 'input window, operand 8, single buffered']
    #allocation8 [shape = 'u8[65536]{0}', space=vmem, size = 0x10000, scoped, tag = 'input window, operand 10, single buffered']
    #allocation9 [shape = 's32[1]{0}', space=sflag, size = 0x4, scoped, tag = 'scoped memory for rowwise_transformer_forward.1']
    #allocation10 [shape = 'u8[1024]{0}', space=vmem, size = 0x400, scoped, tag = 'output window, operand 0']
    %17 = vsyncpa [#allocation3], 0
    %s18 = scalar_lea.sflag [#allocation3], 1
    %19 = vsyncpa %s18, 0
    %20 = vsyncpa [#allocation6], 0
    %21 = vsyncpa [#allocation9], 0
    %22 = vsyncpa [#allocation4], 0
    %s23 = scalar_lea.sflag [#allocation4], 1
    %24 = vsyncpa %s23, 0
    loop: start=0, step=1, limit=4
    $region2: #{rowwise_transformer_forward.1} parent=1 // loop_pre_header
      _
    $region3: #{rowwise_transformer_forward.1} parent=1 // loop_header
      %s26 = sphi 0, %s30
      %p27 = scmp.ge.s32.totalorder %s26, 4
      %s36 = sphi 0, %s38
      %s39 = sphi 0, %s36
      %s40 = sphi 0, %s39
      %s56 = sphi 0, %s40
      %s60 = sphi 0, %s60
      %s62 = sphi 0, %s60
      %s63 = sphi 0, %s62
      %s77 = sphi 0, %s63
      %s81 = sphi 0, %s81
      %s83 = sphi 0, %s81
      %s84 = sphi 0, %s83
      %s98 = sphi 0, %s84
      %s102 = sphi 0, %s102
      %s104 = sphi 0, %s102
      %s105 = sphi 0, %s104
      %s119 = sphi 0, %s105
      %s123 = sphi 0, %s123
      %s125 = sphi 0, %s123
      %s126 = sphi 0, %s125
      %s140 = sphi 0, %s126
      %s144 = sphi 0, %s144
      %s146 = sphi 0, %s144
      %s147 = sphi 0, %s146
      %s161 = sphi 0, %s147
      %s165 = sphi 0, %s165
      %s167 = sphi 0, %s165
      %s168 = sphi 0, %s167
      %s182 = sphi 0, %s168
      %s186 = sphi 0, %s186
      %s188 = sphi 0, %s186
      %s189 = sphi 0, %s188
      %s203 = sphi 0, %s189
      %s207 = sphi 0, %s207
      %s209 = sphi 0, %s207
      %s210 = sphi 0, %s209
      %s224 = sphi 0, %s210
      %s228 = sphi 0, %s228
      %s230 = sphi 0, %s228
      %s231 = sphi 0, %s230
      %s245 = sphi 0, %s231
      %s249 = sphi 0, %s249
      %s251 = sphi 0, %s249
      %s252 = sphi 0, %s251
      %s266 = sphi 0, %s252
      %s270 = sphi 0, %s270
      %s272 = sphi 0, %s270
      %s273 = sphi 0, %s272
      %s287 = sphi 0, %s273
      %s293 = sphi 0, %s295
      %s296 = sphi 0, %s293
      %s297 = sphi 0, %s296
      %s313 = sphi 0, %s297
    $region4: #{rowwise_transformer_forward.1} parent=1 // loop_header_branch
      %29 = sbr.rel (%p27) target = $region8
    $region5: #{rowwise_transformer_forward.1} parent=1 // loop_body
      %s31 = ssub.s32 %s26, 1
      %s32 = ssub.s32 %s26, 2
      %s33 = sadd.s32 %s26, 1
      %s34 = ssub.s32 %s26, %s33
      %p35 = scmp.eq.s32.totalorder %s34, 0
      %s37 = sadd.s32 %s36, 1
      %s38 = scalar_select %p35, %s36, %s37
      %p41 = pneg %p35
      %p42 = scmp.eq.s32.totalorder %s26, 1
      %p43 = por %p41, %p42
      %p44 = scmp.ne.s32.totalorder %s36, %s39
      %p45 = scmp.eq.s32.totalorder %s26, 0
      %p46 = por %p44, %p45
      %p47 = scmp.ne.s32.totalorder %s36, %s39
      %p48 = scmp.eq.s32.totalorder %s31, 1
      %p49 = por %p47, %p48
      %p50 = scmp.ne.s32.totalorder %s39, %s40
      %p51 = scmp.eq.s32.totalorder %s31, 0
      %p52 = por %p50, %p51
      %p53 = scmp.ne.s32.totalorder %s39, %s40
      %p54 = scmp.eq.s32.totalorder %s32, 1
      %p55 = por %p53, %p54
      %p57 = scmp.ne.s32.totalorder %s40, %s56
      %p58 = scmp.eq.s32.totalorder %s32, 0
      %p59 = por %p57, %p58
      %s61 = sadd.s32 %s60, 1
      %p64 = scmp.eq.s32.totalorder %s26, 1
      %p65 = scmp.ne.s32.totalorder %s60, %s62
      %p66 = scmp.eq.s32.totalorder %s26, 0
      %p67 = por %p65, %p66
      %p68 = scmp.ne.s32.totalorder %s60, %s62
      %p69 = scmp.eq.s32.totalorder %s31, 1
      %p70 = por %p68, %p69
      %p71 = scmp.ne.s32.totalorder %s62, %s63
      %p72 = scmp.eq.s32.totalorder %s31, 0
      %p73 = por %p71, %p72
      %p74 = scmp.ne.s32.totalorder %s62, %s63
      %p75 = scmp.eq.s32.totalorder %s32, 1
      %p76 = por %p74, %p75
      %p78 = scmp.ne.s32.totalorder %s63, %s77
      %p79 = scmp.eq.s32.totalorder %s32, 0
      %p80 = por %p78, %p79
      %s82 = sadd.s32 %s81, 1
      %p85 = scmp.eq.s32.totalorder %s26, 1
      %p86 = scmp.ne.s32.totalorder %s81, %s83
      %p87 = scmp.eq.s32.totalorder %s26, 0
      %p88 = por %p86, %p87
      %p89 = scmp.ne.s32.totalorder %s81, %s83
      %p90 = scmp.eq.s32.totalorder %s31, 1
      %p91 = por %p89, %p90
      %p92 = scmp.ne.s32.totalorder %s83, %s84
      %p93 = scmp.eq.s32.totalorder %s31, 0
      %p94 = por %p92, %p93
      %p95 = scmp.ne.s32.totalorder %s83, %s84
      %p96 = scmp.eq.s32.totalorder %s32, 1
      %p97 = por %p95, %p96
      %p99 = scmp.ne.s32.totalorder %s84, %s98
      %p100 = scmp.eq.s32.totalorder %s32, 0
      %p101 = por %p99, %p100
      %s103 = sadd.s32 %s102, 1
      %p106 = scmp.eq.s32.totalorder %s26, 1
      %p107 = scmp.ne.s32.totalorder %s102, %s104
      %p108 = scmp.eq.s32.totalorder %s26, 0
      %p109 = por %p107, %p108
      %p110 = scmp.ne.s32.totalorder %s102, %s104
      %p111 = scmp.eq.s32.totalorder %s31, 1
      %p112 = por %p110, %p111
      %p113 = scmp.ne.s32.totalorder %s104, %s105
      %p114 = scmp.eq.s32.totalorder %s31, 0
      %p115 = por %p113, %p114
      %p116 = scmp.ne.s32.totalorder %s104, %s105
      %p117 = scmp.eq.s32.totalorder %s32, 1
      %p118 = por %p116, %p117
      %p120 = scmp.ne.s32.totalorder %s105, %s119
      %p121 = scmp.eq.s32.totalorder %s32, 0
      %p122 = por %p120, %p121
      %s124 = sadd.s32 %s123, 1
      %p127 = scmp.eq.s32.totalorder %s26, 1
      %p128 = scmp.ne.s32.totalorder %s123, %s125
      %p129 = scmp.eq.s32.totalorder %s26, 0
      %p130 = por %p128, %p129
      %p131 = scmp.ne.s32.totalorder %s123, %s125
      %p132 = scmp.eq.s32.totalorder %s31, 1
      %p133 = por %p131, %p132
      %p134 = scmp.ne.s32.totalorder %s125, %s126
      %p135 = scmp.eq.s32.totalorder %s31, 0
      %p136 = por %p134, %p135
      %p137 = scmp.ne.s32.totalorder %s125, %s126
      %p138 = scmp.eq.s32.totalorder %s32, 1
      %p139 = por %p137, %p138
      %p141 = scmp.ne.s32.totalorder %s126, %s140
      %p142 = scmp.eq.s32.totalorder %s32, 0
      %p143 = por %p141, %p142
      %s145 = sadd.s32 %s144, 1
      %p148 = scmp.eq.s32.totalorder %s26, 1
      %p149 = scmp.ne.s32.totalorder %s144, %s146
      %p150 = scmp.eq.s32.totalorder %s26, 0
      %p151 = por %p149, %p150
      %p152 = scmp.ne.s32.totalorder %s144, %s146
      %p153 = scmp.eq.s32.totalorder %s31, 1
      %p154 = por %p152, %p153
      %p155 = scmp.ne.s32.totalorder %s146, %s147
      %p156 = scmp.eq.s32.totalorder %s31, 0
      %p157 = por %p155, %p156
      %p158 = scmp.ne.s32.totalorder %s146, %s147
      %p159 = scmp.eq.s32.totalorder %s32, 1
      %p160 = por %p158, %p159
      %p162 = scmp.ne.s32.totalorder %s147, %s161
      %p163 = scmp.eq.s32.totalorder %s32, 0
      %p164 = por %p162, %p163
      %s166 = sadd.s32 %s165, 1
      %p169 = scmp.eq.s32.totalorder %s26, 1
      %p170 = scmp.ne.s32.totalorder %s165, %s167
      %p171 = scmp.eq.s32.totalorder %s26, 0
      %p172 = por %p170, %p171
      %p173 = scmp.ne.s32.totalorder %s165, %s167
      %p174 = scmp.eq.s32.totalorder %s31, 1
      %p175 = por %p173, %p174
      %p176 = scmp.ne.s32.totalorder %s167, %s168
      %p177 = scmp.eq.s32.totalorder %s31, 0
      %p178 = por %p176, %p177
      %p179 = scmp.ne.s32.totalorder %s167, %s168
      %p180 = scmp.eq.s32.totalorder %s32, 1
      %p181 = por %p179, %p180
      %p183 = scmp.ne.s32.totalorder %s168, %s182
      %p184 = scmp.eq.s32.totalorder %s32, 0
      %p185 = por %p183, %p184
      %s187 = sadd.s32 %s186, 1
      %p190 = scmp.eq.s32.totalorder %s26, 1
      %p191 = scmp.ne.s32.totalorder %s186, %s188
      %p192 = scmp.eq.s32.totalorder %s26, 0
      %p193 = por %p191, %p192
      %p194 = scmp.ne.s32.totalorder %s186, %s188
      %p195 = scmp.eq.s32.totalorder %s31, 1
      %p196 = por %p194, %p195
      %p197 = scmp.ne.s32.totalorder %s188, %s189
      %p198 = scmp.eq.s32.totalorder %s31, 0
      %p199 = por %p197, %p198
      %p200 = scmp.ne.s32.totalorder %s188, %s189
      %p201 = scmp.eq.s32.totalorder %s32, 1
      %p202 = por %p200, %p201
      %p204 = scmp.ne.s32.totalorder %s189, %s203
      %p205 = scmp.eq.s32.totalorder %s32, 0
      %p206 = por %p204, %p205
      %s208 = sadd.s32 %s207, 1
      %p211 = scmp.eq.s32.totalorder %s26, 1
      %p212 = scmp.ne.s32.totalorder %s207, %s209
      %p213 = scmp.eq.s32.totalorder %s26, 0
      %p214 = por %p212, %p213
      %p215 = scmp.ne.s32.totalorder %s207, %s209
      %p216 = scmp.eq.s32.totalorder %s31, 1
      %p217 = por %p215, %p216
      %p218 = scmp.ne.s32.totalorder %s209, %s210
      %p219 = scmp.eq.s32.totalorder %s31, 0
      %p220 = por %p218, %p219
      %p221 = scmp.ne.s32.totalorder %s209, %s210
      %p222 = scmp.eq.s32.totalorder %s32, 1
      %p223 = por %p221, %p222
      %p225 = scmp.ne.s32.totalorder %s210, %s224
      %p226 = scmp.eq.s32.totalorder %s32, 0
      %p227 = por %p225, %p226
      %s229 = sadd.s32 %s228, 1
      %p232 = scmp.eq.s32.totalorder %s26, 1
      %p233 = scmp.ne.s32.totalorder %s228, %s230
      %p234 = scmp.eq.s32.totalorder %s26, 0
      %p235 = por %p233, %p234
      %p236 = scmp.ne.s32.totalorder %s228, %s230
      %p237 = scmp.eq.s32.totalorder %s31, 1
      %p238 = por %p236, %p237
      %p239 = scmp.ne.s32.totalorder %s230, %s231
      %p240 = scmp.eq.s32.totalorder %s31, 0
      %p241 = por %p239, %p240
      %p242 = scmp.ne.s32.totalorder %s230, %s231
      %p243 = scmp.eq.s32.totalorder %s32, 1
      %p244 = por %p242, %p243
      %p246 = scmp.ne.s32.totalorder %s231, %s245
      %p247 = scmp.eq.s32.totalorder %s32, 0
      %p248 = por %p246, %p247
      %s250 = sadd.s32 %s249, 1
      %p253 = scmp.eq.s32.totalorder %s26, 1
      %p254 = scmp.ne.s32.totalorder %s249, %s251
      %p255 = scmp.eq.s32.totalorder %s26, 0
      %p256 = por %p254, %p255
      %p257 = scmp.ne.s32.totalorder %s249, %s251
      %p258 = scmp.eq.s32.totalorder %s31, 1
      %p259 = por %p257, %p258
      %p260 = scmp.ne.s32.totalorder %s251, %s252
      %p261 = scmp.eq.s32.totalorder %s31, 0
      %p262 = por %p260, %p261
      %p263 = scmp.ne.s32.totalorder %s251, %s252
      %p264 = scmp.eq.s32.totalorder %s32, 1
      %p265 = por %p263, %p264
      %p267 = scmp.ne.s32.totalorder %s252, %s266
      %p268 = scmp.eq.s32.totalorder %s32, 0
      %p269 = por %p267, %p268
      %s271 = sadd.s32 %s270, 1
      %p274 = scmp.eq.s32.totalorder %s26, 1
      %p275 = scmp.ne.s32.totalorder %s270, %s272
      %p276 = scmp.eq.s32.totalorder %s26, 0
      %p277 = por %p275, %p276
      %p278 = scmp.ne.s32.totalorder %s270, %s272
      %p279 = scmp.eq.s32.totalorder %s31, 1
      %p280 = por %p278, %p279
      %p281 = scmp.ne.s32.totalorder %s272, %s273
      %p282 = scmp.eq.s32.totalorder %s31, 0
      %p283 = por %p281, %p282
      %p284 = scmp.ne.s32.totalorder %s272, %s273
      %p285 = scmp.eq.s32.totalorder %s32, 1
      %p286 = por %p284, %p285
      %p288 = scmp.ne.s32.totalorder %s273, %s287
      %p289 = scmp.eq.s32.totalorder %s32, 0
      %p290 = por %p288, %p289
      %s291 = ssub.s32 %s26, %s33
      %p292 = scmp.eq.s32.totalorder %s291, 0
      %s294 = sadd.s32 %s293, 1
      %s295 = scalar_select %p292, %s293, %s294
      %p298 = pneg %p292
      %p299 = scmp.eq.s32.totalorder %s26, 1
      %p300 = por %p298, %p299
      %p301 = scmp.ne.s32.totalorder %s293, %s296
      %p302 = scmp.eq.s32.totalorder %s26, 0
      %p303 = por %p301, %p302
      %p304 = scmp.ne.s32.totalorder %s293, %s296
      %p305 = scmp.eq.s32.totalorder %s31, 1
      %p306 = por %p304, %p305
      %p307 = scmp.ne.s32.totalorder %s296, %s297
      %p308 = scmp.eq.s32.totalorder %s31, 0
      %p309 = por %p307, %p308
      %p310 = scmp.ne.s32.totalorder %s296, %s297
      %p311 = scmp.eq.s32.totalorder %s32, 1
      %p312 = por %p310, %p311
      %p314 = scmp.ne.s32.totalorder %s297, %s313
      %p315 = scmp.eq.s32.totalorder %s32, 0
      %p316 = por %p314, %p315
      %p317 = scmp.le.s32.totalorder 1, %s26
      %p318 = scmp.lt.s32.totalorder %s26, 3
      %p319 = pnand %p317, %p318
      %p320 = pneg %p319
      // Predicated region
      $region9: #{rowwise_transformer_forward.1} parent=5 // pred_check
        _
      $region10: #{rowwise_transformer_forward.1} parent=5 // pred_check_branch
        %322 = sbr.rel (%p319) target = $region12
      $region11: #{rowwise_transformer_forward.1} parent=5 // pred_region
        %s323 = ssub.s32 %s26, 1
        // Predicated region
        $region13: #{rowwise_transformer_forward.1} parent=11 // pred_check
          %p324 = pneg %p73
        $region14: #{rowwise_transformer_forward.1} parent=11 // pred_check_branch
          %326 = sbr.rel (%p324) target = $region16
        $region15: #{rowwise_transformer_forward.1} parent=11 // pred_region
          _
        $region16: #{rowwise_transformer_forward.1} parent=11 // pred_fallthru
          _
        // Predicated region
        $region17: #{rowwise_transformer_forward.1} parent=11 // pred_check
          %p327 = pneg %p94
        $region18: #{rowwise_transformer_forward.1} parent=11 // pred_check_branch
          %329 = sbr.rel (%p327) target = $region20
        $region19: #{rowwise_transformer_forward.1} parent=11 // pred_region
          _
        $region20: #{rowwise_transformer_forward.1} parent=11 // pred_fallthru
          _
        // Predicated region
        $region21: #{rowwise_transformer_forward.1} parent=11 // pred_check
          %p330 = pneg %p115
        $region22: #{rowwise_transformer_forward.1} parent=11 // pred_check_branch
          %332 = sbr.rel (%p330) target = $region24
        $region23: #{rowwise_transformer_forward.1} parent=11 // pred_region
          _
        $region24: #{rowwise_transformer_forward.1} parent=11 // pred_fallthru
          _
        // Predicated region
        $region25: #{rowwise_transformer_forward.1} parent=11 // pred_check
          %p333 = pneg %p136
        $region26: #{rowwise_transformer_forward.1} parent=11 // pred_check_branch
          %335 = sbr.rel (%p333) target = $region28
        $region27: #{rowwise_transformer_forward.1} parent=11 // pred_region
          _
        $region28: #{rowwise_transformer_forward.1} parent=11 // pred_fallthru
          _
        // Predicated region
        $region29: #{rowwise_transformer_forward.1} parent=11 // pred_check
          %p336 = pneg %p157
        $region30: #{rowwise_transformer_forward.1} parent=11 // pred_check_branch
          %338 = sbr.rel (%p336) target = $region32
        $region31: #{rowwise_transformer_forward.1} parent=11 // pred_region
          _
        $region32: #{rowwise_transformer_forward.1} parent=11 // pred_fallthru
          _
        // Predicated region
        $region33: #{rowwise_transformer_forward.1} parent=11 // pred_check
          %p339 = pneg %p178
        $region34: #{rowwise_transformer_forward.1} parent=11 // pred_check_branch
          %341 = sbr.rel (%p339) target = $region36
        $region35: #{rowwise_transformer_forward.1} parent=11 // pred_region
          _
        $region36: #{rowwise_transformer_forward.1} parent=11 // pred_fallthru
          _
        // Predicated region
        $region37: #{rowwise_transformer_forward.1} parent=11 // pred_check
          %p342 = pneg %p199
        $region38: #{rowwise_transformer_forward.1} parent=11 // pred_check_branch
          %344 = sbr.rel (%p342) target = $region40
        $region39: #{rowwise_transformer_forward.1} parent=11 // pred_region
          %s346 = ssub.s32 256, 256
          %347 = vsyncadd [#allocation6], %s346
          %s349 = sshll.u32 [#allocation5], 4
          %s350 = int_to_ptr.vmem [resolvable:$true] %s349
          %352 = dma.hbm_to_vmem [thread:$0]  %s7, 256, %s350, [#allocation6]
        $region40: #{rowwise_transformer_forward.1} parent=11 // pred_fallthru
          _
        // Predicated region
        $region41: #{rowwise_transformer_forward.1} parent=11 // pred_check
          %p353 = pneg %p220
        $region42: #{rowwise_transformer_forward.1} parent=11 // pred_check_branch
          %355 = sbr.rel (%p353) target = $region44
        $region43: #{rowwise_transformer_forward.1} parent=11 // pred_region
          %s357 = ssub.s32 32768, 32768
          %358 = vsyncadd [#allocation6], %s357
          %s359 = sshll.u32 [#allocation7], 4
          %s360 = int_to_ptr.vmem [resolvable:$true] %s359
          %365 = dma.hbm_to_vmem [thread:$0]  %s8, 32768, %s360, [#allocation6], 128, 128, 8
        $region44: #{rowwise_transformer_forward.1} parent=11 // pred_fallthru
          _
        // Predicated region
        $region45: #{rowwise_transformer_forward.1} parent=11 // pred_check
          %p366 = pneg %p241
        $region46: #{rowwise_transformer_forward.1} parent=11 // pred_check_branch
          %368 = sbr.rel (%p366) target = $region48
        $region47: #{rowwise_transformer_forward.1} parent=11 // pred_region
          _
        $region48: #{rowwise_transformer_forward.1} parent=11 // pred_fallthru
          _
        // Predicated region
        $region49: #{rowwise_transformer_forward.1} parent=11 // pred_check
          %p369 = pneg %p262
        $region50: #{rowwise_transformer_forward.1} parent=11 // pred_check_branch
          %371 = sbr.rel (%p369) target = $region52
        $region51: #{rowwise_transformer_forward.1} parent=11 // pred_region
          %s373 = ssub.s32 2048, 2048
          %374 = vsyncadd [#allocation9], %s373
          %s375 = sshll.u32 [#allocation8], 4
          %s376 = int_to_ptr.vmem [resolvable:$true] %s375
          %381 = dma.hbm_to_vmem [thread:$0]  %s10, 2048, %s376, [#allocation9], 128, 128, 8
        $region52: #{rowwise_transformer_forward.1} parent=11 // pred_fallthru
          _
        // Predicated region
        $region53: #{rowwise_transformer_forward.1} parent=11 // pred_check
          %p382 = pneg %p283
        $region54: #{rowwise_transformer_forward.1} parent=11 // pred_check_branch
          %384 = sbr.rel (%p382) target = $region56
        $region55: #{rowwise_transformer_forward.1} parent=11 // pred_region
          _
        $region56: #{rowwise_transformer_forward.1} parent=11 // pred_fallthru
          _
      $region12: #{rowwise_transformer_forward.1} parent=5 // pred_fallthru
        _
      %p385 = scmp.lt.s32.totalorder %s26, 2
      // Predicated region
      $region57: #{rowwise_transformer_forward.1} parent=5 // pred_check
        %p386 = pneg %p385
      $region58: #{rowwise_transformer_forward.1} parent=5 // pred_check_branch
        %388 = sbr.rel (%p386) target = $region60
      $region59: #{rowwise_transformer_forward.1} parent=5 // pred_region
        // Predicated region
        $region61: #{rowwise_transformer_forward.1} parent=59 // pred_check
          %p389 = pneg %p46
        $region62: #{rowwise_transformer_forward.1} parent=59 // pred_check_branch
          %391 = sbr.rel (%p389) target = $region64
        $region63: #{rowwise_transformer_forward.1} parent=59 // pred_region
          %s392 = sand.u32 %s36, 1
          %s393 = scalar_lea.sflag [#allocation3], %s392
          %s394 = sand.u32 %s36, 1
          %s395 = smul.addr %s394, 8
          %s396 = scalar_lea.vmem [#allocation2], %s395
          %s398 = ssub.s32 128, 128
          %399 = vsyncadd %s393, %s398
          %s400 = smul.addr %s26, 128
          %s401 = scalar_lea.hbm %s0, %s400
          %s403 = sshll.u32 %s396, 4
          %s404 = int_to_ptr.vmem [resolvable:$true] %s403
          %406 = dma.hbm_to_vmem [thread:$0]  %s401, 128, %s404, %s393
        $region64: #{rowwise_transformer_forward.1} parent=59 // pred_fallthru
          _
      $region60: #{rowwise_transformer_forward.1} parent=5 // pred_fallthru
        _
      %p407 = scmp.le.s32.totalorder 1, %s26
      %p408 = scmp.lt.s32.totalorder %s26, 3
      %p409 = pnand %p407, %p408
      %p410 = pneg %p409
      // Predicated region
      $region65: #{rowwise_transformer_forward.1} parent=5 // pred_check
        _
      $region66: #{rowwise_transformer_forward.1} parent=5 // pred_check_branch
        %412 = sbr.rel (%p409) target = $region68
      $region67: #{rowwise_transformer_forward.1} parent=5 // pred_region
        %s413 = ssub.s32 %s26, 1
        %s414 = sand.u32 %s39, 1
        %s415 = scalar_lea.sflag [#allocation3], %s414
        %s416 = sand.u32 %s39, 1
        %s417 = smul.addr %s416, 8
        %s418 = scalar_lea.vmem [#allocation2], %s417
        // Predicated region
        $region69: #{rowwise_transformer_forward.1} parent=67 // pred_check
          %p419 = pneg %p52
        $region70: #{rowwise_transformer_forward.1} parent=67 // pred_check_branch
          %421 = sbr.rel (%p419) target = $region72
        $region71: #{rowwise_transformer_forward.1} parent=67 // pred_region
          %422 = dma.done %s415, 128
        $region72: #{rowwise_transformer_forward.1} parent=67 // pred_fallthru
          _
        // Predicated region
        $region73: #{rowwise_transformer_forward.1} parent=67 // pred_check
          %p423 = pneg %p199
        $region74: #{rowwise_transformer_forward.1} parent=67 // pred_check_branch
          %425 = sbr.rel (%p423) target = $region76
        $region75: #{rowwise_transformer_forward.1} parent=67 // pred_region
          %426 = dma.done [#allocation6], 256
        $region76: #{rowwise_transformer_forward.1} parent=67 // pred_fallthru
          _
        // Predicated region
        $region77: #{rowwise_transformer_forward.1} parent=67 // pred_check
          %p427 = pneg %p220
        $region78: #{rowwise_transformer_forward.1} parent=67 // pred_check_branch
          %429 = sbr.rel (%p427) target = $region80
        $region79: #{rowwise_transformer_forward.1} parent=67 // pred_region
          %430 = dma.done [#allocation6], 32768
        $region80: #{rowwise_transformer_forward.1} parent=67 // pred_fallthru
          _
        // Predicated region
        $region81: #{rowwise_transformer_forward.1} parent=67 // pred_check
          %p431 = pneg %p262
        $region82: #{rowwise_transformer_forward.1} parent=67 // pred_check_branch
          %433 = sbr.rel (%p431) target = $region84
        $region83: #{rowwise_transformer_forward.1} parent=67 // pred_region
          %434 = dma.done [#allocation9], 2048
        $region84: #{rowwise_transformer_forward.1} parent=67 // pred_fallthru
          _
        %s435 = sand.u32 %s39, 1
        %s436 = scalar_lea.sflag [#allocation3], %s435
        %s437 = sand.u32 %s39, 1
        %s438 = smul.addr %s437, 8
        %s439 = scalar_lea.vmem [#allocation2], %s438
        %p440 = pneg %p52
        %p441 = pneg %p49
        %p442 = pneg %p73
        %p443 = pneg %p70
        %p444 = pneg %p94
        %p445 = pneg %p91
        %p446 = pneg %p115
        %p447 = pneg %p112
        %p448 = pneg %p136
        %p449 = pneg %p133
        %p450 = pneg %p157
        %p451 = pneg %p154
        %p452 = pneg %p178
        %p453 = pneg %p175
        %p454 = pneg %p199
        %p455 = pneg %p196
        %p456 = pneg %p220
        %p457 = pneg %p217
        %p458 = pneg %p241
        %p459 = pneg %p238
        %p460 = pneg %p262
        %p461 = pneg %p259
        %p462 = pneg %p283
        %p463 = pneg %p280
        %p464 = pneg %p309
        %p465 = pneg %p306
        %s466 = sand.u32 %s296, 1
        %s467 = scalar_lea.sflag [#allocation4], %s466
        %s468 = sand.u32 %s296, 1
        %s469 = scalar_lea.vmem [#allocation10], %s468
        %v470 = vlaneseq
        %v471 = vand.u32 %v470, 127
        %vm472 = vcmp.lt.s32.totalorder %v471, 40
        %v473 = vsel %vm472, 1, 0
        %v474 = vcvt.s32.f32 %v473
        %v475 = vld [vmem:[%s418] sm:$0xff]
        %v476 = vld [vmem:[%s1] sm:$0xff]
        %v477 = vld [vmem:[%s1 + $0x8] sm:$0xff]
        %v478 = vld [vmem:[%s2] sm:$0x1]
        %v480 = vlaneseq
        %v481 = vshrl.u32 %v480, 7
        %v482 = vsub.s32 0, %v481
        %v483 = vrot.slane %v478, %v482
        %vm485 = vcmask 130048
        %v487 = vsel %vm485, %v475, 0
        %489 = vmatprep.subr.mxu0 0.0
        %490 = vmatpush1.msra.mxu0 %v476
        %491 = vmatprep.subr.mxu0 0.0
        %492 = vmatpush1.msra.mxu0 %v477
        %493 = vmatprep.subr.mxu0 0.0
        %494 = vmatpush1.msra.mxu0 0.0
        %495 = vmatprep.subr.mxu0 0.0
        %496 = vmatpush1.msra.mxu0 0.0
        %497 = vmatprep.subr.mxu0 0.0
        %498 = vmatpush1.msra.mxu0 0.0
        %499 = vmatprep.subr.mxu0 0.0
        %500 = vmatpush1.msra.mxu0 0.0
        %501 = vmatprep.subr.mxu0 0.0
        %502 = vmatpush1.msra.mxu0 0.0
        %503 = vmatprep.subr.mxu0 0.0
        %504 = vmatpush1.msra.mxu0 0.0
        %505 = vmatprep.subr.mxu0 0.0
        %506 = vmatpush1.msra.mxu0 0.0
        %507 = vmatprep.subr.mxu0 0.0
        %508 = vmatpush1.msra.mxu0 0.0
        %509 = vmatprep.subr.mxu0 0.0
        %510 = vmatpush1.msra.mxu0 0.0
        %511 = vmatprep.subr.mxu0 0.0
        %512 = vmatpush1.msra.mxu0 0.0
        %513 = vmatprep.subr.mxu0 0.0
        %514 = vmatpush1.msra.mxu0 0.0
        %515 = vmatprep.subr.mxu0 0.0
        %516 = vmatpush1.msra.mxu0 0.0
        %517 = vmatprep.subr.mxu0 0.0
        %518 = vmatpush1.msra.mxu0 0.0
        %519 = vmatprep.subr.mxu0 0.0
        %520 = vmatpush1.msra.mxu0 0.0
        %521 = vmatprep.subr.mxu0 0.0
        %522 = vmatpush1.msra.mxu0 0.0
        %523 = vmatprep.subr.mxu0 0.0
        %524 = vmatpush1.msra.mxu0 0.0
        %525 = vmatprep.subr.mxu0 0.0
        %526 = vmatpush1.msra.mxu0 0.0
        %527 = vmatprep.subr.mxu0 0.0
        %528 = vmatpush1.msra.mxu0 0.0
        %529 = vmatprep.subr.mxu0 0.0
        %530 = vmatpush1.msra.mxu0 0.0
        %531 = vmatprep.subr.mxu0 0.0
        %532 = vmatpush1.msra.mxu0 0.0
        %533 = vmatprep.subr.mxu0 0.0
        %534 = vmatpush1.msra.mxu0 0.0
        %535 = vmatprep.subr.mxu0 0.0
        %536 = vmatpush1.msra.mxu0 0.0
        %537 = vmatprep.subr.mxu0 0.0
        %538 = vmatpush1.msra.mxu0 0.0
        %539 = vmatprep.subr.mxu0 0.0
        %540 = vmatpush1.msra.mxu0 0.0
        %541 = vmatprep.subr.mxu0 0.0
        %542 = vmatpush1.msra.mxu0 0.0
        %543 = vmatprep.subr.mxu0 0.0
        %544 = vmatpush1.msra.mxu0 0.0
        %545 = vmatprep.subr.mxu0 0.0
        %546 = vmatpush1.msra.mxu0 0.0
        %547 = vmatprep.subr.mxu0 0.0
        %548 = vmatpush1.msra.mxu0 0.0
        %549 = vmatprep.subr.mxu0 0.0
        %550 = vmatpush1.msra.mxu0 0.0
        %551 = vmatprep.subr.mxu0 0.0
        %552 = vmatpush1.msra.mxu0 0.0
        %553 = vmatprep.mubr.f32.mxu0 0.0
        %554 = vmatmul.mubr.f32.gmra.mrb[0].mxu0 %v487
        %v555 = vpop.f32.mrb[0].mxu0
        %v556 = vadd.f32 %v483, %v555
        %v557 = vpop.f32.mrb[0].mxu0
        %558 = vdwg.mxu0
        %v559 = vld [vmem:[%s9] sm:$0x3f]
        %v560 = vlaneseq
        %v561 = vshrl.u32 %v560, 7
        %v562 = vsub.s32 0, %v561
        %v563 = vrot.slane %v559, %v562
        %v564 = vld [vmem:[%s3] sm:$0xff]
        %v565 = vld [vmem:[%s3 + $0x8] sm:$0xff]
        %v566 = vld [vmem:[%s3 + $0x10] sm:$0xff]
        %v567 = vld [vmem:[%s3 + $0x18] sm:$0xff]
        %v568 = vld [vmem:[%s3 + $0x20] sm:$0xff]
        %v569 = vld [vmem:[%s3 + $0x28] sm:$0xff]
        %v570 = vld [vmem:[%s3 + $0x30] sm:$0xff]
        %v571 = vld [vmem:[%s3 + $0x38] sm:$0xff]
        %v572 = vld [vmem:[%s3 + $0x40] sm:$0xff]
        %v573 = vld [vmem:[%s3 + $0x48] sm:$0xff]
        %v574 = vld [vmem:[%s3 + $0x50] sm:$0xff]
        %v575 = vld [vmem:[%s3 + $0x58] sm:$0xff]
        %v576 = vld [vmem:[%s3 + $0x60] sm:$0xff]
        %v577 = vld [vmem:[%s3 + $0x68] sm:$0xff]
        %v578 = vld [vmem:[%s3 + $0x70] sm:$0xff]
        %v579 = vld [vmem:[%s3 + $0x78] sm:$0xff]
        %v580 = vld [vmem:[%s4] sm:$0x1]
        %v582 = vlaneseq
        %v583 = vshrl.u32 %v582, 7
        %v584 = vsub.s32 0, %v583
        %v585 = vrot.slane %v580, %v584
        %587 = vmatprep.subr.mxu0 0.0
        %588 = vmatpush1.msra.mxu0 %v564
        %589 = vmatprep.subr.mxu0 0.0
        %590 = vmatpush1.msra.mxu0 %v565
        %591 = vmatprep.subr.mxu0 0.0
        %592 = vmatpush1.msra.mxu0 %v566
        %593 = vmatprep.subr.mxu0 0.0
        %594 = vmatpush1.msra.mxu0 %v567
        %595 = vmatprep.subr.mxu0 0.0
        %596 = vmatpush1.msra.mxu0 %v568
        %597 = vmatprep.subr.mxu0 0.0
        %598 = vmatpush1.msra.mxu0 %v569
        %599 = vmatprep.subr.mxu0 0.0
        %600 = vmatpush1.msra.mxu0 %v570
        %601 = vmatprep.subr.mxu0 0.0
        %602 = vmatpush1.msra.mxu0 %v571
        %603 = vmatprep.subr.mxu0 0.0
        %604 = vmatpush1.msra.mxu0 %v572
        %605 = vmatprep.subr.mxu0 0.0
        %606 = vmatpush1.msra.mxu0 %v573
        %607 = vmatprep.subr.mxu0 0.0
        %608 = vmatpush1.msra.mxu0 %v574
        %609 = vmatprep.subr.mxu0 0.0
        %610 = vmatpush1.msra.mxu0 %v575
        %611 = vmatprep.subr.mxu0 0.0
        %612 = vmatpush1.msra.mxu0 %v576
        %613 = vmatprep.subr.mxu0 0.0
        %614 = vmatpush1.msra.mxu0 %v577
        %615 = vmatprep.subr.mxu0 0.0
        %616 = vmatpush1.msra.mxu0 %v578
        %617 = vmatprep.subr.mxu0 0.0
        %618 = vmatpush1.msra.mxu0 %v579
        %619 = vmatprep.subr.mxu0 0.0
        %620 = vmatpush1.msra.mxu0 0.0
        %621 = vmatprep.subr.mxu0 0.0
        %622 = vmatpush1.msra.mxu0 0.0
        %623 = vmatprep.subr.mxu0 0.0
        %624 = vmatpush1.msra.mxu0 0.0
        %625 = vmatprep.subr.mxu0 0.0
        %626 = vmatpush1.msra.mxu0 0.0
        %627 = vmatprep.subr.mxu0 0.0
        %628 = vmatpush1.msra.mxu0 0.0
        %629 = vmatprep.subr.mxu0 0.0
        %630 = vmatpush1.msra.mxu0 0.0
        %631 = vmatprep.subr.mxu0 0.0
        %632 = vmatpush1.msra.mxu0 0.0
        %633 = vmatprep.subr.mxu0 0.0
        %634 = vmatpush1.msra.mxu0 0.0
        %635 = vmatprep.subr.mxu0 0.0
        %636 = vmatpush1.msra.mxu0 0.0
        %637 = vmatprep.subr.mxu0 0.0
        %638 = vmatpush1.msra.mxu0 0.0
        %639 = vmatprep.subr.mxu0 0.0
        %640 = vmatpush1.msra.mxu0 0.0
        %641 = vmatprep.subr.mxu0 0.0
        %642 = vmatpush1.msra.mxu0 0.0
        %643 = vmatprep.subr.mxu0 0.0
        %644 = vmatpush1.msra.mxu0 0.0
        %645 = vmatprep.subr.mxu0 0.0
        %646 = vmatpush1.msra.mxu0 0.0
        %647 = vmatprep.subr.mxu0 0.0
        %648 = vmatpush1.msra.mxu0 0.0
        %649 = vmatprep.subr.mxu0 0.0
        %650 = vmatpush1.msra.mxu0 0.0
        %651 = vmatprep.mubr.f32.mxu0 0.0
        %652 = vmatmul.mubr.f32.gmra.mrb[0].mxu0 %v556
        %v653 = vpop.f32.mrb[0].mxu0
        %v654 = vadd.f32 %v585, %v653
        %v655 = vpop.f32.mrb[0].mxu0
        %656 = vdwg.mxu0
        %s657 = scalar_lea.vmem %s3, 640
        %v658 = vld [vmem:[%s657] sm:$0xff]
        %v659 = vld [vmem:[%s657 + $0x8] sm:$0xff]
        %v660 = vld [vmem:[%s657 + $0x10] sm:$0xff]
        %v661 = vld [vmem:[%s657 + $0x18] sm:$0xff]
        %v662 = vld [vmem:[%s657 + $0x20] sm:$0xff]
        %v663 = vld [vmem:[%s657 + $0x28] sm:$0xff]
        %v664 = vld [vmem:[%s657 + $0x30] sm:$0xff]
        %v665 = vld [vmem:[%s657 + $0x38] sm:$0xff]
        %v666 = vld [vmem:[%s657 + $0x40] sm:$0xff]
        %v667 = vld [vmem:[%s657 + $0x48] sm:$0xff]
        %v668 = vld [vmem:[%s657 + $0x50] sm:$0xff]
        %v669 = vld [vmem:[%s657 + $0x58] sm:$0xff]
        %v670 = vld [vmem:[%s657 + $0x60] sm:$0xff]
        %v671 = vld [vmem:[%s657 + $0x68] sm:$0xff]
        %v672 = vld [vmem:[%s657 + $0x70] sm:$0xff]
        %v673 = vld [vmem:[%s657 + $0x78] sm:$0xff]
        %s674 = scalar_lea.vmem %s4, 5
        %v675 = vld [vmem:[%s674] sm:$0x1]
        %v677 = vlaneseq
        %v678 = vshrl.u32 %v677, 7
        %v679 = vsub.s32 0, %v678
        %v680 = vrot.slane %v675, %v679
        %682 = vmatprep.subr.mxu0 0.0
        %683 = vmatpush1.msra.mxu0 %v658
        %684 = vmatprep.subr.mxu0 0.0
        %685 = vmatpush1.msra.mxu0 %v659
        %686 = vmatprep.subr.mxu0 0.0
        %687 = vmatpush1.msra.mxu0 %v660
        %688 = vmatprep.subr.mxu0 0.0
        %689 = vmatpush1.msra.mxu0 %v661
        %690 = vmatprep.subr.mxu0 0.0
        %691 = vmatpush1.msra.mxu0 %v662
        %692 = vmatprep.subr.mxu0 0.0
        %693 = vmatpush1.msra.mxu0 %v663
        %694 = vmatprep.subr.mxu0 0.0
        %695 = vmatpush1.msra.mxu0 %v664
        %696 = vmatprep.subr.mxu0 0.0
        %697 = vmatpush1.msra.mxu0 %v665
        %698 = vmatprep.subr.mxu0 0.0
        %699 = vmatpush1.msra.mxu0 %v666
        %700 = vmatprep.subr.mxu0 0.0
        %701 = vmatpush1.msra.mxu0 %v667
        %702 = vmatprep.subr.mxu0 0.0
        %703 = vmatpush1.msra.mxu0 %v668
        %704 = vmatprep.subr.mxu0 0.0
        %705 = vmatpush1.msra.mxu0 %v669
        %706 = vmatprep.subr.mxu0 0.0
        %707 = vmatpush1.msra.mxu0 %v670
        %708 = vmatprep.subr.mxu0 0.0
        %709 = vmatpush1.msra.mxu0 %v671
        %710 = vmatprep.subr.mxu0 0.0
        %711 = vmatpush1.msra.mxu0 %v672
        %712 = vmatprep.subr.mxu0 0.0
        %713 = vmatpush1.msra.mxu0 %v673
        %714 = vmatprep.subr.mxu0 0.0
        %715 = vmatpush1.msra.mxu0 0.0
        %716 = vmatprep.subr.mxu0 0.0
        %717 = vmatpush1.msra.mxu0 0.0
        %718 = vmatprep.subr.mxu0 0.0
        %719 = vmatpush1.msra.mxu0 0.0
        %720 = vmatprep.subr.mxu0 0.0
        %721 = vmatpush1.msra.mxu0 0.0
        %722 = vmatprep.subr.mxu0 0.0
        %723 = vmatpush1.msra.mxu0 0.0
        %724 = vmatprep.subr.mxu0 0.0
        %725 = vmatpush1.msra.mxu0 0.0
        %726 = vmatprep.subr.mxu0 0.0
        %727 = vmatpush1.msra.mxu0 0.0
        %728 = vmatprep.subr.mxu0 0.0
        %729 = vmatpush1.msra.mxu0 0.0
        %730 = vmatprep.subr.mxu0 0.0
        %731 = vmatpush1.msra.mxu0 0.0
        %732 = vmatprep.subr.mxu0 0.0
        %733 = vmatpush1.msra.mxu0 0.0
        %734 = vmatprep.subr.mxu0 0.0
        %735 = vmatpush1.msra.mxu0 0.0
        %736 = vmatprep.subr.mxu0 0.0
        %737 = vmatpush1.msra.mxu0 0.0
        %738 = vmatprep.subr.mxu0 0.0
        %739 = vmatpush1.msra.mxu0 0.0
        %740 = vmatprep.subr.mxu0 0.0
        %741 = vmatpush1.msra.mxu0 0.0
        %742 = vmatprep.subr.mxu0 0.0
        %743 = vmatpush1.msra.mxu0 0.0
        %744 = vmatprep.subr.mxu0 0.0
        %745 = vmatpush1.msra.mxu0 0.0
        %746 = vmatprep.mubr.f32.mxu0 0.0
        %747 = vmatmul.mubr.f32.gmra.mrb[0].mxu0 %v556
        %v748 = vpop.f32.mrb[0].mxu0
        %v749 = vadd.f32 %v680, %v748
        %v750 = vpop.f32.mrb[0].mxu0
        %751 = vdwg.mxu0
        %s752 = scalar_lea.vmem %s3, 1280
        %v753 = vld [vmem:[%s752] sm:$0xff]
        %v754 = vld [vmem:[%s752 + $0x8] sm:$0xff]
        %v755 = vld [vmem:[%s752 + $0x10] sm:$0xff]
        %v756 = vld [vmem:[%s752 + $0x18] sm:$0xff]
        %v757 = vld [vmem:[%s752 + $0x20] sm:$0xff]
        %v758 = vld [vmem:[%s752 + $0x28] sm:$0xff]
        %v759 = vld [vmem:[%s752 + $0x30] sm:$0xff]
        %v760 = vld [vmem:[%s752 + $0x38] sm:$0xff]
        %v761 = vld [vmem:[%s752 + $0x40] sm:$0xff]
        %v762 = vld [vmem:[%s752 + $0x48] sm:$0xff]
        %v763 = vld [vmem:[%s752 + $0x50] sm:$0xff]
        %v764 = vld [vmem:[%s752 + $0x58] sm:$0xff]
        %v765 = vld [vmem:[%s752 + $0x60] sm:$0xff]
        %v766 = vld [vmem:[%s752 + $0x68] sm:$0xff]
        %v767 = vld [vmem:[%s752 + $0x70] sm:$0xff]
        %v768 = vld [vmem:[%s752 + $0x78] sm:$0xff]
        %s769 = scalar_lea.vmem %s4, 10
        %v770 = vld [vmem:[%s769] sm:$0x1]
        %v772 = vlaneseq
        %v773 = vshrl.u32 %v772, 7
        %v774 = vsub.s32 0, %v773
        %v775 = vrot.slane %v770, %v774
        %777 = vmatprep.subr.mxu0 0.0
        %778 = vmatpush1.msra.mxu0 %v753
        %779 = vmatprep.subr.mxu0 0.0
        %780 = vmatpush1.msra.mxu0 %v754
        %781 = vmatprep.subr.mxu0 0.0
        %782 = vmatpush1.msra.mxu0 %v755
        %783 = vmatprep.subr.mxu0 0.0
        %784 = vmatpush1.msra.mxu0 %v756
        %785 = vmatprep.subr.mxu0 0.0
        %786 = vmatpush1.msra.mxu0 %v757
        %787 = vmatprep.subr.mxu0 0.0
        %788 = vmatpush1.msra.mxu0 %v758
        %789 = vmatprep.subr.mxu0 0.0
        %790 = vmatpush1.msra.mxu0 %v759
        %791 = vmatprep.subr.mxu0 0.0
        %792 = vmatpush1.msra.mxu0 %v760
        %793 = vmatprep.subr.mxu0 0.0
        %794 = vmatpush1.msra.mxu0 %v761
        %795 = vmatprep.subr.mxu0 0.0
        %796 = vmatpush1.msra.mxu0 %v762
        %797 = vmatprep.subr.mxu0 0.0
        %798 = vmatpush1.msra.mxu0 %v763
        %799 = vmatprep.subr.mxu0 0.0
        %800 = vmatpush1.msra.mxu0 %v764
        %801 = vmatprep.subr.mxu0 0.0
        %802 = vmatpush1.msra.mxu0 %v765
        %803 = vmatprep.subr.mxu0 0.0
        %804 = vmatpush1.msra.mxu0 %v766
        %805 = vmatprep.subr.mxu0 0.0
        %806 = vmatpush1.msra.mxu0 %v767
        %807 = vmatprep.subr.mxu0 0.0
        %808 = vmatpush1.msra.mxu0 %v768
        %809 = vmatprep.subr.mxu0 0.0
        %810 = vmatpush1.msra.mxu0 0.0
        %811 = vmatprep.subr.mxu0 0.0
        %812 = vmatpush1.msra.mxu0 0.0
        %813 = vmatprep.subr.mxu0 0.0
        %814 = vmatpush1.msra.mxu0 0.0
        %815 = vmatprep.subr.mxu0 0.0
        %816 = vmatpush1.msra.mxu0 0.0
        %817 = vmatprep.subr.mxu0 0.0
        %818 = vmatpush1.msra.mxu0 0.0
        %819 = vmatprep.subr.mxu0 0.0
        %820 = vmatpush1.msra.mxu0 0.0
        %821 = vmatprep.subr.mxu0 0.0
        %822 = vmatpush1.msra.mxu0 0.0
        %823 = vmatprep.subr.mxu0 0.0
        %824 = vmatpush1.msra.mxu0 0.0
        %825 = vmatprep.subr.mxu0 0.0
        %826 = vmatpush1.msra.mxu0 0.0
        %827 = vmatprep.subr.mxu0 0.0
        %828 = vmatpush1.msra.mxu0 0.0
        %829 = vmatprep.subr.mxu0 0.0
        %830 = vmatpush1.msra.mxu0 0.0
        %831 = vmatprep.subr.mxu0 0.0
        %832 = vmatpush1.msra.mxu0 0.0
        %833 = vmatprep.subr.mxu0 0.0
        %834 = vmatpush1.msra.mxu0 0.0
        %835 = vmatprep.subr.mxu0 0.0
        %836 = vmatpush1.msra.mxu0 0.0
        %837 = vmatprep.subr.mxu0 0.0
        %838 = vmatpush1.msra.mxu0 0.0
        %839 = vmatprep.subr.mxu0 0.0
        %840 = vmatpush1.msra.mxu0 0.0
        %841 = vmatprep.mubr.f32.mxu0 0.0
        %842 = vmatmul.mubr.f32.gmra.mrb[0].mxu0 %v556
        %v843 = vpop.f32.mrb[0].mxu0
        %v844 = vadd.f32 %v775, %v843
        %v845 = vpop.f32.mrb[0].mxu0
        %846 = vdwg.mxu0
        %v847 = vmul.f32 %v654, 0.35355338
        %vm848 = vcmask 64512
        %v850 = vsel %vm848, %v847, 0
        %v853 = vsel %vm848, %v749, 0
        %855 = vmatprep.subr.mxu0 0.0
        %856 = vmatpush1.xpose.msra.mxu0 %v853
        %857 = vmatprep.subr.mxu0 0.0
        %858 = vmatpush1.xpose.msra.mxu0 0.0
        %859 = vmatprep.subr.mxu0 0.0
        %860 = vmatpush1.xpose.msra.mxu0 0.0
        %861 = vmatprep.subr.mxu0 0.0
        %862 = vmatpush1.xpose.msra.mxu0 0.0
        %863 = vmatprep.subr.mxu0 0.0
        %864 = vmatpush1.xpose.msra.mxu0 0.0
        %865 = vmatprep.subr.mxu0 0.0
        %866 = vmatpush1.xpose.msra.mxu0 0.0
        %867 = vmatprep.subr.mxu0 0.0
        %868 = vmatpush1.xpose.msra.mxu0 0.0
        %869 = vmatprep.subr.mxu0 0.0
        %870 = vmatpush1.xpose.msra.mxu0 0.0
        %871 = vmatprep.subr.mxu0 0.0
        %872 = vmatpush1.xpose.msra.mxu0 0.0
        %873 = vmatprep.subr.mxu0 0.0
        %874 = vmatpush1.xpose.msra.mxu0 0.0
        %875 = vmatprep.subr.mxu0 0.0
        %876 = vmatpush1.xpose.msra.mxu0 0.0
        %877 = vmatprep.subr.mxu0 0.0
        %878 = vmatpush1.xpose.msra.mxu0 0.0
        %879 = vmatprep.subr.mxu0 0.0
        %880 = vmatpush1.xpose.msra.mxu0 0.0
        %881 = vmatprep.subr.mxu0 0.0
        %882 = vmatpush1.xpose.msra.mxu0 0.0
        %883 = vmatprep.subr.mxu0 0.0
        %884 = vmatpush1.xpose.msra.mxu0 0.0
        %885 = vmatprep.subr.mxu0 0.0
        %886 = vmatpush1.xpose.msra.mxu0 0.0
        %887 = vmatprep.subr.mxu0 0.0
        %888 = vmatpush1.xpose.msra.mxu0 0.0
        %889 = vmatprep.subr.mxu0 0.0
        %890 = vmatpush1.xpose.msra.mxu0 0.0
        %891 = vmatprep.subr.mxu0 0.0
        %892 = vmatpush1.xpose.msra.mxu0 0.0
        %893 = vmatprep.subr.mxu0 0.0
        %894 = vmatpush1.xpose.msra.mxu0 0.0
        %895 = vmatprep.subr.mxu0 0.0
        %896 = vmatpush1.xpose.msra.mxu0 0.0
        %897 = vmatprep.subr.mxu0 0.0
        %898 = vmatpush1.xpose.msra.mxu0 0.0
        %899 = vmatprep.subr.mxu0 0.0
        %900 = vmatpush1.xpose.msra.mxu0 0.0
        %901 = vmatprep.subr.mxu0 0.0
        %902 = vmatpush1.xpose.msra.mxu0 0.0
        %903 = vmatprep.subr.mxu0 0.0
        %904 = vmatpush1.xpose.msra.mxu0 0.0
        %905 = vmatprep.subr.mxu0 0.0
        %906 = vmatpush1.xpose.msra.mxu0 0.0
        %907 = vmatprep.subr.mxu0 0.0
        %908 = vmatpush1.xpose.msra.mxu0 0.0
        %909 = vmatprep.subr.mxu0 0.0
        %910 = vmatpush1.xpose.msra.mxu0 0.0
        %911 = vmatprep.subr.mxu0 0.0
        %912 = vmatpush1.xpose.msra.mxu0 0.0
        %913 = vmatprep.subr.mxu0 0.0
        %914 = vmatpush1.xpose.msra.mxu0 0.0
        %915 = vmatprep.subr.mxu0 0.0
        %916 = vmatpush1.xpose.msra.mxu0 0.0
        %917 = vmatprep.subr.mxu0 0.0
        %918 = vmatpush1.xpose.msra.mxu0 0.0
        %919 = vmatprep.mubr.f32.mxu0 0.0
        %920 = vmatmul.mubr.f32.gmra.mrb[0].mxu0 %v850
        %v921 = vpop.f32.mrb[0].mxu0
        %v922 = vadd.f32 0.0, %v921
        %v923 = vpop.f32.mrb[0].mxu0
        %924 = vdwg.mxu0
        %v925 = vsel %vm848, %v922, -inf
        %926 = vmax.xlane.f32.xlu0 %v925
        %v927 = vpop.xlane.xlu0 %926
        %v928 = vsub.f32 %v922, %v927
        %v929 = vmul.f32 %v928, 1.442695
        %v930 = vpow.pop %v929
        %v931 = vsel %vm848, %v930, 0.0
        %932 = vadd.xlane.f32.xlu0 %v931
        %v933 = vpop.xlane.xlu0 %932
        %v934 = vrcp.pop %v933
        %v935 = vmul.f32 %v930, %v934
        %v937 = vsel %vm848, %v935, 0
        %939 = vmatprep.subr.mxu0 0.0
        %940 = vmatpush1.msra.mxu0 %v844
        %941 = vmatprep.subr.mxu0 0.0
        %942 = vmatpush1.msra.mxu0 0.0
        %943 = vmatprep.subr.mxu0 0.0
        %944 = vmatpush1.msra.mxu0 0.0
        %945 = vmatprep.subr.mxu0 0.0
        %946 = vmatpush1.msra.mxu0 0.0
        %947 = vmatprep.subr.mxu0 0.0
        %948 = vmatpush1.msra.mxu0 0.0
        %949 = vmatprep.subr.mxu0 0.0
        %950 = vmatpush1.msra.mxu0 0.0
        %951 = vmatprep.subr.mxu0 0.0
        %952 = vmatpush1.msra.mxu0 0.0
        %953 = vmatprep.subr.mxu0 0.0
        %954 = vmatpush1.msra.mxu0 0.0
        %955 = vmatprep.subr.mxu0 0.0
        %956 = vmatpush1.msra.mxu0 0.0
        %957 = vmatprep.subr.mxu0 0.0
        %958 = vmatpush1.msra.mxu0 0.0
        %959 = vmatprep.subr.mxu0 0.0
        %960 = vmatpush1.msra.mxu0 0.0
        %961 = vmatprep.subr.mxu0 0.0
        %962 = vmatpush1.msra.mxu0 0.0
        %963 = vmatprep.subr.mxu0 0.0
        %964 = vmatpush1.msra.mxu0 0.0
        %965 = vmatprep.subr.mxu0 0.0
        %966 = vmatpush1.msra.mxu0 0.0
        %967 = vmatprep.subr.mxu0 0.0
        %968 = vmatpush1.msra.mxu0 0.0
        %969 = vmatprep.subr.mxu0 0.0
        %970 = vmatpush1.msra.mxu0 0.0
        %971 = vmatprep.subr.mxu0 0.0
        %972 = vmatpush1.msra.mxu0 0.0
        %973 = vmatprep.subr.mxu0 0.0
        %974 = vmatpush1.msra.mxu0 0.0
        %975 = vmatprep.subr.mxu0 0.0
        %976 = vmatpush1.msra.mxu0 0.0
        %977 = vmatprep.subr.mxu0 0.0
        %978 = vmatpush1.msra.mxu0 0.0
        %979 = vmatprep.subr.mxu0 0.0
        %980 = vmatpush1.msra.mxu0 0.0
        %981 = vmatprep.subr.mxu0 0.0
        %982 = vmatpush1.msra.mxu0 0.0
        %983 = vmatprep.subr.mxu0 0.0
        %984 = vmatpush1.msra.mxu0 0.0
        %985 = vmatprep.subr.mxu0 0.0
        %986 = vmatpush1.msra.mxu0 0.0
        %987 = vmatprep.subr.mxu0 0.0
        %988 = vmatpush1.msra.mxu0 0.0
        %989 = vmatprep.subr.mxu0 0.0
        %990 = vmatpush1.msra.mxu0 0.0
        %991 = vmatprep.subr.mxu0 0.0
        %992 = vmatpush1.msra.mxu0 0.0
        %993 = vmatprep.subr.mxu0 0.0
        %994 = vmatpush1.msra.mxu0 0.0
        %995 = vmatprep.subr.mxu0 0.0
        %996 = vmatpush1.msra.mxu0 0.0
        %997 = vmatprep.subr.mxu0 0.0
        %998 = vmatpush1.msra.mxu0 0.0
        %999 = vmatprep.subr.mxu0 0.0
        %1000 = vmatpush1.msra.mxu0 0.0
        %1001 = vmatprep.subr.mxu0 0.0
        %1002 = vmatpush1.msra.mxu0 0.0
        %1003 = vmatprep.mubr.f32.mxu0 0.0
        %1004 = vmatmul.mubr.f32.gmra.mrb[0].mxu0 %v937
        %v1005 = vpop.f32.mrb[0].mxu0
        %v1006 = vadd.f32 0.0, %v1005
        %v1007 = vpop.f32.mrb[0].mxu0
        %1008 = vdwg.mxu0
        %v1009 = vld [vmem:[%s5] sm:$0xff]
        %v1011 = vsel %vm848, %v1006, 0
        %1013 = vmatprep.subr.mxu0 0.0
        %1014 = vmatpush1.msra.mxu0 %v1009
        %1015 = vmatprep.subr.mxu0 0.0
        %1016 = vmatpush1.msra.mxu0 0.0
        %1017 = vmatprep.subr.mxu0 0.0
        %1018 = vmatpush1.msra.mxu0 0.0
        %1019 = vmatprep.subr.mxu0 0.0
        %1020 = vmatpush1.msra.mxu0 0.0
        %1021 = vmatprep.subr.mxu0 0.0
        %1022 = vmatpush1.msra.mxu0 0.0
        %1023 = vmatprep.subr.mxu0 0.0
        %1024 = vmatpush1.msra.mxu0 0.0
        %1025 = vmatprep.subr.mxu0 0.0
        %1026 = vmatpush1.msra.mxu0 0.0
        %1027 = vmatprep.subr.mxu0 0.0
        %1028 = vmatpush1.msra.mxu0 0.0
        %1029 = vmatprep.subr.mxu0 0.0
        %1030 = vmatpush1.msra.mxu0 0.0
        %1031 = vmatprep.subr.mxu0 0.0
        %1032 = vmatpush1.msra.mxu0 0.0
        %1033 = vmatprep.subr.mxu0 0.0
        %1034 = vmatpush1.msra.mxu0 0.0
        %1035 = vmatprep.subr.mxu0 0.0
        %1036 = vmatpush1.msra.mxu0 0.0
        %1037 = vmatprep.subr.mxu0 0.0
        %1038 = vmatpush1.msra.mxu0 0.0
        %1039 = vmatprep.subr.mxu0 0.0
        %1040 = vmatpush1.msra.mxu0 0.0
        %1041 = vmatprep.subr.mxu0 0.0
        %1042 = vmatpush1.msra.mxu0 0.0
        %1043 = vmatprep.subr.mxu0 0.0
        %1044 = vmatpush1.msra.mxu0 0.0
        %1045 = vmatprep.subr.mxu0 0.0
        %1046 = vmatpush1.msra.mxu0 0.0
        %1047 = vmatprep.subr.mxu0 0.0
        %1048 = vmatpush1.msra.mxu0 0.0
        %1049 = vmatprep.subr.mxu0 0.0
        %1050 = vmatpush1.msra.mxu0 0.0
        %1051 = vmatprep.subr.mxu0 0.0
        %1052 = vmatpush1.msra.mxu0 0.0
        %1053 = vmatprep.subr.mxu0 0.0
        %1054 = vmatpush1.msra.mxu0 0.0
        %1055 = vmatprep.subr.mxu0 0.0
        %1056 = vmatpush1.msra.mxu0 0.0
        %1057 = vmatprep.subr.mxu0 0.0
        %1058 = vmatpush1.msra.mxu0 0.0
        %1059 = vmatprep.subr.mxu0 0.0
        %1060 = vmatpush1.msra.mxu0 0.0
        %1061 = vmatprep.subr.mxu0 0.0
        %1062 = vmatpush1.msra.mxu0 0.0
        %1063 = vmatprep.subr.mxu0 0.0
        %1064 = vmatpush1.msra.mxu0 0.0
        %1065 = vmatprep.subr.mxu0 0.0
        %1066 = vmatpush1.msra.mxu0 0.0
        %1067 = vmatprep.subr.mxu0 0.0
        %1068 = vmatpush1.msra.mxu0 0.0
        %1069 = vmatprep.subr.mxu0 0.0
        %1070 = vmatpush1.msra.mxu0 0.0
        %1071 = vmatprep.subr.mxu0 0.0
        %1072 = vmatpush1.msra.mxu0 0.0
        %1073 = vmatprep.subr.mxu0 0.0
        %1074 = vmatpush1.msra.mxu0 0.0
        %1075 = vmatprep.subr.mxu0 0.0
        %1076 = vmatpush1.msra.mxu0 0.0
        %1077 = vmatprep.mubr.f32.mxu0 0.0
        %1078 = vmatmul.mubr.f32.gmra.mrb[0].mxu0 %v1011
        %v1079 = vpop.f32.mrb[0].mxu0
        %v1080 = vadd.f32 0.0, %v1079
        %v1081 = vpop.f32.mrb[0].mxu0
        %1082 = vdwg.mxu0
        %v1083 = vadd.f32 %v563, %v1080
        %s1084 = scalar_lea.vmem %s3, 128
        %v1085 = vld [vmem:[%s1084] sm:$0xff]
        %v1086 = vld [vmem:[%s1084 + $0x8] sm:$0xff]
        %v1087 = vld [vmem:[%s1084 + $0x10] sm:$0xff]
        %v1088 = vld [vmem:[%s1084 + $0x18] sm:$0xff]
        %v1089 = vld [vmem:[%s1084 + $0x20] sm:$0xff]
        %v1090 = vld [vmem:[%s1084 + $0x28] sm:$0xff]
        %v1091 = vld [vmem:[%s1084 + $0x30] sm:$0xff]
        %v1092 = vld [vmem:[%s1084 + $0x38] sm:$0xff]
        %v1093 = vld [vmem:[%s1084 + $0x40] sm:$0xff]
        %v1094 = vld [vmem:[%s1084 + $0x48] sm:$0xff]
        %v1095 = vld [vmem:[%s1084 + $0x50] sm:$0xff]
        %v1096 = vld [vmem:[%s1084 + $0x58] sm:$0xff]
        %v1097 = vld [vmem:[%s1084 + $0x60] sm:$0xff]
        %v1098 = vld [vmem:[%s1084 + $0x68] sm:$0xff]
        %v1099 = vld [vmem:[%s1084 + $0x70] sm:$0xff]
        %v1100 = vld [vmem:[%s1084 + $0x78] sm:$0xff]
        %s1101 = scalar_lea.vmem %s4, 1
        %v1102 = vld [vmem:[%s1101] sm:$0x1]
        %v1104 = vlaneseq
        %v1105 = vshrl.u32 %v1104, 7
        %v1106 = vsub.s32 0, %v1105
        %v1107 = vrot.slane %v1102, %v1106
        %1109 = vmatprep.subr.mxu0 0.0
        %1110 = vmatpush1.msra.mxu0 %v1085
        %1111 = vmatprep.subr.mxu0 0.0
        %1112 = vmatpush1.msra.mxu0 %v1086
        %1113 = vmatprep.subr.mxu0 0.0
        %1114 = vmatpush1.msra.mxu0 %v1087
        %1115 = vmatprep.subr.mxu0 0.0
        %1116 = vmatpush1.msra.mxu0 %v1088
        %1117 = vmatprep.subr.mxu0 0.0
        %1118 = vmatpush1.msra.mxu0 %v1089
        %1119 = vmatprep.subr.mxu0 0.0
        %1120 = vmatpush1.msra.mxu0 %v1090
        %1121 = vmatprep.subr.mxu0 0.0
        %1122 = vmatpush1.msra.mxu0 %v1091
        %1123 = vmatprep.subr.mxu0 0.0
        %1124 = vmatpush1.msra.mxu0 %v1092
        %1125 = vmatprep.subr.mxu0 0.0
        %1126 = vmatpush1.msra.mxu0 %v1093
        %1127 = vmatprep.subr.mxu0 0.0
        %1128 = vmatpush1.msra.mxu0 %v1094
        %1129 = vmatprep.subr.mxu0 0.0
        %1130 = vmatpush1.msra.mxu0 %v1095
        %1131 = vmatprep.subr.mxu0 0.0
        %1132 = vmatpush1.msra.mxu0 %v1096
        %1133 = vmatprep.subr.mxu0 0.0
        %1134 = vmatpush1.msra.mxu0 %v1097
        %1135 = vmatprep.subr.mxu0 0.0
        %1136 = vmatpush1.msra.mxu0 %v1098
        %1137 = vmatprep.subr.mxu0 0.0
        %1138 = vmatpush1.msra.mxu0 %v1099
        %1139 = vmatprep.subr.mxu0 0.0
        %1140 = vmatpush1.msra.mxu0 %v1100
        %1141 = vmatprep.subr.mxu0 0.0
        %1142 = vmatpush1.msra.mxu0 0.0
        %1143 = vmatprep.subr.mxu0 0.0
        %1144 = vmatpush1.msra.mxu0 0.0
        %1145 = vmatprep.subr.mxu0 0.0
        %1146 = vmatpush1.msra.mxu0 0.0
        %1147 = vmatprep.subr.mxu0 0.0
        %1148 = vmatpush1.msra.mxu0 0.0
        %1149 = vmatprep.subr.mxu0 0.0
        %1150 = vmatpush1.msra.mxu0 0.0
        %1151 = vmatprep.subr.mxu0 0.0
        %1152 = vmatpush1.msra.mxu0 0.0
        %1153 = vmatprep.subr.mxu0 0.0
        %1154 = vmatpush1.msra.mxu0 0.0
        %1155 = vmatprep.subr.mxu0 0.0
        %1156 = vmatpush1.msra.mxu0 0.0
        %1157 = vmatprep.subr.mxu0 0.0
        %1158 = vmatpush1.msra.mxu0 0.0
        %1159 = vmatprep.subr.mxu0 0.0
        %1160 = vmatpush1.msra.mxu0 0.0
        %1161 = vmatprep.subr.mxu0 0.0
        %1162 = vmatpush1.msra.mxu0 0.0
        %1163 = vmatprep.subr.mxu0 0.0
        %1164 = vmatpush1.msra.mxu0 0.0
        %1165 = vmatprep.subr.mxu0 0.0
        %1166 = vmatpush1.msra.mxu0 0.0
        %1167 = vmatprep.subr.mxu0 0.0
        %1168 = vmatpush1.msra.mxu0 0.0
        %1169 = vmatprep.subr.mxu0 0.0
        %1170 = vmatpush1.msra.mxu0 0.0
        %1171 = vmatprep.subr.mxu0 0.0
        %1172 = vmatpush1.msra.mxu0 0.0
        %1173 = vmatprep.mubr.f32.mxu0 0.0
        %1174 = vmatmul.mubr.f32.gmra.mrb[0].mxu0 %v556
        %v1175 = vpop.f32.mrb[0].mxu0
        %v1176 = vadd.f32 %v1107, %v1175
        %v1177 = vpop.f32.mrb[0].mxu0
        %1178 = vdwg.mxu0
        %s1179 = scalar_lea.vmem %s3, 768
        %v1180 = vld [vmem:[%s1179] sm:$0xff]
        %v1181 = vld [vmem:[%s1179 + $0x8] sm:$0xff]
        %v1182 = vld [vmem:[%s1179 + $0x10] sm:$0xff]
        %v1183 = vld [vmem:[%s1179 + $0x18] sm:$0xff]
        %v1184 = vld [vmem:[%s1179 + $0x20] sm:$0xff]
        %v1185 = vld [vmem:[%s1179 + $0x28] sm:$0xff]
        %v1186 = vld [vmem:[%s1179 + $0x30] sm:$0xff]
        %v1187 = vld [vmem:[%s1179 + $0x38] sm:$0xff]
        %v1188 = vld [vmem:[%s1179 + $0x40] sm:$0xff]
        %v1189 = vld [vmem:[%s1179 + $0x48] sm:$0xff]
        %v1190 = vld [vmem:[%s1179 + $0x50] sm:$0xff]
        %v1191 = vld [vmem:[%s1179 + $0x58] sm:$0xff]
        %v1192 = vld [vmem:[%s1179 + $0x60] sm:$0xff]
        %v1193 = vld [vmem:[%s1179 + $0x68] sm:$0xff]
        %v1194 = vld [vmem:[%s1179 + $0x70] sm:$0xff]
        %v1195 = vld [vmem:[%s1179 + $0x78] sm:$0xff]
        %s1196 = scalar_lea.vmem %s4, 6
        %v1197 = vld [vmem:[%s1196] sm:$0x1]
        %v1199 = vlaneseq
        %v1200 = vshrl.u32 %v1199, 7
        %v1201 = vsub.s32 0, %v1200
        %v1202 = vrot.slane %v1197, %v1201
        %1204 = vmatprep.subr.mxu0 0.0
        %1205 = vmatpush1.msra.mxu0 %v1180
        %1206 = vmatprep.subr.mxu0 0.0
        %1207 = vmatpush1.msra.mxu0 %v1181
        %1208 = vmatprep.subr.mxu0 0.0
        %1209 = vmatpush1.msra.mxu0 %v1182
        %1210 = vmatprep.subr.mxu0 0.0
        %1211 = vmatpush1.msra.mxu0 %v1183
        %1212 = vmatprep.subr.mxu0 0.0
        %1213 = vmatpush1.msra.mxu0 %v1184
        %1214 = vmatprep.subr.mxu0 0.0
        %1215 = vmatpush1.msra.mxu0 %v1185
        %1216 = vmatprep.subr.mxu0 0.0
        %1217 = vmatpush1.msra.mxu0 %v1186
        %1218 = vmatprep.subr.mxu0 0.0
        %1219 = vmatpush1.msra.mxu0 %v1187
        %1220 = vmatprep.subr.mxu0 0.0
        %1221 = vmatpush1.msra.mxu0 %v1188
        %1222 = vmatprep.subr.mxu0 0.0
        %1223 = vmatpush1.msra.mxu0 %v1189
        %1224 = vmatprep.subr.mxu0 0.0
        %1225 = vmatpush1.msra.mxu0 %v1190
        %1226 = vmatprep.subr.mxu0 0.0
        %1227 = vmatpush1.msra.mxu0 %v1191
        %1228 = vmatprep.subr.mxu0 0.0
        %1229 = vmatpush1.msra.mxu0 %v1192
        %1230 = vmatprep.subr.mxu0 0.0
        %1231 = vmatpush1.msra.mxu0 %v1193
        %1232 = vmatprep.subr.mxu0 0.0
        %1233 = vmatpush1.msra.mxu0 %v1194
        %1234 = vmatprep.subr.mxu0 0.0
        %1235 = vmatpush1.msra.mxu0 %v1195
        %1236 = vmatprep.subr.mxu0 0.0
        %1237 = vmatpush1.msra.mxu0 0.0
        %1238 = vmatprep.subr.mxu0 0.0
        %1239 = vmatpush1.msra.mxu0 0.0
        %1240 = vmatprep.subr.mxu0 0.0
        %1241 = vmatpush1.msra.mxu0 0.0
        %1242 = vmatprep.subr.mxu0 0.0
        %1243 = vmatpush1.msra.mxu0 0.0
        %1244 = vmatprep.subr.mxu0 0.0
        %1245 = vmatpush1.msra.mxu0 0.0
        %1246 = vmatprep.subr.mxu0 0.0
        %1247 = vmatpush1.msra.mxu0 0.0
        %1248 = vmatprep.subr.mxu0 0.0
        %1249 = vmatpush1.msra.mxu0 0.0
        %1250 = vmatprep.subr.mxu0 0.0
        %1251 = vmatpush1.msra.mxu0 0.0
        %1252 = vmatprep.subr.mxu0 0.0
        %1253 = vmatpush1.msra.mxu0 0.0
        %1254 = vmatprep.subr.mxu0 0.0
        %1255 = vmatpush1.msra.mxu0 0.0
        %1256 = vmatprep.subr.mxu0 0.0
        %1257 = vmatpush1.msra.mxu0 0.0
        %1258 = vmatprep.subr.mxu0 0.0
        %1259 = vmatpush1.msra.mxu0 0.0
        %1260 = vmatprep.subr.mxu0 0.0
        %1261 = vmatpush1.msra.mxu0 0.0
        %1262 = vmatprep.subr.mxu0 0.0
        %1263 = vmatpush1.msra.mxu0 0.0
        %1264 = vmatprep.subr.mxu0 0.0
        %1265 = vmatpush1.msra.mxu0 0.0
        %1266 = vmatprep.subr.mxu0 0.0
        %1267 = vmatpush1.msra.mxu0 0.0
        %1268 = vmatprep.mubr.f32.mxu0 0.0
        %1269 = vmatmul.mubr.f32.gmra.mrb[0].mxu0 %v556
        %v1270 = vpop.f32.mrb[0].mxu0
        %v1271 = vadd.f32 %v1202, %v1270
        %v1272 = vpop.f32.mrb[0].mxu0
        %1273 = vdwg.mxu0
        %s1274 = scalar_lea.vmem %s3, 1408
        %v1275 = vld [vmem:[%s1274] sm:$0xff]
        %v1276 = vld [vmem:[%s1274 + $0x8] sm:$0xff]
        %v1277 = vld [vmem:[%s1274 + $0x10] sm:$0xff]
        %v1278 = vld [vmem:[%s1274 + $0x18] sm:$0xff]
        %v1279 = vld [vmem:[%s1274 + $0x20] sm:$0xff]
        %v1280 = vld [vmem:[%s1274 + $0x28] sm:$0xff]
        %v1281 = vld [vmem:[%s1274 + $0x30] sm:$0xff]
        %v1282 = vld [vmem:[%s1274 + $0x38] sm:$0xff]
        %v1283 = vld [vmem:[%s1274 + $0x40] sm:$0xff]
        %v1284 = vld [vmem:[%s1274 + $0x48] sm:$0xff]
        %v1285 = vld [vmem:[%s1274 + $0x50] sm:$0xff]
        %v1286 = vld [vmem:[%s1274 + $0x58] sm:$0xff]
        %v1287 = vld [vmem:[%s1274 + $0x60] sm:$0xff]
        %v1288 = vld [vmem:[%s1274 + $0x68] sm:$0xff]
        %v1289 = vld [vmem:[%s1274 + $0x70] sm:$0xff]
        %v1290 = vld [vmem:[%s1274 + $0x78] sm:$0xff]
        %s1291 = scalar_lea.vmem %s4, 11
        %v1292 = vld [vmem:[%s1291] sm:$0x1]
        %v1294 = vlaneseq
        %v1295 = vshrl.u32 %v1294, 7
        %v1296 = vsub.s32 0, %v1295
        %v1297 = vrot.slane %v1292, %v1296
        %1299 = vmatprep.subr.mxu0 0.0
        %1300 = vmatpush1.msra.mxu0 %v1275
        %1301 = vmatprep.subr.mxu0 0.0
        %1302 = vmatpush1.msra.mxu0 %v1276
        %1303 = vmatprep.subr.mxu0 0.0
        %1304 = vmatpush1.msra.mxu0 %v1277
        %1305 = vmatprep.subr.mxu0 0.0
        %1306 = vmatpush1.msra.mxu0 %v1278
        %1307 = vmatprep.subr.mxu0 0.0
        %1308 = vmatpush1.msra.mxu0 %v1279
        %1309 = vmatprep.subr.mxu0 0.0
        %1310 = vmatpush1.msra.mxu0 %v1280
        %1311 = vmatprep.subr.mxu0 0.0
        %1312 = vmatpush1.msra.mxu0 %v1281
        %1313 = vmatprep.subr.mxu0 0.0
        %1314 = vmatpush1.msra.mxu0 %v1282
        %1315 = vmatprep.subr.mxu0 0.0
        %1316 = vmatpush1.msra.mxu0 %v1283
        %1317 = vmatprep.subr.mxu0 0.0
        %1318 = vmatpush1.msra.mxu0 %v1284
        %1319 = vmatprep.subr.mxu0 0.0
        %1320 = vmatpush1.msra.mxu0 %v1285
        %1321 = vmatprep.subr.mxu0 0.0
        %1322 = vmatpush1.msra.mxu0 %v1286
        %1323 = vmatprep.subr.mxu0 0.0
        %1324 = vmatpush1.msra.mxu0 %v1287
        %1325 = vmatprep.subr.mxu0 0.0
        %1326 = vmatpush1.msra.mxu0 %v1288
        %1327 = vmatprep.subr.mxu0 0.0
        %1328 = vmatpush1.msra.mxu0 %v1289
        %1329 = vmatprep.subr.mxu0 0.0
        %1330 = vmatpush1.msra.mxu0 %v1290
        %1331 = vmatprep.subr.mxu0 0.0
        %1332 = vmatpush1.msra.mxu0 0.0
        %1333 = vmatprep.subr.mxu0 0.0
        %1334 = vmatpush1.msra.mxu0 0.0
        %1335 = vmatprep.subr.mxu0 0.0
        %1336 = vmatpush1.msra.mxu0 0.0
        %1337 = vmatprep.subr.mxu0 0.0
        %1338 = vmatpush1.msra.mxu0 0.0
        %1339 = vmatprep.subr.mxu0 0.0
        %1340 = vmatpush1.msra.mxu0 0.0
        %1341 = vmatprep.subr.mxu0 0.0
        %1342 = vmatpush1.msra.mxu0 0.0
        %1343 = vmatprep.subr.mxu0 0.0
        %1344 = vmatpush1.msra.mxu0 0.0
        %1345 = vmatprep.subr.mxu0 0.0
        %1346 = vmatpush1.msra.mxu0 0.0
        %1347 = vmatprep.subr.mxu0 0.0
        %1348 = vmatpush1.msra.mxu0 0.0
        %1349 = vmatprep.subr.mxu0 0.0
        %1350 = vmatpush1.msra.mxu0 0.0
        %1351 = vmatprep.subr.mxu0 0.0
        %1352 = vmatpush1.msra.mxu0 0.0
        %1353 = vmatprep.subr.mxu0 0.0
        %1354 = vmatpush1.msra.mxu0 0.0
        %1355 = vmatprep.subr.mxu0 0.0
        %1356 = vmatpush1.msra.mxu0 0.0
        %1357 = vmatprep.subr.mxu0 0.0
        %1358 = vmatpush1.msra.mxu0 0.0
        %1359 = vmatprep.subr.mxu0 0.0
        %1360 = vmatpush1.msra.mxu0 0.0
        %1361 = vmatprep.subr.mxu0 0.0
        %1362 = vmatpush1.msra.mxu0 0.0
        %1363 = vmatprep.mubr.f32.mxu0 0.0
        %1364 = vmatmul.mubr.f32.gmra.mrb[0].mxu0 %v556
        %v1365 = vpop.f32.mrb[0].mxu0
        %v1366 = vadd.f32 %v1297, %v1365
        %v1367 = vpop.f32.mrb[0].mxu0
        %1368 = vdwg.mxu0
        %v1369 = vmul.f32 %v1176, 0.35355338
        %v1371 = vsel %vm848, %v1369, 0
        %v1374 = vsel %vm848, %v1271, 0
        %1376 = vmatprep.subr.mxu0 0.0
        %1377 = vmatpush1.xpose.msra.mxu0 %v1374
        %1378 = vmatprep.subr.mxu0 0.0
        %1379 = vmatpush1.xpose.msra.mxu0 0.0
        %1380 = vmatprep.subr.mxu0 0.0
        %1381 = vmatpush1.xpose.msra.mxu0 0.0
        %1382 = vmatprep.subr.mxu0 0.0
        %1383 = vmatpush1.xpose.msra.mxu0 0.0
        %1384 = vmatprep.subr.mxu0 0.0
        %1385 = vmatpush1.xpose.msra.mxu0 0.0
        %1386 = vmatprep.subr.mxu0 0.0
        %1387 = vmatpush1.xpose.msra.mxu0 0.0
        %1388 = vmatprep.subr.mxu0 0.0
        %1389 = vmatpush1.xpose.msra.mxu0 0.0
        %1390 = vmatprep.subr.mxu0 0.0
        %1391 = vmatpush1.xpose.msra.mxu0 0.0
        %1392 = vmatprep.subr.mxu0 0.0
        %1393 = vmatpush1.xpose.msra.mxu0 0.0
        %1394 = vmatprep.subr.mxu0 0.0
        %1395 = vmatpush1.xpose.msra.mxu0 0.0
        %1396 = vmatprep.subr.mxu0 0.0
        %1397 = vmatpush1.xpose.msra.mxu0 0.0
        %1398 = vmatprep.subr.mxu0 0.0
        %1399 = vmatpush1.xpose.msra.mxu0 0.0
        %1400 = vmatprep.subr.mxu0 0.0
        %1401 = vmatpush1.xpose.msra.mxu0 0.0
        %1402 = vmatprep.subr.mxu0 0.0
        %1403 = vmatpush1.xpose.msra.mxu0 0.0
        %1404 = vmatprep.subr.mxu0 0.0
        %1405 = vmatpush1.xpose.msra.mxu0 0.0
        %1406 = vmatprep.subr.mxu0 0.0
        %1407 = vmatpush1.xpose.msra.mxu0 0.0
        %1408 = vmatprep.subr.mxu0 0.0
        %1409 = vmatpush1.xpose.msra.mxu0 0.0
        %1410 = vmatprep.subr.mxu0 0.0
        %1411 = vmatpush1.xpose.msra.mxu0 0.0
        %1412 = vmatprep.subr.mxu0 0.0
        %1413 = vmatpush1.xpose.msra.mxu0 0.0
        %1414 = vmatprep.subr.mxu0 0.0
        %1415 = vmatpush1.xpose.msra.mxu0 0.0
        %1416 = vmatprep.subr.mxu0 0.0
        %1417 = vmatpush1.xpose.msra.mxu0 0.0
        %1418 = vmatprep.subr.mxu0 0.0
        %1419 = vmatpush1.xpose.msra.mxu0 0.0
        %1420 = vmatprep.subr.mxu0 0.0
        %1421 = vmatpush1.xpose.msra.mxu0 0.0
        %1422 = vmatprep.subr.mxu0 0.0
        %1423 = vmatpush1.xpose.msra.mxu0 0.0
        %1424 = vmatprep.subr.mxu0 0.0
        %1425 = vmatpush1.xpose.msra.mxu0 0.0
        %1426 = vmatprep.subr.mxu0 0.0
        %1427 = vmatpush1.xpose.msra.mxu0 0.0
        %1428 = vmatprep.subr.mxu0 0.0
        %1429 = vmatpush1.xpose.msra.mxu0 0.0
        %1430 = vmatprep.subr.mxu0 0.0
        %1431 = vmatpush1.xpose.msra.mxu0 0.0
        %1432 = vmatprep.subr.mxu0 0.0
        %1433 = vmatpush1.xpose.msra.mxu0 0.0
        %1434 = vmatprep.subr.mxu0 0.0
        %1435 = vmatpush1.xpose.msra.mxu0 0.0
        %1436 = vmatprep.subr.mxu0 0.0
        %1437 = vmatpush1.xpose.msra.mxu0 0.0
        %1438 = vmatprep.subr.mxu0 0.0
        %1439 = vmatpush1.xpose.msra.mxu0 0.0
        %1440 = vmatprep.mubr.f32.mxu0 0.0
        %1441 = vmatmul.mubr.f32.gmra.mrb[0].mxu0 %v1371
        %v1442 = vpop.f32.mrb[0].mxu0
        %v1443 = vadd.f32 0.0, %v1442
        %v1444 = vpop.f32.mrb[0].mxu0
        %1445 = vdwg.mxu0
        %v1446 = vsel %vm848, %v1443, -inf
        %1447 = vmax.xlane.f32.xlu0 %v1446
        %v1448 = vpop.xlane.xlu0 %1447
        %v1449 = vsub.f32 %v1443, %v1448
        %v1450 = vmul.f32 %v1449, 1.442695
        %v1451 = vpow.pop %v1450
        %v1452 = vsel %vm848, %v1451, 0.0
        %1453 = vadd.xlane.f32.xlu0 %v1452
        %v1454 = vpop.xlane.xlu0 %1453
        %v1455 = vrcp.pop %v1454
        %v1456 = vmul.f32 %v1451, %v1455
        %v1458 = vsel %vm848, %v1456, 0
        %1460 = vmatprep.subr.mxu0 0.0
        %1461 = vmatpush1.msra.mxu0 %v1366
        %1462 = vmatprep.subr.mxu0 0.0
        %1463 = vmatpush1.msra.mxu0 0.0
        %1464 = vmatprep.subr.mxu0 0.0
        %1465 = vmatpush1.msra.mxu0 0.0
        %1466 = vmatprep.subr.mxu0 0.0
        %1467 = vmatpush1.msra.mxu0 0.0
        %1468 = vmatprep.subr.mxu0 0.0
        %1469 = vmatpush1.msra.mxu0 0.0
        %1470 = vmatprep.subr.mxu0 0.0
        %1471 = vmatpush1.msra.mxu0 0.0
        %1472 = vmatprep.subr.mxu0 0.0
        %1473 = vmatpush1.msra.mxu0 0.0
        %1474 = vmatprep.subr.mxu0 0.0
        %1475 = vmatpush1.msra.mxu0 0.0
        %1476 = vmatprep.subr.mxu0 0.0
        %1477 = vmatpush1.msra.mxu0 0.0
        %1478 = vmatprep.subr.mxu0 0.0
        %1479 = vmatpush1.msra.mxu0 0.0
        %1480 = vmatprep.subr.mxu0 0.0
        %1481 = vmatpush1.msra.mxu0 0.0
        %1482 = vmatprep.subr.mxu0 0.0
        %1483 = vmatpush1.msra.mxu0 0.0
        %1484 = vmatprep.subr.mxu0 0.0
        %1485 = vmatpush1.msra.mxu0 0.0
        %1486 = vmatprep.subr.mxu0 0.0
        %1487 = vmatpush1.msra.mxu0 0.0
        %1488 = vmatprep.subr.mxu0 0.0
        %1489 = vmatpush1.msra.mxu0 0.0
        %1490 = vmatprep.subr.mxu0 0.0
        %1491 = vmatpush1.msra.mxu0 0.0
        %1492 = vmatprep.subr.mxu0 0.0
        %1493 = vmatpush1.msra.mxu0 0.0
        %1494 = vmatprep.subr.mxu0 0.0
        %1495 = vmatpush1.msra.mxu0 0.0
        %1496 = vmatprep.subr.mxu0 0.0
        %1497 = vmatpush1.msra.mxu0 0.0
        %1498 = vmatprep.subr.mxu0 0.0
        %1499 = vmatpush1.msra.mxu0 0.0
        %1500 = vmatprep.subr.mxu0 0.0
        %1501 = vmatpush1.msra.mxu0 0.0
        %1502 = vmatprep.subr.mxu0 0.0
        %1503 = vmatpush1.msra.mxu0 0.0
        %1504 = vmatprep.subr.mxu0 0.0
        %1505 = vmatpush1.msra.mxu0 0.0
        %1506 = vmatprep.subr.mxu0 0.0
        %1507 = vmatpush1.msra.mxu0 0.0
        %1508 = vmatprep.subr.mxu0 0.0
        %1509 = vmatpush1.msra.mxu0 0.0
        %1510 = vmatprep.subr.mxu0 0.0
        %1511 = vmatpush1.msra.mxu0 0.0
        %1512 = vmatprep.subr.mxu0 0.0
        %1513 = vmatpush1.msra.mxu0 0.0
        %1514 = vmatprep.subr.mxu0 0.0
        %1515 = vmatpush1.msra.mxu0 0.0
        %1516 = vmatprep.subr.mxu0 0.0
        %1517 = vmatpush1.msra.mxu0 0.0
        %1518 = vmatprep.subr.mxu0 0.0
        %1519 = vmatpush1.msra.mxu0 0.0
        %1520 = vmatprep.subr.mxu0 0.0
        %1521 = vmatpush1.msra.mxu0 0.0
        %1522 = vmatprep.subr.mxu0 0.0
        %1523 = vmatpush1.msra.mxu0 0.0
        %1524 = vmatprep.mubr.f32.mxu0 0.0
        %1525 = vmatmul.mubr.f32.gmra.mrb[0].mxu0 %v1458
        %v1526 = vpop.f32.mrb[0].mxu0
        %v1527 = vadd.f32 0.0, %v1526
        %v1528 = vpop.f32.mrb[0].mxu0
        %1529 = vdwg.mxu0
        %s1530 = scalar_lea.vmem %s5, 8
        %v1531 = vld [vmem:[%s1530] sm:$0xff]
        %v1533 = vsel %vm848, %v1527, 0
        %1535 = vmatprep.subr.mxu0 0.0
        %1536 = vmatpush1.msra.mxu0 %v1531
        %1537 = vmatprep.subr.mxu0 0.0
        %1538 = vmatpush1.msra.mxu0 0.0
        %1539 = vmatprep.subr.mxu0 0.0
        %1540 = vmatpush1.msra.mxu0 0.0
        %1541 = vmatprep.subr.mxu0 0.0
        %1542 = vmatpush1.msra.mxu0 0.0
        %1543 = vmatprep.subr.mxu0 0.0
        %1544 = vmatpush1.msra.mxu0 0.0
        %1545 = vmatprep.subr.mxu0 0.0
        %1546 = vmatpush1.msra.mxu0 0.0
        %1547 = vmatprep.subr.mxu0 0.0
        %1548 = vmatpush1.msra.mxu0 0.0
        %1549 = vmatprep.subr.mxu0 0.0
        %1550 = vmatpush1.msra.mxu0 0.0
        %1551 = vmatprep.subr.mxu0 0.0
        %1552 = vmatpush1.msra.mxu0 0.0
        %1553 = vmatprep.subr.mxu0 0.0
        %1554 = vmatpush1.msra.mxu0 0.0
        %1555 = vmatprep.subr.mxu0 0.0
        %1556 = vmatpush1.msra.mxu0 0.0
        %1557 = vmatprep.subr.mxu0 0.0
        %1558 = vmatpush1.msra.mxu0 0.0
        %1559 = vmatprep.subr.mxu0 0.0
        %1560 = vmatpush1.msra.mxu0 0.0
        %1561 = vmatprep.subr.mxu0 0.0
        %1562 = vmatpush1.msra.mxu0 0.0
        %1563 = vmatprep.subr.mxu0 0.0
        %1564 = vmatpush1.msra.mxu0 0.0
        %1565 = vmatprep.subr.mxu0 0.0
        %1566 = vmatpush1.msra.mxu0 0.0
        %1567 = vmatprep.subr.mxu0 0.0
        %1568 = vmatpush1.msra.mxu0 0.0
        %1569 = vmatprep.subr.mxu0 0.0
        %1570 = vmatpush1.msra.mxu0 0.0
        %1571 = vmatprep.subr.mxu0 0.0
        %1572 = vmatpush1.msra.mxu0 0.0
        %1573 = vmatprep.subr.mxu0 0.0
        %1574 = vmatpush1.msra.mxu0 0.0
        %1575 = vmatprep.subr.mxu0 0.0
        %1576 = vmatpush1.msra.mxu0 0.0
        %1577 = vmatprep.subr.mxu0 0.0
        %1578 = vmatpush1.msra.mxu0 0.0
        %1579 = vmatprep.subr.mxu0 0.0
        %1580 = vmatpush1.msra.mxu0 0.0
        %1581 = vmatprep.subr.mxu0 0.0
        %1582 = vmatpush1.msra.mxu0 0.0
        %1583 = vmatprep.subr.mxu0 0.0
        %1584 = vmatpush1.msra.mxu0 0.0
        %1585 = vmatprep.subr.mxu0 0.0
        %1586 = vmatpush1.msra.mxu0 0.0
        %1587 = vmatprep.subr.mxu0 0.0
        %1588 = vmatpush1.msra.mxu0 0.0
        %1589 = vmatprep.subr.mxu0 0.0
        %1590 = vmatpush1.msra.mxu0 0.0
        %1591 = vmatprep.subr.mxu0 0.0
        %1592 = vmatpush1.msra.mxu0 0.0
        %1593 = vmatprep.subr.mxu0 0.0
        %1594 = vmatpush1.msra.mxu0 0.0
        %1595 = vmatprep.subr.mxu0 0.0
        %1596 = vmatpush1.msra.mxu0 0.0
        %1597 = vmatprep.subr.mxu0 0.0
        %1598 = vmatpush1.msra.mxu0 0.0
        %1599 = vmatprep.mubr.f32.mxu0 0.0
        %1600 = vmatmul.mubr.f32.gmra.mrb[0].mxu0 %v1533
        %v1601 = vpop.f32.mrb[0].mxu0
        %v1602 = vadd.f32 0.0, %v1601
        %v1603 = vpop.f32.mrb[0].mxu0
        %1604 = vdwg.mxu0
        %v1605 = vadd.f32 %v1083, %v1602
        %s1606 = scalar_lea.vmem %s3, 256
        %v1607 = vld [vmem:[%s1606] sm:$0xff]
        %v1608 = vld [vmem:[%s1606 + $0x8] sm:$0xff]
        %v1609 = vld [vmem:[%s1606 + $0x10] sm:$0xff]
        %v1610 = vld [vmem:[%s1606 + $0x18] sm:$0xff]
        %v1611 = vld [vmem:[%s1606 + $0x20] sm:$0xff]
        %v1612 = vld [vmem:[%s1606 + $0x28] sm:$0xff]
        %v1613 = vld [vmem:[%s1606 + $0x30] sm:$0xff]
        %v1614 = vld [vmem:[%s1606 + $0x38] sm:$0xff]
        %v1615 = vld [vmem:[%s1606 + $0x40] sm:$0xff]
        %v1616 = vld [vmem:[%s1606 + $0x48] sm:$0xff]
        %v1617 = vld [vmem:[%s1606 + $0x50] sm:$0xff]
        %v1618 = vld [vmem:[%s1606 + $0x58] sm:$0xff]
        %v1619 = vld [vmem:[%s1606 + $0x60] sm:$0xff]
        %v1620 = vld [vmem:[%s1606 + $0x68] sm:$0xff]
        %v1621 = vld [vmem:[%s1606 + $0x70] sm:$0xff]
        %v1622 = vld [vmem:[%s1606 + $0x78] sm:$0xff]
        %s1623 = scalar_lea.vmem %s4, 2
        %v1624 = vld [vmem:[%s1623] sm:$0x1]
        %v1626 = vlaneseq
        %v1627 = vshrl.u32 %v1626, 7
        %v1628 = vsub.s32 0, %v1627
        %v1629 = vrot.slane %v1624, %v1628
        %1631 = vmatprep.subr.mxu0 0.0
        %1632 = vmatpush1.msra.mxu0 %v1607
        %1633 = vmatprep.subr.mxu0 0.0
        %1634 = vmatpush1.msra.mxu0 %v1608
        %1635 = vmatprep.subr.mxu0 0.0
        %1636 = vmatpush1.msra.mxu0 %v1609
        %1637 = vmatprep.subr.mxu0 0.0
        %1638 = vmatpush1.msra.mxu0 %v1610
        %1639 = vmatprep.subr.mxu0 0.0
        %1640 = vmatpush1.msra.mxu0 %v1611
        %1641 = vmatprep.subr.mxu0 0.0
        %1642 = vmatpush1.msra.mxu0 %v1612
        %1643 = vmatprep.subr.mxu0 0.0
        %1644 = vmatpush1.msra.mxu0 %v1613
        %1645 = vmatprep.subr.mxu0 0.0
        %1646 = vmatpush1.msra.mxu0 %v1614
        %1647 = vmatprep.subr.mxu0 0.0
        %1648 = vmatpush1.msra.mxu0 %v1615
        %1649 = vmatprep.subr.mxu0 0.0
        %1650 = vmatpush1.msra.mxu0 %v1616
        %1651 = vmatprep.subr.mxu0 0.0
        %1652 = vmatpush1.msra.mxu0 %v1617
        %1653 = vmatprep.subr.mxu0 0.0
        %1654 = vmatpush1.msra.mxu0 %v1618
        %1655 = vmatprep.subr.mxu0 0.0
        %1656 = vmatpush1.msra.mxu0 %v1619
        %1657 = vmatprep.subr.mxu0 0.0
        %1658 = vmatpush1.msra.mxu0 %v1620
        %1659 = vmatprep.subr.mxu0 0.0
        %1660 = vmatpush1.msra.mxu0 %v1621
        %1661 = vmatprep.subr.mxu0 0.0
        %1662 = vmatpush1.msra.mxu0 %v1622
        %1663 = vmatprep.subr.mxu0 0.0
        %1664 = vmatpush1.msra.mxu0 0.0
        %1665 = vmatprep.subr.mxu0 0.0
        %1666 = vmatpush1.msra.mxu0 0.0
        %1667 = vmatprep.subr.mxu0 0.0
        %1668 = vmatpush1.msra.mxu0 0.0
        %1669 = vmatprep.subr.mxu0 0.0
        %1670 = vmatpush1.msra.mxu0 0.0
        %1671 = vmatprep.subr.mxu0 0.0
        %1672 = vmatpush1.msra.mxu0 0.0
        %1673 = vmatprep.subr.mxu0 0.0
        %1674 = vmatpush1.msra.mxu0 0.0
        %1675 = vmatprep.subr.mxu0 0.0
        %1676 = vmatpush1.msra.mxu0 0.0
        %1677 = vmatprep.subr.mxu0 0.0
        %1678 = vmatpush1.msra.mxu0 0.0
        %1679 = vmatprep.subr.mxu0 0.0
        %1680 = vmatpush1.msra.mxu0 0.0
        %1681 = vmatprep.subr.mxu0 0.0
        %1682 = vmatpush1.msra.mxu0 0.0
        %1683 = vmatprep.subr.mxu0 0.0
        %1684 = vmatpush1.msra.mxu0 0.0
        %1685 = vmatprep.subr.mxu0 0.0
        %1686 = vmatpush1.msra.mxu0 0.0
        %1687 = vmatprep.subr.mxu0 0.0
        %1688 = vmatpush1.msra.mxu0 0.0
        %1689 = vmatprep.subr.mxu0 0.0
        %1690 = vmatpush1.msra.mxu0 0.0
        %1691 = vmatprep.subr.mxu0 0.0
        %1692 = vmatpush1.msra.mxu0 0.0
        %1693 = vmatprep.subr.mxu0 0.0
        %1694 = vmatpush1.msra.mxu0 0.0
        %1695 = vmatprep.mubr.f32.mxu0 0.0
        %1696 = vmatmul.mubr.f32.gmra.mrb[0].mxu0 %v556
        %v1697 = vpop.f32.mrb[0].mxu0
        %v1698 = vadd.f32 %v1629, %v1697
        %v1699 = vpop.f32.mrb[0].mxu0
        %1700 = vdwg.mxu0
        %s1701 = scalar_lea.vmem %s3, 896
        %v1702 = vld [vmem:[%s1701] sm:$0xff]
        %v1703 = vld [vmem:[%s1701 + $0x8] sm:$0xff]
        %v1704 = vld [vmem:[%s1701 + $0x10] sm:$0xff]
        %v1705 = vld [vmem:[%s1701 + $0x18] sm:$0xff]
        %v1706 = vld [vmem:[%s1701 + $0x20] sm:$0xff]
        %v1707 = vld [vmem:[%s1701 + $0x28] sm:$0xff]
        %v1708 = vld [vmem:[%s1701 + $0x30] sm:$0xff]
        %v1709 = vld [vmem:[%s1701 + $0x38] sm:$0xff]
        %v1710 = vld [vmem:[%s1701 + $0x40] sm:$0xff]
        %v1711 = vld [vmem:[%s1701 + $0x48] sm:$0xff]
        %v1712 = vld [vmem:[%s1701 + $0x50] sm:$0xff]
        %v1713 = vld [vmem:[%s1701 + $0x58] sm:$0xff]
        %v1714 = vld [vmem:[%s1701 + $0x60] sm:$0xff]
        %v1715 = vld [vmem:[%s1701 + $0x68] sm:$0xff]
        %v1716 = vld [vmem:[%s1701 + $0x70] sm:$0xff]
        %v1717 = vld [vmem:[%s1701 + $0x78] sm:$0xff]
        %s1718 = scalar_lea.vmem %s4, 7
        %v1719 = vld [vmem:[%s1718] sm:$0x1]
        %v1721 = vlaneseq
        %v1722 = vshrl.u32 %v1721, 7
        %v1723 = vsub.s32 0, %v1722
        %v1724 = vrot.slane %v1719, %v1723
        %1726 = vmatprep.subr.mxu0 0.0
        %1727 = vmatpush1.msra.mxu0 %v1702
        %1728 = vmatprep.subr.mxu0 0.0
        %1729 = vmatpush1.msra.mxu0 %v1703
        %1730 = vmatprep.subr.mxu0 0.0
        %1731 = vmatpush1.msra.mxu0 %v1704
        %1732 = vmatprep.subr.mxu0 0.0
        %1733 = vmatpush1.msra.mxu0 %v1705
        %1734 = vmatprep.subr.mxu0 0.0
        %1735 = vmatpush1.msra.mxu0 %v1706
        %1736 = vmatprep.subr.mxu0 0.0
        %1737 = vmatpush1.msra.mxu0 %v1707
        %1738 = vmatprep.subr.mxu0 0.0
        %1739 = vmatpush1.msra.mxu0 %v1708
        %1740 = vmatprep.subr.mxu0 0.0
        %1741 = vmatpush1.msra.mxu0 %v1709
        %1742 = vmatprep.subr.mxu0 0.0
        %1743 = vmatpush1.msra.mxu0 %v1710
        %1744 = vmatprep.subr.mxu0 0.0
        %1745 = vmatpush1.msra.mxu0 %v1711
        %1746 = vmatprep.subr.mxu0 0.0
        %1747 = vmatpush1.msra.mxu0 %v1712
        %1748 = vmatprep.subr.mxu0 0.0
        %1749 = vmatpush1.msra.mxu0 %v1713
        %1750 = vmatprep.subr.mxu0 0.0
        %1751 = vmatpush1.msra.mxu0 %v1714
        %1752 = vmatprep.subr.mxu0 0.0
        %1753 = vmatpush1.msra.mxu0 %v1715
        %1754 = vmatprep.subr.mxu0 0.0
        %1755 = vmatpush1.msra.mxu0 %v1716
        %1756 = vmatprep.subr.mxu0 0.0
        %1757 = vmatpush1.msra.mxu0 %v1717
        %1758 = vmatprep.subr.mxu0 0.0
        %1759 = vmatpush1.msra.mxu0 0.0
        %1760 = vmatprep.subr.mxu0 0.0
        %1761 = vmatpush1.msra.mxu0 0.0
        %1762 = vmatprep.subr.mxu0 0.0
        %1763 = vmatpush1.msra.mxu0 0.0
        %1764 = vmatprep.subr.mxu0 0.0
        %1765 = vmatpush1.msra.mxu0 0.0
        %1766 = vmatprep.subr.mxu0 0.0
        %1767 = vmatpush1.msra.mxu0 0.0
        %1768 = vmatprep.subr.mxu0 0.0
        %1769 = vmatpush1.msra.mxu0 0.0
        %1770 = vmatprep.subr.mxu0 0.0
        %1771 = vmatpush1.msra.mxu0 0.0
        %1772 = vmatprep.subr.mxu0 0.0
        %1773 = vmatpush1.msra.mxu0 0.0
        %1774 = vmatprep.subr.mxu0 0.0
        %1775 = vmatpush1.msra.mxu0 0.0
        %1776 = vmatprep.subr.mxu0 0.0
        %1777 = vmatpush1.msra.mxu0 0.0
        %1778 = vmatprep.subr.mxu0 0.0
        %1779 = vmatpush1.msra.mxu0 0.0
        %1780 = vmatprep.subr.mxu0 0.0
        %1781 = vmatpush1.msra.mxu0 0.0
        %1782 = vmatprep.subr.mxu0 0.0
        %1783 = vmatpush1.msra.mxu0 0.0
        %1784 = vmatprep.subr.mxu0 0.0
        %1785 = vmatpush1.msra.mxu0 0.0
        %1786 = vmatprep.subr.mxu0 0.0
        %1787 = vmatpush1.msra.mxu0 0.0
        %1788 = vmatprep.subr.mxu0 0.0
        %1789 = vmatpush1.msra.mxu0 0.0
        %1790 = vmatprep.mubr.f32.mxu0 0.0
        %1791 = vmatmul.mubr.f32.gmra.mrb[0].mxu0 %v556
        %v1792 = vpop.f32.mrb[0].mxu0
        %v1793 = vadd.f32 %v1724, %v1792
        %v1794 = vpop.f32.mrb[0].mxu0
        %1795 = vdwg.mxu0
        %s1796 = scalar_lea.vmem %s3, 1536
        %v1797 = vld [vmem:[%s1796] sm:$0xff]
        %v1798 = vld [vmem:[%s1796 + $0x8] sm:$0xff]
        %v1799 = vld [vmem:[%s1796 + $0x10] sm:$0xff]
        %v1800 = vld [vmem:[%s1796 + $0x18] sm:$0xff]
        %v1801 = vld [vmem:[%s1796 + $0x20] sm:$0xff]
        %v1802 = vld [vmem:[%s1796 + $0x28] sm:$0xff]
        %v1803 = vld [vmem:[%s1796 + $0x30] sm:$0xff]
        %v1804 = vld [vmem:[%s1796 + $0x38] sm:$0xff]
        %v1805 = vld [vmem:[%s1796 + $0x40] sm:$0xff]
        %v1806 = vld [vmem:[%s1796 + $0x48] sm:$0xff]
        %v1807 = vld [vmem:[%s1796 + $0x50] sm:$0xff]
        %v1808 = vld [vmem:[%s1796 + $0x58] sm:$0xff]
        %v1809 = vld [vmem:[%s1796 + $0x60] sm:$0xff]
        %v1810 = vld [vmem:[%s1796 + $0x68] sm:$0xff]
        %v1811 = vld [vmem:[%s1796 + $0x70] sm:$0xff]
        %v1812 = vld [vmem:[%s1796 + $0x78] sm:$0xff]
        %s1813 = scalar_lea.vmem %s4, 12
        %v1814 = vld [vmem:[%s1813] sm:$0x1]
        %v1816 = vlaneseq
        %v1817 = vshrl.u32 %v1816, 7
        %v1818 = vsub.s32 0, %v1817
        %v1819 = vrot.slane %v1814, %v1818
        %1821 = vmatprep.subr.mxu0 0.0
        %1822 = vmatpush1.msra.mxu0 %v1797
        %1823 = vmatprep.subr.mxu0 0.0
        %1824 = vmatpush1.msra.mxu0 %v1798
        %1825 = vmatprep.subr.mxu0 0.0
        %1826 = vmatpush1.msra.mxu0 %v1799
        %1827 = vmatprep.subr.mxu0 0.0
        %1828 = vmatpush1.msra.mxu0 %v1800
        %1829 = vmatprep.subr.mxu0 0.0
        %1830 = vmatpush1.msra.mxu0 %v1801
        %1831 = vmatprep.subr.mxu0 0.0
        %1832 = vmatpush1.msra.mxu0 %v1802
        %1833 = vmatprep.subr.mxu0 0.0
        %1834 = vmatpush1.msra.mxu0 %v1803
        %1835 = vmatprep.subr.mxu0 0.0
        %1836 = vmatpush1.msra.mxu0 %v1804
        %1837 = vmatprep.subr.mxu0 0.0
        %1838 = vmatpush1.msra.mxu0 %v1805
        %1839 = vmatprep.subr.mxu0 0.0
        %1840 = vmatpush1.msra.mxu0 %v1806
        %1841 = vmatprep.subr.mxu0 0.0
        %1842 = vmatpush1.msra.mxu0 %v1807
        %1843 = vmatprep.subr.mxu0 0.0
        %1844 = vmatpush1.msra.mxu0 %v1808
        %1845 = vmatprep.subr.mxu0 0.0
        %1846 = vmatpush1.msra.mxu0 %v1809
        %1847 = vmatprep.subr.mxu0 0.0
        %1848 = vmatpush1.msra.mxu0 %v1810
        %1849 = vmatprep.subr.mxu0 0.0
        %1850 = vmatpush1.msra.mxu0 %v1811
        %1851 = vmatprep.subr.mxu0 0.0
        %1852 = vmatpush1.msra.mxu0 %v1812
        %1853 = vmatprep.subr.mxu0 0.0
        %1854 = vmatpush1.msra.mxu0 0.0
        %1855 = vmatprep.subr.mxu0 0.0
        %1856 = vmatpush1.msra.mxu0 0.0
        %1857 = vmatprep.subr.mxu0 0.0
        %1858 = vmatpush1.msra.mxu0 0.0
        %1859 = vmatprep.subr.mxu0 0.0
        %1860 = vmatpush1.msra.mxu0 0.0
        %1861 = vmatprep.subr.mxu0 0.0
        %1862 = vmatpush1.msra.mxu0 0.0
        %1863 = vmatprep.subr.mxu0 0.0
        %1864 = vmatpush1.msra.mxu0 0.0
        %1865 = vmatprep.subr.mxu0 0.0
        %1866 = vmatpush1.msra.mxu0 0.0
        %1867 = vmatprep.subr.mxu0 0.0
        %1868 = vmatpush1.msra.mxu0 0.0
        %1869 = vmatprep.subr.mxu0 0.0
        %1870 = vmatpush1.msra.mxu0 0.0
        %1871 = vmatprep.subr.mxu0 0.0
        %1872 = vmatpush1.msra.mxu0 0.0
        %1873 = vmatprep.subr.mxu0 0.0
        %1874 = vmatpush1.msra.mxu0 0.0
        %1875 = vmatprep.subr.mxu0 0.0
        %1876 = vmatpush1.msra.mxu0 0.0
        %1877 = vmatprep.subr.mxu0 0.0
        %1878 = vmatpush1.msra.mxu0 0.0
        %1879 = vmatprep.subr.mxu0 0.0
        %1880 = vmatpush1.msra.mxu0 0.0
        %1881 = vmatprep.subr.mxu0 0.0
        %1882 = vmatpush1.msra.mxu0 0.0
        %1883 = vmatprep.subr.mxu0 0.0
        %1884 = vmatpush1.msra.mxu0 0.0
        %1885 = vmatprep.mubr.f32.mxu0 0.0
        %1886 = vmatmul.mubr.f32.gmra.mrb[0].mxu0 %v556
        %v1887 = vpop.f32.mrb[0].mxu0
        %v1888 = vadd.f32 %v1819, %v1887
        %v1889 = vpop.f32.mrb[0].mxu0
        %1890 = vdwg.mxu0
        %v1891 = vmul.f32 %v1698, 0.35355338
        %v1893 = vsel %vm848, %v1891, 0
        %v1896 = vsel %vm848, %v1793, 0
        %1898 = vmatprep.subr.mxu0 0.0
        %1899 = vmatpush1.xpose.msra.mxu0 %v1896
        %1900 = vmatprep.subr.mxu0 0.0
        %1901 = vmatpush1.xpose.msra.mxu0 0.0
        %1902 = vmatprep.subr.mxu0 0.0
        %1903 = vmatpush1.xpose.msra.mxu0 0.0
        %1904 = vmatprep.subr.mxu0 0.0
        %1905 = vmatpush1.xpose.msra.mxu0 0.0
        %1906 = vmatprep.subr.mxu0 0.0
        %1907 = vmatpush1.xpose.msra.mxu0 0.0
        %1908 = vmatprep.subr.mxu0 0.0
        %1909 = vmatpush1.xpose.msra.mxu0 0.0
        %1910 = vmatprep.subr.mxu0 0.0
        %1911 = vmatpush1.xpose.msra.mxu0 0.0
        %1912 = vmatprep.subr.mxu0 0.0
        %1913 = vmatpush1.xpose.msra.mxu0 0.0
        %1914 = vmatprep.subr.mxu0 0.0
        %1915 = vmatpush1.xpose.msra.mxu0 0.0
        %1916 = vmatprep.subr.mxu0 0.0
        %1917 = vmatpush1.xpose.msra.mxu0 0.0
        %1918 = vmatprep.subr.mxu0 0.0
        %1919 = vmatpush1.xpose.msra.mxu0 0.0
        %1920 = vmatprep.subr.mxu0 0.0
        %1921 = vmatpush1.xpose.msra.mxu0 0.0
        %1922 = vmatprep.subr.mxu0 0.0
        %1923 = vmatpush1.xpose.msra.mxu0 0.0
        %1924 = vmatprep.subr.mxu0 0.0
        %1925 = vmatpush1.xpose.msra.mxu0 0.0
        %1926 = vmatprep.subr.mxu0 0.0
        %1927 = vmatpush1.xpose.msra.mxu0 0.0
        %1928 = vmatprep.subr.mxu0 0.0
        %1929 = vmatpush1.xpose.msra.mxu0 0.0
        %1930 = vmatprep.subr.mxu0 0.0
        %1931 = vmatpush1.xpose.msra.mxu0 0.0
        %1932 = vmatprep.subr.mxu0 0.0
        %1933 = vmatpush1.xpose.msra.mxu0 0.0
        %1934 = vmatprep.subr.mxu0 0.0
        %1935 = vmatpush1.xpose.msra.mxu0 0.0
        %1936 = vmatprep.subr.mxu0 0.0
        %1937 = vmatpush1.xpose.msra.mxu0 0.0
        %1938 = vmatprep.subr.mxu0 0.0
        %1939 = vmatpush1.xpose.msra.mxu0 0.0
        %1940 = vmatprep.subr.mxu0 0.0
        %1941 = vmatpush1.xpose.msra.mxu0 0.0
        %1942 = vmatprep.subr.mxu0 0.0
        %1943 = vmatpush1.xpose.msra.mxu0 0.0
        %1944 = vmatprep.subr.mxu0 0.0
        %1945 = vmatpush1.xpose.msra.mxu0 0.0
        %1946 = vmatprep.subr.mxu0 0.0
        %1947 = vmatpush1.xpose.msra.mxu0 0.0
        %1948 = vmatprep.subr.mxu0 0.0
        %1949 = vmatpush1.xpose.msra.mxu0 0.0
        %1950 = vmatprep.subr.mxu0 0.0
        %1951 = vmatpush1.xpose.msra.mxu0 0.0
        %1952 = vmatprep.subr.mxu0 0.0
        %1953 = vmatpush1.xpose.msra.mxu0 0.0
        %1954 = vmatprep.subr.mxu0 0.0
        %1955 = vmatpush1.xpose.msra.mxu0 0.0
        %1956 = vmatprep.subr.mxu0 0.0
        %1957 = vmatpush1.xpose.msra.mxu0 0.0
        %1958 = vmatprep.subr.mxu0 0.0
        %1959 = vmatpush1.xpose.msra.mxu0 0.0
        %1960 = vmatprep.subr.mxu0 0.0
        %1961 = vmatpush1.xpose.msra.mxu0 0.0
        %1962 = vmatprep.mubr.f32.mxu0 0.0
        %1963 = vmatmul.mubr.f32.gmra.mrb[0].mxu0 %v1893
        %v1964 = vpop.f32.mrb[0].mxu0
        %v1965 = vadd.f32 0.0, %v1964
        %v1966 = vpop.f32.mrb[0].mxu0
        %1967 = vdwg.mxu0
        %v1968 = vsel %vm848, %v1965, -inf
        %1969 = vmax.xlane.f32.xlu0 %v1968
        %v1970 = vpop.xlane.xlu0 %1969
        %v1971 = vsub.f32 %v1965, %v1970
        %v1972 = vmul.f32 %v1971, 1.442695
        %v1973 = vpow.pop %v1972
        %v1974 = vsel %vm848, %v1973, 0.0
        %1975 = vadd.xlane.f32.xlu0 %v1974
        %v1976 = vpop.xlane.xlu0 %1975
        %v1977 = vrcp.pop %v1976
        %v1978 = vmul.f32 %v1973, %v1977
        %v1980 = vsel %vm848, %v1978, 0
        %1982 = vmatprep.subr.mxu0 0.0
        %1983 = vmatpush1.msra.mxu0 %v1888
        %1984 = vmatprep.subr.mxu0 0.0
        %1985 = vmatpush1.msra.mxu0 0.0
        %1986 = vmatprep.subr.mxu0 0.0
        %1987 = vmatpush1.msra.mxu0 0.0
        %1988 = vmatprep.subr.mxu0 0.0
        %1989 = vmatpush1.msra.mxu0 0.0
        %1990 = vmatprep.subr.mxu0 0.0
        %1991 = vmatpush1.msra.mxu0 0.0
        %1992 = vmatprep.subr.mxu0 0.0
        %1993 = vmatpush1.msra.mxu0 0.0
        %1994 = vmatprep.subr.mxu0 0.0
        %1995 = vmatpush1.msra.mxu0 0.0
        %1996 = vmatprep.subr.mxu0 0.0
        %1997 = vmatpush1.msra.mxu0 0.0
        %1998 = vmatprep.subr.mxu0 0.0
        %1999 = vmatpush1.msra.mxu0 0.0
        %2000 = vmatprep.subr.mxu0 0.0
        %2001 = vmatpush1.msra.mxu0 0.0
        %2002 = vmatprep.subr.mxu0 0.0
        %2003 = vmatpush1.msra.mxu0 0.0
        %2004 = vmatprep.subr.mxu0 0.0
        %2005 = vmatpush1.msra.mxu0 0.0
        %2006 = vmatprep.subr.mxu0 0.0
        %2007 = vmatpush1.msra.mxu0 0.0
        %2008 = vmatprep.subr.mxu0 0.0
        %2009 = vmatpush1.msra.mxu0 0.0
        %2010 = vmatprep.subr.mxu0 0.0
        %2011 = vmatpush1.msra.mxu0 0.0
        %2012 = vmatprep.subr.mxu0 0.0
        %2013 = vmatpush1.msra.mxu0 0.0
        %2014 = vmatprep.subr.mxu0 0.0
        %2015 = vmatpush1.msra.mxu0 0.0
        %2016 = vmatprep.subr.mxu0 0.0
        %2017 = vmatpush1.msra.mxu0 0.0
        %2018 = vmatprep.subr.mxu0 0.0
        %2019 = vmatpush1.msra.mxu0 0.0
        %2020 = vmatprep.subr.mxu0 0.0
        %2021 = vmatpush1.msra.mxu0 0.0
        %2022 = vmatprep.subr.mxu0 0.0
        %2023 = vmatpush1.msra.mxu0 0.0
        %2024 = vmatprep.subr.mxu0 0.0
        %2025 = vmatpush1.msra.mxu0 0.0
        %2026 = vmatprep.subr.mxu0 0.0
        %2027 = vmatpush1.msra.mxu0 0.0
        %2028 = vmatprep.subr.mxu0 0.0
        %2029 = vmatpush1.msra.mxu0 0.0
        %2030 = vmatprep.subr.mxu0 0.0
        %2031 = vmatpush1.msra.mxu0 0.0
        %2032 = vmatprep.subr.mxu0 0.0
        %2033 = vmatpush1.msra.mxu0 0.0
        %2034 = vmatprep.subr.mxu0 0.0
        %2035 = vmatpush1.msra.mxu0 0.0
        %2036 = vmatprep.subr.mxu0 0.0
        %2037 = vmatpush1.msra.mxu0 0.0
        %2038 = vmatprep.subr.mxu0 0.0
        %2039 = vmatpush1.msra.mxu0 0.0
        %2040 = vmatprep.subr.mxu0 0.0
        %2041 = vmatpush1.msra.mxu0 0.0
        %2042 = vmatprep.subr.mxu0 0.0
        %2043 = vmatpush1.msra.mxu0 0.0
        %2044 = vmatprep.subr.mxu0 0.0
        %2045 = vmatpush1.msra.mxu0 0.0
        %2046 = vmatprep.mubr.f32.mxu0 0.0
        %2047 = vmatmul.mubr.f32.gmra.mrb[0].mxu0 %v1980
        %v2048 = vpop.f32.mrb[0].mxu0
        %v2049 = vadd.f32 0.0, %v2048
        %v2050 = vpop.f32.mrb[0].mxu0
        %2051 = vdwg.mxu0
        %s2052 = scalar_lea.vmem %s5, 16
        %v2053 = vld [vmem:[%s2052] sm:$0xff]
        %v2055 = vsel %vm848, %v2049, 0
        %2057 = vmatprep.subr.mxu0 0.0
        %2058 = vmatpush1.msra.mxu0 %v2053
        %2059 = vmatprep.subr.mxu0 0.0
        %2060 = vmatpush1.msra.mxu0 0.0
        %2061 = vmatprep.subr.mxu0 0.0
        %2062 = vmatpush1.msra.mxu0 0.0
        %2063 = vmatprep.subr.mxu0 0.0
        %2064 = vmatpush1.msra.mxu0 0.0
        %2065 = vmatprep.subr.mxu0 0.0
        %2066 = vmatpush1.msra.mxu0 0.0
        %2067 = vmatprep.subr.mxu0 0.0
        %2068 = vmatpush1.msra.mxu0 0.0
        %2069 = vmatprep.subr.mxu0 0.0
        %2070 = vmatpush1.msra.mxu0 0.0
        %2071 = vmatprep.subr.mxu0 0.0
        %2072 = vmatpush1.msra.mxu0 0.0
        %2073 = vmatprep.subr.mxu0 0.0
        %2074 = vmatpush1.msra.mxu0 0.0
        %2075 = vmatprep.subr.mxu0 0.0
        %2076 = vmatpush1.msra.mxu0 0.0
        %2077 = vmatprep.subr.mxu0 0.0
        %2078 = vmatpush1.msra.mxu0 0.0
        %2079 = vmatprep.subr.mxu0 0.0
        %2080 = vmatpush1.msra.mxu0 0.0
        %2081 = vmatprep.subr.mxu0 0.0
        %2082 = vmatpush1.msra.mxu0 0.0
        %2083 = vmatprep.subr.mxu0 0.0
        %2084 = vmatpush1.msra.mxu0 0.0
        %2085 = vmatprep.subr.mxu0 0.0
        %2086 = vmatpush1.msra.mxu0 0.0
        %2087 = vmatprep.subr.mxu0 0.0
        %2088 = vmatpush1.msra.mxu0 0.0
        %2089 = vmatprep.subr.mxu0 0.0
        %2090 = vmatpush1.msra.mxu0 0.0
        %2091 = vmatprep.subr.mxu0 0.0
        %2092 = vmatpush1.msra.mxu0 0.0
        %2093 = vmatprep.subr.mxu0 0.0
        %2094 = vmatpush1.msra.mxu0 0.0
        %2095 = vmatprep.subr.mxu0 0.0
        %2096 = vmatpush1.msra.mxu0 0.0
        %2097 = vmatprep.subr.mxu0 0.0
        %2098 = vmatpush1.msra.mxu0 0.0
        %2099 = vmatprep.subr.mxu0 0.0
        %2100 = vmatpush1.msra.mxu0 0.0
        %2101 = vmatprep.subr.mxu0 0.0
        %2102 = vmatpush1.msra.mxu0 0.0
        %2103 = vmatprep.subr.mxu0 0.0
        %2104 = vmatpush1.msra.mxu0 0.0
        %2105 = vmatprep.subr.mxu0 0.0
        %2106 = vmatpush1.msra.mxu0 0.0
        %2107 = vmatprep.subr.mxu0 0.0
        %2108 = vmatpush1.msra.mxu0 0.0
        %2109 = vmatprep.subr.mxu0 0.0
        %2110 = vmatpush1.msra.mxu0 0.0
        %2111 = vmatprep.subr.mxu0 0.0
        %2112 = vmatpush1.msra.mxu0 0.0
        %2113 = vmatprep.subr.mxu0 0.0
        %2114 = vmatpush1.msra.mxu0 0.0
        %2115 = vmatprep.subr.mxu0 0.0
        %2116 = vmatpush1.msra.mxu0 0.0
        %2117 = vmatprep.subr.mxu0 0.0
        %2118 = vmatpush1.msra.mxu0 0.0
        %2119 = vmatprep.subr.mxu0 0.0
        %2120 = vmatpush1.msra.mxu0 0.0
        %2121 = vmatprep.mubr.f32.mxu0 0.0
        %2122 = vmatmul.mubr.f32.gmra.mrb[0].mxu0 %v2055
        %v2123 = vpop.f32.mrb[0].mxu0
        %v2124 = vadd.f32 0.0, %v2123
        %v2125 = vpop.f32.mrb[0].mxu0
        %2126 = vdwg.mxu0
        %v2127 = vadd.f32 %v1605, %v2124
        %s2128 = scalar_lea.vmem %s3, 384
        %v2129 = vld [vmem:[%s2128] sm:$0xff]
        %v2130 = vld [vmem:[%s2128 + $0x8] sm:$0xff]
        %v2131 = vld [vmem:[%s2128 + $0x10] sm:$0xff]
        %v2132 = vld [vmem:[%s2128 + $0x18] sm:$0xff]
        %v2133 = vld [vmem:[%s2128 + $0x20] sm:$0xff]
        %v2134 = vld [vmem:[%s2128 + $0x28] sm:$0xff]
        %v2135 = vld [vmem:[%s2128 + $0x30] sm:$0xff]
        %v2136 = vld [vmem:[%s2128 + $0x38] sm:$0xff]
        %v2137 = vld [vmem:[%s2128 + $0x40] sm:$0xff]
        %v2138 = vld [vmem:[%s2128 + $0x48] sm:$0xff]
        %v2139 = vld [vmem:[%s2128 + $0x50] sm:$0xff]
        %v2140 = vld [vmem:[%s2128 + $0x58] sm:$0xff]
        %v2141 = vld [vmem:[%s2128 + $0x60] sm:$0xff]
        %v2142 = vld [vmem:[%s2128 + $0x68] sm:$0xff]
        %v2143 = vld [vmem:[%s2128 + $0x70] sm:$0xff]
        %v2144 = vld [vmem:[%s2128 + $0x78] sm:$0xff]
        %s2145 = scalar_lea.vmem %s4, 3
        %v2146 = vld [vmem:[%s2145] sm:$0x1]
        %v2148 = vlaneseq
        %v2149 = vshrl.u32 %v2148, 7
        %v2150 = vsub.s32 0, %v2149
        %v2151 = vrot.slane %v2146, %v2150
        %2153 = vmatprep.subr.mxu0 0.0
        %2154 = vmatpush1.msra.mxu0 %v2129
        %2155 = vmatprep.subr.mxu0 0.0
        %2156 = vmatpush1.msra.mxu0 %v2130
        %2157 = vmatprep.subr.mxu0 0.0
        %2158 = vmatpush1.msra.mxu0 %v2131
        %2159 = vmatprep.subr.mxu0 0.0
        %2160 = vmatpush1.msra.mxu0 %v2132
        %2161 = vmatprep.subr.mxu0 0.0
        %2162 = vmatpush1.msra.mxu0 %v2133
        %2163 = vmatprep.subr.mxu0 0.0
        %2164 = vmatpush1.msra.mxu0 %v2134
        %2165 = vmatprep.subr.mxu0 0.0
        %2166 = vmatpush1.msra.mxu0 %v2135
        %2167 = vmatprep.subr.mxu0 0.0
        %2168 = vmatpush1.msra.mxu0 %v2136
        %2169 = vmatprep.subr.mxu0 0.0
        %2170 = vmatpush1.msra.mxu0 %v2137
        %2171 = vmatprep.subr.mxu0 0.0
        %2172 = vmatpush1.msra.mxu0 %v2138
        %2173 = vmatprep.subr.mxu0 0.0
        %2174 = vmatpush1.msra.mxu0 %v2139
        %2175 = vmatprep.subr.mxu0 0.0
        %2176 = vmatpush1.msra.mxu0 %v2140
        %2177 = vmatprep.subr.mxu0 0.0
        %2178 = vmatpush1.msra.mxu0 %v2141
        %2179 = vmatprep.subr.mxu0 0.0
        %2180 = vmatpush1.msra.mxu0 %v2142
        %2181 = vmatprep.subr.mxu0 0.0
        %2182 = vmatpush1.msra.mxu0 %v2143
        %2183 = vmatprep.subr.mxu0 0.0
        %2184 = vmatpush1.msra.mxu0 %v2144
        %2185 = vmatprep.subr.mxu0 0.0
        %2186 = vmatpush1.msra.mxu0 0.0
        %2187 = vmatprep.subr.mxu0 0.0
        %2188 = vmatpush1.msra.mxu0 0.0
        %2189 = vmatprep.subr.mxu0 0.0
        %2190 = vmatpush1.msra.mxu0 0.0
        %2191 = vmatprep.subr.mxu0 0.0
        %2192 = vmatpush1.msra.mxu0 0.0
        %2193 = vmatprep.subr.mxu0 0.0
        %2194 = vmatpush1.msra.mxu0 0.0
        %2195 = vmatprep.subr.mxu0 0.0
        %2196 = vmatpush1.msra.mxu0 0.0
        %2197 = vmatprep.subr.mxu0 0.0
        %2198 = vmatpush1.msra.mxu0 0.0
        %2199 = vmatprep.subr.mxu0 0.0
        %2200 = vmatpush1.msra.mxu0 0.0
        %2201 = vmatprep.subr.mxu0 0.0
        %2202 = vmatpush1.msra.mxu0 0.0
        %2203 = vmatprep.subr.mxu0 0.0
        %2204 = vmatpush1.msra.mxu0 0.0
        %2205 = vmatprep.subr.mxu0 0.0
        %2206 = vmatpush1.msra.mxu0 0.0
        %2207 = vmatprep.subr.mxu0 0.0
        %2208 = vmatpush1.msra.mxu0 0.0
        %2209 = vmatprep.subr.mxu0 0.0
        %2210 = vmatpush1.msra.mxu0 0.0
        %2211 = vmatprep.subr.mxu0 0.0
        %2212 = vmatpush1.msra.mxu0 0.0
        %2213 = vmatprep.subr.mxu0 0.0
        %2214 = vmatpush1.msra.mxu0 0.0
        %2215 = vmatprep.subr.mxu0 0.0
        %2216 = vmatpush1.msra.mxu0 0.0
        %2217 = vmatprep.mubr.f32.mxu0 0.0
        %2218 = vmatmul.mubr.f32.gmra.mrb[0].mxu0 %v556
        %v2219 = vpop.f32.mrb[0].mxu0
        %v2220 = vadd.f32 %v2151, %v2219
        %v2221 = vpop.f32.mrb[0].mxu0
        %2222 = vdwg.mxu0
        %s2223 = scalar_lea.vmem %s3, 1024
        %v2224 = vld [vmem:[%s2223] sm:$0xff]
        %v2225 = vld [vmem:[%s2223 + $0x8] sm:$0xff]
        %v2226 = vld [vmem:[%s2223 + $0x10] sm:$0xff]
        %v2227 = vld [vmem:[%s2223 + $0x18] sm:$0xff]
        %v2228 = vld [vmem:[%s2223 + $0x20] sm:$0xff]
        %v2229 = vld [vmem:[%s2223 + $0x28] sm:$0xff]
        %v2230 = vld [vmem:[%s2223 + $0x30] sm:$0xff]
        %v2231 = vld [vmem:[%s2223 + $0x38] sm:$0xff]
        %v2232 = vld [vmem:[%s2223 + $0x40] sm:$0xff]
        %v2233 = vld [vmem:[%s2223 + $0x48] sm:$0xff]
        %v2234 = vld [vmem:[%s2223 + $0x50] sm:$0xff]
        %v2235 = vld [vmem:[%s2223 + $0x58] sm:$0xff]
        %v2236 = vld [vmem:[%s2223 + $0x60] sm:$0xff]
        %v2237 = vld [vmem:[%s2223 + $0x68] sm:$0xff]
        %v2238 = vld [vmem:[%s2223 + $0x70] sm:$0xff]
        %v2239 = vld [vmem:[%s2223 + $0x78] sm:$0xff]
        %s2240 = scalar_lea.vmem %s4, 8
        %v2241 = vld [vmem:[%s2240] sm:$0x1]
        %v2243 = vlaneseq
        %v2244 = vshrl.u32 %v2243, 7
        %v2245 = vsub.s32 0, %v2244
        %v2246 = vrot.slane %v2241, %v2245
        %2248 = vmatprep.subr.mxu0 0.0
        %2249 = vmatpush1.msra.mxu0 %v2224
        %2250 = vmatprep.subr.mxu0 0.0
        %2251 = vmatpush1.msra.mxu0 %v2225
        %2252 = vmatprep.subr.mxu0 0.0
        %2253 = vmatpush1.msra.mxu0 %v2226
        %2254 = vmatprep.subr.mxu0 0.0
        %2255 = vmatpush1.msra.mxu0 %v2227
        %2256 = vmatprep.subr.mxu0 0.0
        %2257 = vmatpush1.msra.mxu0 %v2228
        %2258 = vmatprep.subr.mxu0 0.0
        %2259 = vmatpush1.msra.mxu0 %v2229
        %2260 = vmatprep.subr.mxu0 0.0
        %2261 = vmatpush1.msra.mxu0 %v2230
        %2262 = vmatprep.subr.mxu0 0.0
        %2263 = vmatpush1.msra.mxu0 %v2231
        %2264 = vmatprep.subr.mxu0 0.0
        %2265 = vmatpush1.msra.mxu0 %v2232
        %2266 = vmatprep.subr.mxu0 0.0
        %2267 = vmatpush1.msra.mxu0 %v2233
        %2268 = vmatprep.subr.mxu0 0.0
        %2269 = vmatpush1.msra.mxu0 %v2234
        %2270 = vmatprep.subr.mxu0 0.0
        %2271 = vmatpush1.msra.mxu0 %v2235
        %2272 = vmatprep.subr.mxu0 0.0
        %2273 = vmatpush1.msra.mxu0 %v2236
        %2274 = vmatprep.subr.mxu0 0.0
        %2275 = vmatpush1.msra.mxu0 %v2237
        %2276 = vmatprep.subr.mxu0 0.0
        %2277 = vmatpush1.msra.mxu0 %v2238
        %2278 = vmatprep.subr.mxu0 0.0
        %2279 = vmatpush1.msra.mxu0 %v2239
        %2280 = vmatprep.subr.mxu0 0.0
        %2281 = vmatpush1.msra.mxu0 0.0
        %2282 = vmatprep.subr.mxu0 0.0
        %2283 = vmatpush1.msra.mxu0 0.0
        %2284 = vmatprep.subr.mxu0 0.0
        %2285 = vmatpush1.msra.mxu0 0.0
        %2286 = vmatprep.subr.mxu0 0.0
        %2287 = vmatpush1.msra.mxu0 0.0
        %2288 = vmatprep.subr.mxu0 0.0
        %2289 = vmatpush1.msra.mxu0 0.0
        %2290 = vmatprep.subr.mxu0 0.0
        %2291 = vmatpush1.msra.mxu0 0.0
        %2292 = vmatprep.subr.mxu0 0.0
        %2293 = vmatpush1.msra.mxu0 0.0
        %2294 = vmatprep.subr.mxu0 0.0
        %2295 = vmatpush1.msra.mxu0 0.0
        %2296 = vmatprep.subr.mxu0 0.0
        %2297 = vmatpush1.msra.mxu0 0.0
        %2298 = vmatprep.subr.mxu0 0.0
        %2299 = vmatpush1.msra.mxu0 0.0
        %2300 = vmatprep.subr.mxu0 0.0
        %2301 = vmatpush1.msra.mxu0 0.0
        %2302 = vmatprep.subr.mxu0 0.0
        %2303 = vmatpush1.msra.mxu0 0.0
        %2304 = vmatprep.subr.mxu0 0.0
        %2305 = vmatpush1.msra.mxu0 0.0
        %2306 = vmatprep.subr.mxu0 0.0
        %2307 = vmatpush1.msra.mxu0 0.0
        %2308 = vmatprep.subr.mxu0 0.0
        %2309 = vmatpush1.msra.mxu0 0.0
        %2310 = vmatprep.subr.mxu0 0.0
        %2311 = vmatpush1.msra.mxu0 0.0
        %2312 = vmatprep.mubr.f32.mxu0 0.0
        %2313 = vmatmul.mubr.f32.gmra.mrb[0].mxu0 %v556
        %v2314 = vpop.f32.mrb[0].mxu0
        %v2315 = vadd.f32 %v2246, %v2314
        %v2316 = vpop.f32.mrb[0].mxu0
        %2317 = vdwg.mxu0
        %s2318 = scalar_lea.vmem %s3, 1664
        %v2319 = vld [vmem:[%s2318] sm:$0xff]
        %v2320 = vld [vmem:[%s2318 + $0x8] sm:$0xff]
        %v2321 = vld [vmem:[%s2318 + $0x10] sm:$0xff]
        %v2322 = vld [vmem:[%s2318 + $0x18] sm:$0xff]
        %v2323 = vld [vmem:[%s2318 + $0x20] sm:$0xff]
        %v2324 = vld [vmem:[%s2318 + $0x28] sm:$0xff]
        %v2325 = vld [vmem:[%s2318 + $0x30] sm:$0xff]
        %v2326 = vld [vmem:[%s2318 + $0x38] sm:$0xff]
        %v2327 = vld [vmem:[%s2318 + $0x40] sm:$0xff]
        %v2328 = vld [vmem:[%s2318 + $0x48] sm:$0xff]
        %v2329 = vld [vmem:[%s2318 + $0x50] sm:$0xff]
        %v2330 = vld [vmem:[%s2318 + $0x58] sm:$0xff]
        %v2331 = vld [vmem:[%s2318 + $0x60] sm:$0xff]
        %v2332 = vld [vmem:[%s2318 + $0x68] sm:$0xff]
        %v2333 = vld [vmem:[%s2318 + $0x70] sm:$0xff]
        %v2334 = vld [vmem:[%s2318 + $0x78] sm:$0xff]
        %s2335 = scalar_lea.vmem %s4, 13
        %v2336 = vld [vmem:[%s2335] sm:$0x1]
        %v2338 = vlaneseq
        %v2339 = vshrl.u32 %v2338, 7
        %v2340 = vsub.s32 0, %v2339
        %v2341 = vrot.slane %v2336, %v2340
        %2343 = vmatprep.subr.mxu0 0.0
        %2344 = vmatpush1.msra.mxu0 %v2319
        %2345 = vmatprep.subr.mxu0 0.0
        %2346 = vmatpush1.msra.mxu0 %v2320
        %2347 = vmatprep.subr.mxu0 0.0
        %2348 = vmatpush1.msra.mxu0 %v2321
        %2349 = vmatprep.subr.mxu0 0.0
        %2350 = vmatpush1.msra.mxu0 %v2322
        %2351 = vmatprep.subr.mxu0 0.0
        %2352 = vmatpush1.msra.mxu0 %v2323
        %2353 = vmatprep.subr.mxu0 0.0
        %2354 = vmatpush1.msra.mxu0 %v2324
        %2355 = vmatprep.subr.mxu0 0.0
        %2356 = vmatpush1.msra.mxu0 %v2325
        %2357 = vmatprep.subr.mxu0 0.0
        %2358 = vmatpush1.msra.mxu0 %v2326
        %2359 = vmatprep.subr.mxu0 0.0
        %2360 = vmatpush1.msra.mxu0 %v2327
        %2361 = vmatprep.subr.mxu0 0.0
        %2362 = vmatpush1.msra.mxu0 %v2328
        %2363 = vmatprep.subr.mxu0 0.0
        %2364 = vmatpush1.msra.mxu0 %v2329
        %2365 = vmatprep.subr.mxu0 0.0
        %2366 = vmatpush1.msra.mxu0 %v2330
        %2367 = vmatprep.subr.mxu0 0.0
        %2368 = vmatpush1.msra.mxu0 %v2331
        %2369 = vmatprep.subr.mxu0 0.0
        %2370 = vmatpush1.msra.mxu0 %v2332
        %2371 = vmatprep.subr.mxu0 0.0
        %2372 = vmatpush1.msra.mxu0 %v2333
        %2373 = vmatprep.subr.mxu0 0.0
        %2374 = vmatpush1.msra.mxu0 %v2334
        %2375 = vmatprep.subr.mxu0 0.0
        %2376 = vmatpush1.msra.mxu0 0.0
        %2377 = vmatprep.subr.mxu0 0.0
        %2378 = vmatpush1.msra.mxu0 0.0
        %2379 = vmatprep.subr.mxu0 0.0
        %2380 = vmatpush1.msra.mxu0 0.0
        %2381 = vmatprep.subr.mxu0 0.0
        %2382 = vmatpush1.msra.mxu0 0.0
        %2383 = vmatprep.subr.mxu0 0.0
        %2384 = vmatpush1.msra.mxu0 0.0
        %2385 = vmatprep.subr.mxu0 0.0
        %2386 = vmatpush1.msra.mxu0 0.0
        %2387 = vmatprep.subr.mxu0 0.0
        %2388 = vmatpush1.msra.mxu0 0.0
        %2389 = vmatprep.subr.mxu0 0.0
        %2390 = vmatpush1.msra.mxu0 0.0
        %2391 = vmatprep.subr.mxu0 0.0
        %2392 = vmatpush1.msra.mxu0 0.0
        %2393 = vmatprep.subr.mxu0 0.0
        %2394 = vmatpush1.msra.mxu0 0.0
        %2395 = vmatprep.subr.mxu0 0.0
        %2396 = vmatpush1.msra.mxu0 0.0
        %2397 = vmatprep.subr.mxu0 0.0
        %2398 = vmatpush1.msra.mxu0 0.0
        %2399 = vmatprep.subr.mxu0 0.0
        %2400 = vmatpush1.msra.mxu0 0.0
        %2401 = vmatprep.subr.mxu0 0.0
        %2402 = vmatpush1.msra.mxu0 0.0
        %2403 = vmatprep.subr.mxu0 0.0
        %2404 = vmatpush1.msra.mxu0 0.0
        %2405 = vmatprep.subr.mxu0 0.0
        %2406 = vmatpush1.msra.mxu0 0.0
        %2407 = vmatprep.mubr.f32.mxu0 0.0
        %2408 = vmatmul.mubr.f32.gmra.mrb[0].mxu0 %v556
        %v2409 = vpop.f32.mrb[0].mxu0
        %v2410 = vadd.f32 %v2341, %v2409
        %v2411 = vpop.f32.mrb[0].mxu0
        %2412 = vdwg.mxu0
        %v2413 = vmul.f32 %v2220, 0.35355338
        %v2415 = vsel %vm848, %v2413, 0
        %v2418 = vsel %vm848, %v2315, 0
        %2420 = vmatprep.subr.mxu0 0.0
        %2421 = vmatpush1.xpose.msra.mxu0 %v2418
        %2422 = vmatprep.subr.mxu0 0.0
        %2423 = vmatpush1.xpose.msra.mxu0 0.0
        %2424 = vmatprep.subr.mxu0 0.0
        %2425 = vmatpush1.xpose.msra.mxu0 0.0
        %2426 = vmatprep.subr.mxu0 0.0
        %2427 = vmatpush1.xpose.msra.mxu0 0.0
        %2428 = vmatprep.subr.mxu0 0.0
        %2429 = vmatpush1.xpose.msra.mxu0 0.0
        %2430 = vmatprep.subr.mxu0 0.0
        %2431 = vmatpush1.xpose.msra.mxu0 0.0
        %2432 = vmatprep.subr.mxu0 0.0
        %2433 = vmatpush1.xpose.msra.mxu0 0.0
        %2434 = vmatprep.subr.mxu0 0.0
        %2435 = vmatpush1.xpose.msra.mxu0 0.0
        %2436 = vmatprep.subr.mxu0 0.0
        %2437 = vmatpush1.xpose.msra.mxu0 0.0
        %2438 = vmatprep.subr.mxu0 0.0
        %2439 = vmatpush1.xpose.msra.mxu0 0.0
        %2440 = vmatprep.subr.mxu0 0.0
        %2441 = vmatpush1.xpose.msra.mxu0 0.0
        %2442 = vmatprep.subr.mxu0 0.0
        %2443 = vmatpush1.xpose.msra.mxu0 0.0
        %2444 = vmatprep.subr.mxu0 0.0
        %2445 = vmatpush1.xpose.msra.mxu0 0.0
        %2446 = vmatprep.subr.mxu0 0.0
        %2447 = vmatpush1.xpose.msra.mxu0 0.0
        %2448 = vmatprep.subr.mxu0 0.0
        %2449 = vmatpush1.xpose.msra.mxu0 0.0
        %2450 = vmatprep.subr.mxu0 0.0
        %2451 = vmatpush1.xpose.msra.mxu0 0.0
        %2452 = vmatprep.subr.mxu0 0.0
        %2453 = vmatpush1.xpose.msra.mxu0 0.0
        %2454 = vmatprep.subr.mxu0 0.0
        %2455 = vmatpush1.xpose.msra.mxu0 0.0
        %2456 = vmatprep.subr.mxu0 0.0
        %2457 = vmatpush1.xpose.msra.mxu0 0.0
        %2458 = vmatprep.subr.mxu0 0.0
        %2459 = vmatpush1.xpose.msra.mxu0 0.0
        %2460 = vmatprep.subr.mxu0 0.0
        %2461 = vmatpush1.xpose.msra.mxu0 0.0
        %2462 = vmatprep.subr.mxu0 0.0
        %2463 = vmatpush1.xpose.msra.mxu0 0.0
        %2464 = vmatprep.subr.mxu0 0.0
        %2465 = vmatpush1.xpose.msra.mxu0 0.0
        %2466 = vmatprep.subr.mxu0 0.0
        %2467 = vmatpush1.xpose.msra.mxu0 0.0
        %2468 = vmatprep.subr.mxu0 0.0
        %2469 = vmatpush1.xpose.msra.mxu0 0.0
        %2470 = vmatprep.subr.mxu0 0.0
        %2471 = vmatpush1.xpose.msra.mxu0 0.0
        %2472 = vmatprep.subr.mxu0 0.0
        %2473 = vmatpush1.xpose.msra.mxu0 0.0
        %2474 = vmatprep.subr.mxu0 0.0
        %2475 = vmatpush1.xpose.msra.mxu0 0.0
        %2476 = vmatprep.subr.mxu0 0.0
        %2477 = vmatpush1.xpose.msra.mxu0 0.0
        %2478 = vmatprep.subr.mxu0 0.0
        %2479 = vmatpush1.xpose.msra.mxu0 0.0
        %2480 = vmatprep.subr.mxu0 0.0
        %2481 = vmatpush1.xpose.msra.mxu0 0.0
        %2482 = vmatprep.subr.mxu0 0.0
        %2483 = vmatpush1.xpose.msra.mxu0 0.0
        %2484 = vmatprep.mubr.f32.mxu0 0.0
        %2485 = vmatmul.mubr.f32.gmra.mrb[0].mxu0 %v2415
        %v2486 = vpop.f32.mrb[0].mxu0
        %v2487 = vadd.f32 0.0, %v2486
        %v2488 = vpop.f32.mrb[0].mxu0
        %2489 = vdwg.mxu0
        %v2490 = vsel %vm848, %v2487, -inf
        %2491 = vmax.xlane.f32.xlu0 %v2490
        %v2492 = vpop.xlane.xlu0 %2491
        %v2493 = vsub.f32 %v2487, %v2492
        %v2494 = vmul.f32 %v2493, 1.442695
        %v2495 = vpow.pop %v2494
        %v2496 = vsel %vm848, %v2495, 0.0
        %2497 = vadd.xlane.f32.xlu0 %v2496
        %v2498 = vpop.xlane.xlu0 %2497
        %v2499 = vrcp.pop %v2498
        %v2500 = vmul.f32 %v2495, %v2499
        %v2502 = vsel %vm848, %v2500, 0
        %2504 = vmatprep.subr.mxu0 0.0
        %2505 = vmatpush1.msra.mxu0 %v2410
        %2506 = vmatprep.subr.mxu0 0.0
        %2507 = vmatpush1.msra.mxu0 0.0
        %2508 = vmatprep.subr.mxu0 0.0
        %2509 = vmatpush1.msra.mxu0 0.0
        %2510 = vmatprep.subr.mxu0 0.0
        %2511 = vmatpush1.msra.mxu0 0.0
        %2512 = vmatprep.subr.mxu0 0.0
        %2513 = vmatpush1.msra.mxu0 0.0
        %2514 = vmatprep.subr.mxu0 0.0
        %2515 = vmatpush1.msra.mxu0 0.0
        %2516 = vmatprep.subr.mxu0 0.0
        %2517 = vmatpush1.msra.mxu0 0.0
        %2518 = vmatprep.subr.mxu0 0.0
        %2519 = vmatpush1.msra.mxu0 0.0
        %2520 = vmatprep.subr.mxu0 0.0
        %2521 = vmatpush1.msra.mxu0 0.0
        %2522 = vmatprep.subr.mxu0 0.0
        %2523 = vmatpush1.msra.mxu0 0.0
        %2524 = vmatprep.subr.mxu0 0.0
        %2525 = vmatpush1.msra.mxu0 0.0
        %2526 = vmatprep.subr.mxu0 0.0
        %2527 = vmatpush1.msra.mxu0 0.0
        %2528 = vmatprep.subr.mxu0 0.0
        %2529 = vmatpush1.msra.mxu0 0.0
        %2530 = vmatprep.subr.mxu0 0.0
        %2531 = vmatpush1.msra.mxu0 0.0
        %2532 = vmatprep.subr.mxu0 0.0
        %2533 = vmatpush1.msra.mxu0 0.0
        %2534 = vmatprep.subr.mxu0 0.0
        %2535 = vmatpush1.msra.mxu0 0.0
        %2536 = vmatprep.subr.mxu0 0.0
        %2537 = vmatpush1.msra.mxu0 0.0
        %2538 = vmatprep.subr.mxu0 0.0
        %2539 = vmatpush1.msra.mxu0 0.0
        %2540 = vmatprep.subr.mxu0 0.0
        %2541 = vmatpush1.msra.mxu0 0.0
        %2542 = vmatprep.subr.mxu0 0.0
        %2543 = vmatpush1.msra.mxu0 0.0
        %2544 = vmatprep.subr.mxu0 0.0
        %2545 = vmatpush1.msra.mxu0 0.0
        %2546 = vmatprep.subr.mxu0 0.0
        %2547 = vmatpush1.msra.mxu0 0.0
        %2548 = vmatprep.subr.mxu0 0.0
        %2549 = vmatpush1.msra.mxu0 0.0
        %2550 = vmatprep.subr.mxu0 0.0
        %2551 = vmatpush1.msra.mxu0 0.0
        %2552 = vmatprep.subr.mxu0 0.0
        %2553 = vmatpush1.msra.mxu0 0.0
        %2554 = vmatprep.subr.mxu0 0.0
        %2555 = vmatpush1.msra.mxu0 0.0
        %2556 = vmatprep.subr.mxu0 0.0
        %2557 = vmatpush1.msra.mxu0 0.0
        %2558 = vmatprep.subr.mxu0 0.0
        %2559 = vmatpush1.msra.mxu0 0.0
        %2560 = vmatprep.subr.mxu0 0.0
        %2561 = vmatpush1.msra.mxu0 0.0
        %2562 = vmatprep.subr.mxu0 0.0
        %2563 = vmatpush1.msra.mxu0 0.0
        %2564 = vmatprep.subr.mxu0 0.0
        %2565 = vmatpush1.msra.mxu0 0.0
        %2566 = vmatprep.subr.mxu0 0.0
        %2567 = vmatpush1.msra.mxu0 0.0
        %2568 = vmatprep.mubr.f32.mxu0 0.0
        %2569 = vmatmul.mubr.f32.gmra.mrb[0].mxu0 %v2502
        %v2570 = vpop.f32.mrb[0].mxu0
        %v2571 = vadd.f32 0.0, %v2570
        %v2572 = vpop.f32.mrb[0].mxu0
        %2573 = vdwg.mxu0
        %s2574 = scalar_lea.vmem %s5, 24
        %v2575 = vld [vmem:[%s2574] sm:$0xff]
        %v2577 = vsel %vm848, %v2571, 0
        %2579 = vmatprep.subr.mxu0 0.0
        %2580 = vmatpush1.msra.mxu0 %v2575
        %2581 = vmatprep.subr.mxu0 0.0
        %2582 = vmatpush1.msra.mxu0 0.0
        %2583 = vmatprep.subr.mxu0 0.0
        %2584 = vmatpush1.msra.mxu0 0.0
        %2585 = vmatprep.subr.mxu0 0.0
        %2586 = vmatpush1.msra.mxu0 0.0
        %2587 = vmatprep.subr.mxu0 0.0
        %2588 = vmatpush1.msra.mxu0 0.0
        %2589 = vmatprep.subr.mxu0 0.0
        %2590 = vmatpush1.msra.mxu0 0.0
        %2591 = vmatprep.subr.mxu0 0.0
        %2592 = vmatpush1.msra.mxu0 0.0
        %2593 = vmatprep.subr.mxu0 0.0
        %2594 = vmatpush1.msra.mxu0 0.0
        %2595 = vmatprep.subr.mxu0 0.0
        %2596 = vmatpush1.msra.mxu0 0.0
        %2597 = vmatprep.subr.mxu0 0.0
        %2598 = vmatpush1.msra.mxu0 0.0
        %2599 = vmatprep.subr.mxu0 0.0
        %2600 = vmatpush1.msra.mxu0 0.0
        %2601 = vmatprep.subr.mxu0 0.0
        %2602 = vmatpush1.msra.mxu0 0.0
        %2603 = vmatprep.subr.mxu0 0.0
        %2604 = vmatpush1.msra.mxu0 0.0
        %2605 = vmatprep.subr.mxu0 0.0
        %2606 = vmatpush1.msra.mxu0 0.0
        %2607 = vmatprep.subr.mxu0 0.0
        %2608 = vmatpush1.msra.mxu0 0.0
        %2609 = vmatprep.subr.mxu0 0.0
        %2610 = vmatpush1.msra.mxu0 0.0
        %2611 = vmatprep.subr.mxu0 0.0
        %2612 = vmatpush1.msra.mxu0 0.0
        %2613 = vmatprep.subr.mxu0 0.0
        %2614 = vmatpush1.msra.mxu0 0.0
        %2615 = vmatprep.subr.mxu0 0.0
        %2616 = vmatpush1.msra.mxu0 0.0
        %2617 = vmatprep.subr.mxu0 0.0
        %2618 = vmatpush1.msra.mxu0 0.0
        %2619 = vmatprep.subr.mxu0 0.0
        %2620 = vmatpush1.msra.mxu0 0.0
        %2621 = vmatprep.subr.mxu0 0.0
        %2622 = vmatpush1.msra.mxu0 0.0
        %2623 = vmatprep.subr.mxu0 0.0
        %2624 = vmatpush1.msra.mxu0 0.0
        %2625 = vmatprep.subr.mxu0 0.0
        %2626 = vmatpush1.msra.mxu0 0.0
        %2627 = vmatprep.subr.mxu0 0.0
        %2628 = vmatpush1.msra.mxu0 0.0
        %2629 = vmatprep.subr.mxu0 0.0
        %2630 = vmatpush1.msra.mxu0 0.0
        %2631 = vmatprep.subr.mxu0 0.0
        %2632 = vmatpush1.msra.mxu0 0.0
        %2633 = vmatprep.subr.mxu0 0.0
        %2634 = vmatpush1.msra.mxu0 0.0
        %2635 = vmatprep.subr.mxu0 0.0
        %2636 = vmatpush1.msra.mxu0 0.0
        %2637 = vmatprep.subr.mxu0 0.0
        %2638 = vmatpush1.msra.mxu0 0.0
        %2639 = vmatprep.subr.mxu0 0.0
        %2640 = vmatpush1.msra.mxu0 0.0
        %2641 = vmatprep.subr.mxu0 0.0
        %2642 = vmatpush1.msra.mxu0 0.0
        %2643 = vmatprep.mubr.f32.mxu0 0.0
        %2644 = vmatmul.mubr.f32.gmra.mrb[0].mxu0 %v2577
        %v2645 = vpop.f32.mrb[0].mxu0
        %v2646 = vadd.f32 0.0, %v2645
        %v2647 = vpop.f32.mrb[0].mxu0
        %2648 = vdwg.mxu0
        %v2649 = vadd.f32 %v2127, %v2646
        %s2650 = scalar_lea.vmem %s3, 512
        %v2651 = vld [vmem:[%s2650] sm:$0xff]
        %v2652 = vld [vmem:[%s2650 + $0x8] sm:$0xff]
        %v2653 = vld [vmem:[%s2650 + $0x10] sm:$0xff]
        %v2654 = vld [vmem:[%s2650 + $0x18] sm:$0xff]
        %v2655 = vld [vmem:[%s2650 + $0x20] sm:$0xff]
        %v2656 = vld [vmem:[%s2650 + $0x28] sm:$0xff]
        %v2657 = vld [vmem:[%s2650 + $0x30] sm:$0xff]
        %v2658 = vld [vmem:[%s2650 + $0x38] sm:$0xff]
        %v2659 = vld [vmem:[%s2650 + $0x40] sm:$0xff]
        %v2660 = vld [vmem:[%s2650 + $0x48] sm:$0xff]
        %v2661 = vld [vmem:[%s2650 + $0x50] sm:$0xff]
        %v2662 = vld [vmem:[%s2650 + $0x58] sm:$0xff]
        %v2663 = vld [vmem:[%s2650 + $0x60] sm:$0xff]
        %v2664 = vld [vmem:[%s2650 + $0x68] sm:$0xff]
        %v2665 = vld [vmem:[%s2650 + $0x70] sm:$0xff]
        %v2666 = vld [vmem:[%s2650 + $0x78] sm:$0xff]
        %s2667 = scalar_lea.vmem %s4, 4
        %v2668 = vld [vmem:[%s2667] sm:$0x1]
        %v2670 = vlaneseq
        %v2671 = vshrl.u32 %v2670, 7
        %v2672 = vsub.s32 0, %v2671
        %v2673 = vrot.slane %v2668, %v2672
        %2675 = vmatprep.subr.mxu0 0.0
        %2676 = vmatpush1.msra.mxu0 %v2651
        %2677 = vmatprep.subr.mxu0 0.0
        %2678 = vmatpush1.msra.mxu0 %v2652
        %2679 = vmatprep.subr.mxu0 0.0
        %2680 = vmatpush1.msra.mxu0 %v2653
        %2681 = vmatprep.subr.mxu0 0.0
        %2682 = vmatpush1.msra.mxu0 %v2654
        %2683 = vmatprep.subr.mxu0 0.0
        %2684 = vmatpush1.msra.mxu0 %v2655
        %2685 = vmatprep.subr.mxu0 0.0
        %2686 = vmatpush1.msra.mxu0 %v2656
        %2687 = vmatprep.subr.mxu0 0.0
        %2688 = vmatpush1.msra.mxu0 %v2657
        %2689 = vmatprep.subr.mxu0 0.0
        %2690 = vmatpush1.msra.mxu0 %v2658
        %2691 = vmatprep.subr.mxu0 0.0
        %2692 = vmatpush1.msra.mxu0 %v2659
        %2693 = vmatprep.subr.mxu0 0.0
        %2694 = vmatpush1.msra.mxu0 %v2660
        %2695 = vmatprep.subr.mxu0 0.0
        %2696 = vmatpush1.msra.mxu0 %v2661
        %2697 = vmatprep.subr.mxu0 0.0
        %2698 = vmatpush1.msra.mxu0 %v2662
        %2699 = vmatprep.subr.mxu0 0.0
        %2700 = vmatpush1.msra.mxu0 %v2663
        %2701 = vmatprep.subr.mxu0 0.0
        %2702 = vmatpush1.msra.mxu0 %v2664
        %2703 = vmatprep.subr.mxu0 0.0
        %2704 = vmatpush1.msra.mxu0 %v2665
        %2705 = vmatprep.subr.mxu0 0.0
        %2706 = vmatpush1.msra.mxu0 %v2666
        %2707 = vmatprep.subr.mxu0 0.0
        %2708 = vmatpush1.msra.mxu0 0.0
        %2709 = vmatprep.subr.mxu0 0.0
        %2710 = vmatpush1.msra.mxu0 0.0
        %2711 = vmatprep.subr.mxu0 0.0
        %2712 = vmatpush1.msra.mxu0 0.0
        %2713 = vmatprep.subr.mxu0 0.0
        %2714 = vmatpush1.msra.mxu0 0.0
        %2715 = vmatprep.subr.mxu0 0.0
        %2716 = vmatpush1.msra.mxu0 0.0
        %2717 = vmatprep.subr.mxu0 0.0
        %2718 = vmatpush1.msra.mxu0 0.0
        %2719 = vmatprep.subr.mxu0 0.0
        %2720 = vmatpush1.msra.mxu0 0.0
        %2721 = vmatprep.subr.mxu0 0.0
        %2722 = vmatpush1.msra.mxu0 0.0
        %2723 = vmatprep.subr.mxu0 0.0
        %2724 = vmatpush1.msra.mxu0 0.0
        %2725 = vmatprep.subr.mxu0 0.0
        %2726 = vmatpush1.msra.mxu0 0.0
        %2727 = vmatprep.subr.mxu0 0.0
        %2728 = vmatpush1.msra.mxu0 0.0
        %2729 = vmatprep.subr.mxu0 0.0
        %2730 = vmatpush1.msra.mxu0 0.0
        %2731 = vmatprep.subr.mxu0 0.0
        %2732 = vmatpush1.msra.mxu0 0.0
        %2733 = vmatprep.subr.mxu0 0.0
        %2734 = vmatpush1.msra.mxu0 0.0
        %2735 = vmatprep.subr.mxu0 0.0
        %2736 = vmatpush1.msra.mxu0 0.0
        %2737 = vmatprep.subr.mxu0 0.0
        %2738 = vmatpush1.msra.mxu0 0.0
        %2739 = vmatprep.mubr.f32.mxu0 0.0
        %2740 = vmatmul.mubr.f32.gmra.mrb[0].mxu0 %v556
        %v2741 = vpop.f32.mrb[0].mxu0
        %v2742 = vadd.f32 %v2673, %v2741
        %v2743 = vpop.f32.mrb[0].mxu0
        %2744 = vdwg.mxu0
        %s2745 = scalar_lea.vmem %s3, 1152
        %v2746 = vld [vmem:[%s2745] sm:$0xff]
        %v2747 = vld [vmem:[%s2745 + $0x8] sm:$0xff]
        %v2748 = vld [vmem:[%s2745 + $0x10] sm:$0xff]
        %v2749 = vld [vmem:[%s2745 + $0x18] sm:$0xff]
        %v2750 = vld [vmem:[%s2745 + $0x20] sm:$0xff]
        %v2751 = vld [vmem:[%s2745 + $0x28] sm:$0xff]
        %v2752 = vld [vmem:[%s2745 + $0x30] sm:$0xff]
        %v2753 = vld [vmem:[%s2745 + $0x38] sm:$0xff]
        %v2754 = vld [vmem:[%s2745 + $0x40] sm:$0xff]
        %v2755 = vld [vmem:[%s2745 + $0x48] sm:$0xff]
        %v2756 = vld [vmem:[%s2745 + $0x50] sm:$0xff]
        %v2757 = vld [vmem:[%s2745 + $0x58] sm:$0xff]
        %v2758 = vld [vmem:[%s2745 + $0x60] sm:$0xff]
        %v2759 = vld [vmem:[%s2745 + $0x68] sm:$0xff]
        %v2760 = vld [vmem:[%s2745 + $0x70] sm:$0xff]
        %v2761 = vld [vmem:[%s2745 + $0x78] sm:$0xff]
        %s2762 = scalar_lea.vmem %s4, 9
        %v2763 = vld [vmem:[%s2762] sm:$0x1]
        %v2765 = vlaneseq
        %v2766 = vshrl.u32 %v2765, 7
        %v2767 = vsub.s32 0, %v2766
        %v2768 = vrot.slane %v2763, %v2767
        %2770 = vmatprep.subr.mxu0 0.0
        %2771 = vmatpush1.msra.mxu0 %v2746
        %2772 = vmatprep.subr.mxu0 0.0
        %2773 = vmatpush1.msra.mxu0 %v2747
        %2774 = vmatprep.subr.mxu0 0.0
        %2775 = vmatpush1.msra.mxu0 %v2748
        %2776 = vmatprep.subr.mxu0 0.0
        %2777 = vmatpush1.msra.mxu0 %v2749
        %2778 = vmatprep.subr.mxu0 0.0
        %2779 = vmatpush1.msra.mxu0 %v2750
        %2780 = vmatprep.subr.mxu0 0.0
        %2781 = vmatpush1.msra.mxu0 %v2751
        %2782 = vmatprep.subr.mxu0 0.0
        %2783 = vmatpush1.msra.mxu0 %v2752
        %2784 = vmatprep.subr.mxu0 0.0
        %2785 = vmatpush1.msra.mxu0 %v2753
        %2786 = vmatprep.subr.mxu0 0.0
        %2787 = vmatpush1.msra.mxu0 %v2754
        %2788 = vmatprep.subr.mxu0 0.0
        %2789 = vmatpush1.msra.mxu0 %v2755
        %2790 = vmatprep.subr.mxu0 0.0
        %2791 = vmatpush1.msra.mxu0 %v2756
        %2792 = vmatprep.subr.mxu0 0.0
        %2793 = vmatpush1.msra.mxu0 %v2757
        %2794 = vmatprep.subr.mxu0 0.0
        %2795 = vmatpush1.msra.mxu0 %v2758
        %2796 = vmatprep.subr.mxu0 0.0
        %2797 = vmatpush1.msra.mxu0 %v2759
        %2798 = vmatprep.subr.mxu0 0.0
        %2799 = vmatpush1.msra.mxu0 %v2760
        %2800 = vmatprep.subr.mxu0 0.0
        %2801 = vmatpush1.msra.mxu0 %v2761
        %2802 = vmatprep.subr.mxu0 0.0
        %2803 = vmatpush1.msra.mxu0 0.0
        %2804 = vmatprep.subr.mxu0 0.0
        %2805 = vmatpush1.msra.mxu0 0.0
        %2806 = vmatprep.subr.mxu0 0.0
        %2807 = vmatpush1.msra.mxu0 0.0
        %2808 = vmatprep.subr.mxu0 0.0
        %2809 = vmatpush1.msra.mxu0 0.0
        %2810 = vmatprep.subr.mxu0 0.0
        %2811 = vmatpush1.msra.mxu0 0.0
        %2812 = vmatprep.subr.mxu0 0.0
        %2813 = vmatpush1.msra.mxu0 0.0
        %2814 = vmatprep.subr.mxu0 0.0
        %2815 = vmatpush1.msra.mxu0 0.0
        %2816 = vmatprep.subr.mxu0 0.0
        %2817 = vmatpush1.msra.mxu0 0.0
        %2818 = vmatprep.subr.mxu0 0.0
        %2819 = vmatpush1.msra.mxu0 0.0
        %2820 = vmatprep.subr.mxu0 0.0
        %2821 = vmatpush1.msra.mxu0 0.0
        %2822 = vmatprep.subr.mxu0 0.0
        %2823 = vmatpush1.msra.mxu0 0.0
        %2824 = vmatprep.subr.mxu0 0.0
        %2825 = vmatpush1.msra.mxu0 0.0
        %2826 = vmatprep.subr.mxu0 0.0
        %2827 = vmatpush1.msra.mxu0 0.0
        %2828 = vmatprep.subr.mxu0 0.0
        %2829 = vmatpush1.msra.mxu0 0.0
        %2830 = vmatprep.subr.mxu0 0.0
        %2831 = vmatpush1.msra.mxu0 0.0
        %2832 = vmatprep.subr.mxu0 0.0
        %2833 = vmatpush1.msra.mxu0 0.0
        %2834 = vmatprep.mubr.f32.mxu0 0.0
        %2835 = vmatmul.mubr.f32.gmra.mrb[0].mxu0 %v556
        %v2836 = vpop.f32.mrb[0].mxu0
        %v2837 = vadd.f32 %v2768, %v2836
        %v2838 = vpop.f32.mrb[0].mxu0
        %2839 = vdwg.mxu0
        %s2840 = scalar_lea.vmem %s3, 1792
        %v2841 = vld [vmem:[%s2840] sm:$0xff]
        %v2842 = vld [vmem:[%s2840 + $0x8] sm:$0xff]
        %v2843 = vld [vmem:[%s2840 + $0x10] sm:$0xff]
        %v2844 = vld [vmem:[%s2840 + $0x18] sm:$0xff]
        %v2845 = vld [vmem:[%s2840 + $0x20] sm:$0xff]
        %v2846 = vld [vmem:[%s2840 + $0x28] sm:$0xff]
        %v2847 = vld [vmem:[%s2840 + $0x30] sm:$0xff]
        %v2848 = vld [vmem:[%s2840 + $0x38] sm:$0xff]
        %v2849 = vld [vmem:[%s2840 + $0x40] sm:$0xff]
        %v2850 = vld [vmem:[%s2840 + $0x48] sm:$0xff]
        %v2851 = vld [vmem:[%s2840 + $0x50] sm:$0xff]
        %v2852 = vld [vmem:[%s2840 + $0x58] sm:$0xff]
        %v2853 = vld [vmem:[%s2840 + $0x60] sm:$0xff]
        %v2854 = vld [vmem:[%s2840 + $0x68] sm:$0xff]
        %v2855 = vld [vmem:[%s2840 + $0x70] sm:$0xff]
        %v2856 = vld [vmem:[%s2840 + $0x78] sm:$0xff]
        %s2857 = scalar_lea.vmem %s4, 14
        %v2858 = vld [vmem:[%s2857] sm:$0x1]
        %v2860 = vlaneseq
        %v2861 = vshrl.u32 %v2860, 7
        %v2862 = vsub.s32 0, %v2861
        %v2863 = vrot.slane %v2858, %v2862
        %2865 = vmatprep.subr.mxu0 0.0
        %2866 = vmatpush1.msra.mxu0 %v2841
        %2867 = vmatprep.subr.mxu0 0.0
        %2868 = vmatpush1.msra.mxu0 %v2842
        %2869 = vmatprep.subr.mxu0 0.0
        %2870 = vmatpush1.msra.mxu0 %v2843
        %2871 = vmatprep.subr.mxu0 0.0
        %2872 = vmatpush1.msra.mxu0 %v2844
        %2873 = vmatprep.subr.mxu0 0.0
        %2874 = vmatpush1.msra.mxu0 %v2845
        %2875 = vmatprep.subr.mxu0 0.0
        %2876 = vmatpush1.msra.mxu0 %v2846
        %2877 = vmatprep.subr.mxu0 0.0
        %2878 = vmatpush1.msra.mxu0 %v2847
        %2879 = vmatprep.subr.mxu0 0.0
        %2880 = vmatpush1.msra.mxu0 %v2848
        %2881 = vmatprep.subr.mxu0 0.0
        %2882 = vmatpush1.msra.mxu0 %v2849
        %2883 = vmatprep.subr.mxu0 0.0
        %2884 = vmatpush1.msra.mxu0 %v2850
        %2885 = vmatprep.subr.mxu0 0.0
        %2886 = vmatpush1.msra.mxu0 %v2851
        %2887 = vmatprep.subr.mxu0 0.0
        %2888 = vmatpush1.msra.mxu0 %v2852
        %2889 = vmatprep.subr.mxu0 0.0
        %2890 = vmatpush1.msra.mxu0 %v2853
        %2891 = vmatprep.subr.mxu0 0.0
        %2892 = vmatpush1.msra.mxu0 %v2854
        %2893 = vmatprep.subr.mxu0 0.0
        %2894 = vmatpush1.msra.mxu0 %v2855
        %2895 = vmatprep.subr.mxu0 0.0
        %2896 = vmatpush1.msra.mxu0 %v2856
        %2897 = vmatprep.subr.mxu0 0.0
        %2898 = vmatpush1.msra.mxu0 0.0
        %2899 = vmatprep.subr.mxu0 0.0
        %2900 = vmatpush1.msra.mxu0 0.0
        %2901 = vmatprep.subr.mxu0 0.0
        %2902 = vmatpush1.msra.mxu0 0.0
        %2903 = vmatprep.subr.mxu0 0.0
        %2904 = vmatpush1.msra.mxu0 0.0
        %2905 = vmatprep.subr.mxu0 0.0
        %2906 = vmatpush1.msra.mxu0 0.0
        %2907 = vmatprep.subr.mxu0 0.0
        %2908 = vmatpush1.msra.mxu0 0.0
        %2909 = vmatprep.subr.mxu0 0.0
        %2910 = vmatpush1.msra.mxu0 0.0
        %2911 = vmatprep.subr.mxu0 0.0
        %2912 = vmatpush1.msra.mxu0 0.0
        %2913 = vmatprep.subr.mxu0 0.0
        %2914 = vmatpush1.msra.mxu0 0.0
        %2915 = vmatprep.subr.mxu0 0.0
        %2916 = vmatpush1.msra.mxu0 0.0
        %2917 = vmatprep.subr.mxu0 0.0
        %2918 = vmatpush1.msra.mxu0 0.0
        %2919 = vmatprep.subr.mxu0 0.0
        %2920 = vmatpush1.msra.mxu0 0.0
        %2921 = vmatprep.subr.mxu0 0.0
        %2922 = vmatpush1.msra.mxu0 0.0
        %2923 = vmatprep.subr.mxu0 0.0
        %2924 = vmatpush1.msra.mxu0 0.0
        %2925 = vmatprep.subr.mxu0 0.0
        %2926 = vmatpush1.msra.mxu0 0.0
        %2927 = vmatprep.subr.mxu0 0.0
        %2928 = vmatpush1.msra.mxu0 0.0
        %2929 = vmatprep.mubr.f32.mxu0 0.0
        %2930 = vmatmul.mubr.f32.gmra.mrb[0].mxu0 %v556
        %v2931 = vpop.f32.mrb[0].mxu0
        %v2932 = vadd.f32 %v2863, %v2931
        %v2933 = vpop.f32.mrb[0].mxu0
        %2934 = vdwg.mxu0
        %v2935 = vmul.f32 %v2742, 0.35355338
        %v2937 = vsel %vm848, %v2935, 0
        %v2940 = vsel %vm848, %v2837, 0
        %2942 = vmatprep.subr.mxu0 0.0
        %2943 = vmatpush1.xpose.msra.mxu0 %v2940
        %2944 = vmatprep.subr.mxu0 0.0
        %2945 = vmatpush1.xpose.msra.mxu0 0.0
        %2946 = vmatprep.subr.mxu0 0.0
        %2947 = vmatpush1.xpose.msra.mxu0 0.0
        %2948 = vmatprep.subr.mxu0 0.0
        %2949 = vmatpush1.xpose.msra.mxu0 0.0
        %2950 = vmatprep.subr.mxu0 0.0
        %2951 = vmatpush1.xpose.msra.mxu0 0.0
        %2952 = vmatprep.subr.mxu0 0.0
        %2953 = vmatpush1.xpose.msra.mxu0 0.0
        %2954 = vmatprep.subr.mxu0 0.0
        %2955 = vmatpush1.xpose.msra.mxu0 0.0
        %2956 = vmatprep.subr.mxu0 0.0
        %2957 = vmatpush1.xpose.msra.mxu0 0.0
        %2958 = vmatprep.subr.mxu0 0.0
        %2959 = vmatpush1.xpose.msra.mxu0 0.0
        %2960 = vmatprep.subr.mxu0 0.0
        %2961 = vmatpush1.xpose.msra.mxu0 0.0
        %2962 = vmatprep.subr.mxu0 0.0
        %2963 = vmatpush1.xpose.msra.mxu0 0.0
        %2964 = vmatprep.subr.mxu0 0.0
        %2965 = vmatpush1.xpose.msra.mxu0 0.0
        %2966 = vmatprep.subr.mxu0 0.0
        %2967 = vmatpush1.xpose.msra.mxu0 0.0
        %2968 = vmatprep.subr.mxu0 0.0
        %2969 = vmatpush1.xpose.msra.mxu0 0.0
        %2970 = vmatprep.subr.mxu0 0.0
        %2971 = vmatpush1.xpose.msra.mxu0 0.0
        %2972 = vmatprep.subr.mxu0 0.0
        %2973 = vmatpush1.xpose.msra.mxu0 0.0
        %2974 = vmatprep.subr.mxu0 0.0
        %2975 = vmatpush1.xpose.msra.mxu0 0.0
        %2976 = vmatprep.subr.mxu0 0.0
        %2977 = vmatpush1.xpose.msra.mxu0 0.0
        %2978 = vmatprep.subr.mxu0 0.0
        %2979 = vmatpush1.xpose.msra.mxu0 0.0
        %2980 = vmatprep.subr.mxu0 0.0
        %2981 = vmatpush1.xpose.msra.mxu0 0.0
        %2982 = vmatprep.subr.mxu0 0.0
        %2983 = vmatpush1.xpose.msra.mxu0 0.0
        %2984 = vmatprep.subr.mxu0 0.0
        %2985 = vmatpush1.xpose.msra.mxu0 0.0
        %2986 = vmatprep.subr.mxu0 0.0
        %2987 = vmatpush1.xpose.msra.mxu0 0.0
        %2988 = vmatprep.subr.mxu0 0.0
        %2989 = vmatpush1.xpose.msra.mxu0 0.0
        %2990 = vmatprep.subr.mxu0 0.0
        %2991 = vmatpush1.xpose.msra.mxu0 0.0
        %2992 = vmatprep.subr.mxu0 0.0
        %2993 = vmatpush1.xpose.msra.mxu0 0.0
        %2994 = vmatprep.subr.mxu0 0.0
        %2995 = vmatpush1.xpose.msra.mxu0 0.0
        %2996 = vmatprep.subr.mxu0 0.0
        %2997 = vmatpush1.xpose.msra.mxu0 0.0
        %2998 = vmatprep.subr.mxu0 0.0
        %2999 = vmatpush1.xpose.msra.mxu0 0.0
        %3000 = vmatprep.subr.mxu0 0.0
        %3001 = vmatpush1.xpose.msra.mxu0 0.0
        %3002 = vmatprep.subr.mxu0 0.0
        %3003 = vmatpush1.xpose.msra.mxu0 0.0
        %3004 = vmatprep.subr.mxu0 0.0
        %3005 = vmatpush1.xpose.msra.mxu0 0.0
        %3006 = vmatprep.mubr.f32.mxu0 0.0
        %3007 = vmatmul.mubr.f32.gmra.mrb[0].mxu0 %v2937
        %v3008 = vpop.f32.mrb[0].mxu0
        %v3009 = vadd.f32 0.0, %v3008
        %v3010 = vpop.f32.mrb[0].mxu0
        %3011 = vdwg.mxu0
        %v3012 = vsel %vm848, %v3009, -inf
        %3013 = vmax.xlane.f32.xlu0 %v3012
        %v3014 = vpop.xlane.xlu0 %3013
        %v3015 = vsub.f32 %v3009, %v3014
        %v3016 = vmul.f32 %v3015, 1.442695
        %v3017 = vpow.pop %v3016
        %v3018 = vsel %vm848, %v3017, 0.0
        %3019 = vadd.xlane.f32.xlu0 %v3018
        %v3020 = vpop.xlane.xlu0 %3019
        %v3021 = vrcp.pop %v3020
        %v3022 = vmul.f32 %v3017, %v3021
        %v3024 = vsel %vm848, %v3022, 0
        %3026 = vmatprep.subr.mxu0 0.0
        %3027 = vmatpush1.msra.mxu0 %v2932
        %3028 = vmatprep.subr.mxu0 0.0
        %3029 = vmatpush1.msra.mxu0 0.0
        %3030 = vmatprep.subr.mxu0 0.0
        %3031 = vmatpush1.msra.mxu0 0.0
        %3032 = vmatprep.subr.mxu0 0.0
        %3033 = vmatpush1.msra.mxu0 0.0
        %3034 = vmatprep.subr.mxu0 0.0
        %3035 = vmatpush1.msra.mxu0 0.0
        %3036 = vmatprep.subr.mxu0 0.0
        %3037 = vmatpush1.msra.mxu0 0.0
        %3038 = vmatprep.subr.mxu0 0.0
        %3039 = vmatpush1.msra.mxu0 0.0
        %3040 = vmatprep.subr.mxu0 0.0
        %3041 = vmatpush1.msra.mxu0 0.0
        %3042 = vmatprep.subr.mxu0 0.0
        %3043 = vmatpush1.msra.mxu0 0.0
        %3044 = vmatprep.subr.mxu0 0.0
        %3045 = vmatpush1.msra.mxu0 0.0
        %3046 = vmatprep.subr.mxu0 0.0
        %3047 = vmatpush1.msra.mxu0 0.0
        %3048 = vmatprep.subr.mxu0 0.0
        %3049 = vmatpush1.msra.mxu0 0.0
        %3050 = vmatprep.subr.mxu0 0.0
        %3051 = vmatpush1.msra.mxu0 0.0
        %3052 = vmatprep.subr.mxu0 0.0
        %3053 = vmatpush1.msra.mxu0 0.0
        %3054 = vmatprep.subr.mxu0 0.0
        %3055 = vmatpush1.msra.mxu0 0.0
        %3056 = vmatprep.subr.mxu0 0.0
        %3057 = vmatpush1.msra.mxu0 0.0
        %3058 = vmatprep.subr.mxu0 0.0
        %3059 = vmatpush1.msra.mxu0 0.0
        %3060 = vmatprep.subr.mxu0 0.0
        %3061 = vmatpush1.msra.mxu0 0.0
        %3062 = vmatprep.subr.mxu0 0.0
        %3063 = vmatpush1.msra.mxu0 0.0
        %3064 = vmatprep.subr.mxu0 0.0
        %3065 = vmatpush1.msra.mxu0 0.0
        %3066 = vmatprep.subr.mxu0 0.0
        %3067 = vmatpush1.msra.mxu0 0.0
        %3068 = vmatprep.subr.mxu0 0.0
        %3069 = vmatpush1.msra.mxu0 0.0
        %3070 = vmatprep.subr.mxu0 0.0
        %3071 = vmatpush1.msra.mxu0 0.0
        %3072 = vmatprep.subr.mxu0 0.0
        %3073 = vmatpush1.msra.mxu0 0.0
        %3074 = vmatprep.subr.mxu0 0.0
        %3075 = vmatpush1.msra.mxu0 0.0
        %3076 = vmatprep.subr.mxu0 0.0
        %3077 = vmatpush1.msra.mxu0 0.0
        %3078 = vmatprep.subr.mxu0 0.0
        %3079 = vmatpush1.msra.mxu0 0.0
        %3080 = vmatprep.subr.mxu0 0.0
        %3081 = vmatpush1.msra.mxu0 0.0
        %3082 = vmatprep.subr.mxu0 0.0
        %3083 = vmatpush1.msra.mxu0 0.0
        %3084 = vmatprep.subr.mxu0 0.0
        %3085 = vmatpush1.msra.mxu0 0.0
        %3086 = vmatprep.subr.mxu0 0.0
        %3087 = vmatpush1.msra.mxu0 0.0
        %3088 = vmatprep.subr.mxu0 0.0
        %3089 = vmatpush1.msra.mxu0 0.0
        %3090 = vmatprep.mubr.f32.mxu0 0.0
        %3091 = vmatmul.mubr.f32.gmra.mrb[0].mxu0 %v3024
        %v3092 = vpop.f32.mrb[0].mxu0
        %v3093 = vadd.f32 0.0, %v3092
        %v3094 = vpop.f32.mrb[0].mxu0
        %3095 = vdwg.mxu0
        %s3096 = scalar_lea.vmem %s5, 32
        %v3097 = vld [vmem:[%s3096] sm:$0xff]
        %v3099 = vsel %vm848, %v3093, 0
        %3101 = vmatprep.subr.mxu0 0.0
        %3102 = vmatpush1.msra.mxu0 %v3097
        %3103 = vmatprep.subr.mxu0 0.0
        %3104 = vmatpush1.msra.mxu0 0.0
        %3105 = vmatprep.subr.mxu0 0.0
        %3106 = vmatpush1.msra.mxu0 0.0
        %3107 = vmatprep.subr.mxu0 0.0
        %3108 = vmatpush1.msra.mxu0 0.0
        %3109 = vmatprep.subr.mxu0 0.0
        %3110 = vmatpush1.msra.mxu0 0.0
        %3111 = vmatprep.subr.mxu0 0.0
        %3112 = vmatpush1.msra.mxu0 0.0
        %3113 = vmatprep.subr.mxu0 0.0
        %3114 = vmatpush1.msra.mxu0 0.0
        %3115 = vmatprep.subr.mxu0 0.0
        %3116 = vmatpush1.msra.mxu0 0.0
        %3117 = vmatprep.subr.mxu0 0.0
        %3118 = vmatpush1.msra.mxu0 0.0
        %3119 = vmatprep.subr.mxu0 0.0
        %3120 = vmatpush1.msra.mxu0 0.0
        %3121 = vmatprep.subr.mxu0 0.0
        %3122 = vmatpush1.msra.mxu0 0.0
        %3123 = vmatprep.subr.mxu0 0.0
        %3124 = vmatpush1.msra.mxu0 0.0
        %3125 = vmatprep.subr.mxu0 0.0
        %3126 = vmatpush1.msra.mxu0 0.0
        %3127 = vmatprep.subr.mxu0 0.0
        %3128 = vmatpush1.msra.mxu0 0.0
        %3129 = vmatprep.subr.mxu0 0.0
        %3130 = vmatpush1.msra.mxu0 0.0
        %3131 = vmatprep.subr.mxu0 0.0
        %3132 = vmatpush1.msra.mxu0 0.0
        %3133 = vmatprep.subr.mxu0 0.0
        %3134 = vmatpush1.msra.mxu0 0.0
        %3135 = vmatprep.subr.mxu0 0.0
        %3136 = vmatpush1.msra.mxu0 0.0
        %3137 = vmatprep.subr.mxu0 0.0
        %3138 = vmatpush1.msra.mxu0 0.0
        %3139 = vmatprep.subr.mxu0 0.0
        %3140 = vmatpush1.msra.mxu0 0.0
        %3141 = vmatprep.subr.mxu0 0.0
        %3142 = vmatpush1.msra.mxu0 0.0
        %3143 = vmatprep.subr.mxu0 0.0
        %3144 = vmatpush1.msra.mxu0 0.0
        %3145 = vmatprep.subr.mxu0 0.0
        %3146 = vmatpush1.msra.mxu0 0.0
        %3147 = vmatprep.subr.mxu0 0.0
        %3148 = vmatpush1.msra.mxu0 0.0
        %3149 = vmatprep.subr.mxu0 0.0
        %3150 = vmatpush1.msra.mxu0 0.0
        %3151 = vmatprep.subr.mxu0 0.0
        %3152 = vmatpush1.msra.mxu0 0.0
        %3153 = vmatprep.subr.mxu0 0.0
        %3154 = vmatpush1.msra.mxu0 0.0
        %3155 = vmatprep.subr.mxu0 0.0
        %3156 = vmatpush1.msra.mxu0 0.0
        %3157 = vmatprep.subr.mxu0 0.0
        %3158 = vmatpush1.msra.mxu0 0.0
        %3159 = vmatprep.subr.mxu0 0.0
        %3160 = vmatpush1.msra.mxu0 0.0
        %3161 = vmatprep.subr.mxu0 0.0
        %3162 = vmatpush1.msra.mxu0 0.0
        %3163 = vmatprep.subr.mxu0 0.0
        %3164 = vmatpush1.msra.mxu0 0.0
        %3165 = vmatprep.mubr.f32.mxu0 0.0
        %3166 = vmatmul.mubr.f32.gmra.mrb[0].mxu0 %v3099
        %v3167 = vpop.f32.mrb[0].mxu0
        %v3168 = vadd.f32 0.0, %v3167
        %v3169 = vpop.f32.mrb[0].mxu0
        %3170 = vdwg.mxu0
        %v3171 = vadd.f32 %v2649, %v3168
        %v3172 = vadd.f32 %v556, %v3171
        %3173 = vadd.xlane.f32.xlu0 %v3172
        %v3174 = vpop.xlane.xlu0 %3173
        %v3175 = vmul.f32 %v3174, 0.025
        %v3176 = vsub.f32 %v3172, %v3175
        %v3177 = vmul.f32 %v3176, %v474
        %v3178 = vmul.f32 %v3177, %v3177
        %3179 = vadd.xlane.f32.xlu0 %v3178
        %v3180 = vpop.xlane.xlu0 %3179
        %v3181 = vmul.f32 %v3180, 0.025
        %v3182 = vadd.f32 %v3181, 1e-05
        %v3183 = vrsqrt.pop %v3182
        %v3184 = vmul.f32 %v3177, %v3183
        %v3185 = vlaneseq
        %v3186 = vshrl.u32 %v3185, 7
        %v3187 = vsub.s32 2, %v3186
        %v3188 = vrot.slane %v559, %v3187
        %v3189 = vmul.f32 %v3184, %v3188
        %v3190 = vlaneseq
        %v3191 = vshrl.u32 %v3190, 7
        %v3192 = vsub.s32 3, %v3191
        %v3193 = vrot.slane %v559, %v3192
        %v3194 = vadd.f32 %v3189, %v3193
        %v3195 = vld [vmem:[%s6] sm:$0xff]
        %v3196 = vld [vmem:[%s6 + $0x8] sm:$0xff]
        %v3197 = vld [vmem:[%s6 + $0x10] sm:$0xff]
        %v3198 = vld [vmem:[%s6 + $0x18] sm:$0xff]
        %v3199 = vld [vmem:[%s6 + $0x20] sm:$0xff]
        %v3200 = vld [vmem:[%s6 + $0x28] sm:$0xff]
        %v3201 = vld [vmem:[%s6 + $0x30] sm:$0xff]
        %v3202 = vld [vmem:[%s6 + $0x38] sm:$0xff]
        %v3203 = vld [vmem:[%s6 + $0x40] sm:$0xff]
        %v3204 = vld [vmem:[%s6 + $0x48] sm:$0xff]
        %v3205 = vld [vmem:[%s6 + $0x50] sm:$0xff]
        %v3206 = vld [vmem:[%s6 + $0x58] sm:$0xff]
        %v3207 = vld [vmem:[%s6 + $0x60] sm:$0xff]
        %v3208 = vld [vmem:[%s6 + $0x68] sm:$0xff]
        %v3209 = vld [vmem:[%s6 + $0x70] sm:$0xff]
        %v3210 = vld [vmem:[%s6 + $0x78] sm:$0xff]
        %v3211 = vld [vmem:[%s6 + $0x80] sm:$0xff]
        %v3212 = vld [vmem:[%s6 + $0x88] sm:$0xff]
        %v3213 = vld [vmem:[%s6 + $0x90] sm:$0xff]
        %v3214 = vld [vmem:[%s6 + $0x98] sm:$0xff]
        %v3215 = vld [vmem:[%s6 + $0xa0] sm:$0xff]
        %v3216 = vld [vmem:[%s6 + $0xa8] sm:$0xff]
        %v3217 = vld [vmem:[%s6 + $0xb0] sm:$0xff]
        %v3218 = vld [vmem:[%s6 + $0xb8] sm:$0xff]
        %v3219 = vld [vmem:[%s6 + $0xc0] sm:$0xff]
        %v3220 = vld [vmem:[%s6 + $0xc8] sm:$0xff]
        %v3221 = vld [vmem:[%s6 + $0xd0] sm:$0xff]
        %v3222 = vld [vmem:[%s6 + $0xd8] sm:$0xff]
        %v3223 = vld [vmem:[%s6 + $0xe0] sm:$0xff]
        %v3224 = vld [vmem:[%s6 + $0xe8] sm:$0xff]
        %v3225 = vld [vmem:[%s6 + $0xf0] sm:$0xff]
        %v3226 = vld [vmem:[%s6 + $0xf8] sm:$0xff]
        %v3227 = vld [vmem:[%s6 + $0x100] sm:$0xff]
        %v3228 = vld [vmem:[%s6 + $0x108] sm:$0xff]
        %v3229 = vld [vmem:[%s6 + $0x110] sm:$0xff]
        %v3230 = vld [vmem:[%s6 + $0x118] sm:$0xff]
        %v3231 = vld [vmem:[%s6 + $0x120] sm:$0xff]
        %v3232 = vld [vmem:[%s6 + $0x128] sm:$0xff]
        %v3233 = vld [vmem:[%s6 + $0x130] sm:$0xff]
        %v3234 = vld [vmem:[%s6 + $0x138] sm:$0xff]
        %v3235 = vld [vmem:[%s6 + $0x140] sm:$0xff]
        %v3236 = vld [vmem:[%s6 + $0x148] sm:$0xff]
        %v3237 = vld [vmem:[%s6 + $0x150] sm:$0xff]
        %v3238 = vld [vmem:[%s6 + $0x158] sm:$0xff]
        %v3239 = vld [vmem:[%s6 + $0x160] sm:$0xff]
        %v3240 = vld [vmem:[%s6 + $0x168] sm:$0xff]
        %v3241 = vld [vmem:[%s6 + $0x170] sm:$0xff]
        %v3242 = vld [vmem:[%s6 + $0x178] sm:$0xff]
        %v3243 = vld [vmem:[%s6 + $0x180] sm:$0xff]
        %v3244 = vld [vmem:[%s6 + $0x188] sm:$0xff]
        %v3245 = vld [vmem:[%s6 + $0x190] sm:$0xff]
        %v3246 = vld [vmem:[%s6 + $0x198] sm:$0xff]
        %v3247 = vld [vmem:[%s6 + $0x1a0] sm:$0xff]
        %v3248 = vld [vmem:[%s6 + $0x1a8] sm:$0xff]
        %v3249 = vld [vmem:[%s6 + $0x1b0] sm:$0xff]
        %v3250 = vld [vmem:[%s6 + $0x1b8] sm:$0xff]
        %v3251 = vld [vmem:[%s6 + $0x1c0] sm:$0xff]
        %v3252 = vld [vmem:[%s6 + $0x1c8] sm:$0xff]
        %v3253 = vld [vmem:[%s6 + $0x1d0] sm:$0xff]
        %v3254 = vld [vmem:[%s6 + $0x1d8] sm:$0xff]
        %v3255 = vld [vmem:[%s6 + $0x1e0] sm:$0xff]
        %v3256 = vld [vmem:[%s6 + $0x1e8] sm:$0xff]
        %v3257 = vld [vmem:[%s6 + $0x1f0] sm:$0xff]
        %v3258 = vld [vmem:[%s6 + $0x1f8] sm:$0xff]
        %v3259 = vld [vmem:[%s6 + $0x200] sm:$0xff]
        %v3260 = vld [vmem:[%s6 + $0x208] sm:$0xff]
        %v3261 = vld [vmem:[%s6 + $0x210] sm:$0xff]
        %v3262 = vld [vmem:[%s6 + $0x218] sm:$0xff]
        %v3263 = vld [vmem:[%s6 + $0x220] sm:$0xff]
        %v3264 = vld [vmem:[%s6 + $0x228] sm:$0xff]
        %v3265 = vld [vmem:[%s6 + $0x230] sm:$0xff]
        %v3266 = vld [vmem:[%s6 + $0x238] sm:$0xff]
        %v3267 = vld [vmem:[%s6 + $0x240] sm:$0xff]
        %v3268 = vld [vmem:[%s6 + $0x248] sm:$0xff]
        %v3269 = vld [vmem:[%s6 + $0x250] sm:$0xff]
        %v3270 = vld [vmem:[%s6 + $0x258] sm:$0xff]
        %v3271 = vld [vmem:[%s6 + $0x260] sm:$0xff]
        %v3272 = vld [vmem:[%s6 + $0x268] sm:$0xff]
        %v3273 = vld [vmem:[%s6 + $0x270] sm:$0xff]
        %v3274 = vld [vmem:[%s6 + $0x278] sm:$0xff]
        %v3275 = vld [vmem:[%s6 + $0x280] sm:$0xff]
        %v3276 = vld [vmem:[%s6 + $0x288] sm:$0xff]
        %v3277 = vld [vmem:[%s6 + $0x290] sm:$0xff]
        %v3278 = vld [vmem:[%s6 + $0x298] sm:$0xff]
        %v3279 = vld [vmem:[%s6 + $0x2a0] sm:$0xff]
        %v3280 = vld [vmem:[%s6 + $0x2a8] sm:$0xff]
        %v3281 = vld [vmem:[%s6 + $0x2b0] sm:$0xff]
        %v3282 = vld [vmem:[%s6 + $0x2b8] sm:$0xff]
        %v3283 = vld [vmem:[%s6 + $0x2c0] sm:$0xff]
        %v3284 = vld [vmem:[%s6 + $0x2c8] sm:$0xff]
        %v3285 = vld [vmem:[%s6 + $0x2d0] sm:$0xff]
        %v3286 = vld [vmem:[%s6 + $0x2d8] sm:$0xff]
        %v3287 = vld [vmem:[%s6 + $0x2e0] sm:$0xff]
        %v3288 = vld [vmem:[%s6 + $0x2e8] sm:$0xff]
        %v3289 = vld [vmem:[%s6 + $0x2f0] sm:$0xff]
        %v3290 = vld [vmem:[%s6 + $0x2f8] sm:$0xff]
        %v3291 = vld [vmem:[%s6 + $0x300] sm:$0xff]
        %v3292 = vld [vmem:[%s6 + $0x308] sm:$0xff]
        %v3293 = vld [vmem:[%s6 + $0x310] sm:$0xff]
        %v3294 = vld [vmem:[%s6 + $0x318] sm:$0xff]
        %v3295 = vld [vmem:[%s6 + $0x320] sm:$0xff]
        %v3296 = vld [vmem:[%s6 + $0x328] sm:$0xff]
        %v3297 = vld [vmem:[%s6 + $0x330] sm:$0xff]
        %v3298 = vld [vmem:[%s6 + $0x338] sm:$0xff]
        %v3299 = vld [vmem:[%s6 + $0x340] sm:$0xff]
        %v3300 = vld [vmem:[%s6 + $0x348] sm:$0xff]
        %v3301 = vld [vmem:[%s6 + $0x350] sm:$0xff]
        %v3302 = vld [vmem:[%s6 + $0x358] sm:$0xff]
        %v3303 = vld [vmem:[%s6 + $0x360] sm:$0xff]
        %v3304 = vld [vmem:[%s6 + $0x368] sm:$0xff]
        %v3305 = vld [vmem:[%s6 + $0x370] sm:$0xff]
        %v3306 = vld [vmem:[%s6 + $0x378] sm:$0xff]
        %v3307 = vld [vmem:[%s6 + $0x380] sm:$0xff]
        %v3308 = vld [vmem:[%s6 + $0x388] sm:$0xff]
        %v3309 = vld [vmem:[%s6 + $0x390] sm:$0xff]
        %v3310 = vld [vmem:[%s6 + $0x398] sm:$0xff]
        %v3311 = vld [vmem:[%s6 + $0x3a0] sm:$0xff]
        %v3312 = vld [vmem:[%s6 + $0x3a8] sm:$0xff]
        %v3313 = vld [vmem:[%s6 + $0x3b0] sm:$0xff]
        %v3314 = vld [vmem:[%s6 + $0x3b8] sm:$0xff]
        %v3315 = vld [vmem:[%s6 + $0x3c0] sm:$0xff]
        %v3316 = vld [vmem:[%s6 + $0x3c8] sm:$0xff]
        %v3317 = vld [vmem:[%s6 + $0x3d0] sm:$0xff]
        %v3318 = vld [vmem:[%s6 + $0x3d8] sm:$0xff]
        %v3319 = vld [vmem:[%s6 + $0x3e0] sm:$0xff]
        %v3320 = vld [vmem:[%s6 + $0x3e8] sm:$0xff]
        %v3321 = vld [vmem:[%s6 + $0x3f0] sm:$0xff]
        %v3322 = vld [vmem:[%s6 + $0x3f8] sm:$0xff]
        %v3323 = vld [vmem:[%s6 + $0x400] sm:$0xff]
        %v3324 = vld [vmem:[%s6 + $0x408] sm:$0xff]
        %v3325 = vld [vmem:[%s6 + $0x410] sm:$0xff]
        %v3326 = vld [vmem:[%s6 + $0x418] sm:$0xff]
        %v3327 = vld [vmem:[%s6 + $0x420] sm:$0xff]
        %v3328 = vld [vmem:[%s6 + $0x428] sm:$0xff]
        %v3329 = vld [vmem:[%s6 + $0x430] sm:$0xff]
        %v3330 = vld [vmem:[%s6 + $0x438] sm:$0xff]
        %v3331 = vld [vmem:[%s6 + $0x440] sm:$0xff]
        %v3332 = vld [vmem:[%s6 + $0x448] sm:$0xff]
        %v3333 = vld [vmem:[%s6 + $0x450] sm:$0xff]
        %v3334 = vld [vmem:[%s6 + $0x458] sm:$0xff]
        %v3335 = vld [vmem:[%s6 + $0x460] sm:$0xff]
        %v3336 = vld [vmem:[%s6 + $0x468] sm:$0xff]
        %v3337 = vld [vmem:[%s6 + $0x470] sm:$0xff]
        %v3338 = vld [vmem:[%s6 + $0x478] sm:$0xff]
        %v3339 = vld [vmem:[%s6 + $0x480] sm:$0xff]
        %v3340 = vld [vmem:[%s6 + $0x488] sm:$0xff]
        %v3341 = vld [vmem:[%s6 + $0x490] sm:$0xff]
        %v3342 = vld [vmem:[%s6 + $0x498] sm:$0xff]
        %v3343 = vld [vmem:[%s6 + $0x4a0] sm:$0xff]
        %v3344 = vld [vmem:[%s6 + $0x4a8] sm:$0xff]
        %v3345 = vld [vmem:[%s6 + $0x4b0] sm:$0xff]
        %v3346 = vld [vmem:[%s6 + $0x4b8] sm:$0xff]
        %v3347 = vld [vmem:[%s6 + $0x4c0] sm:$0xff]
        %v3348 = vld [vmem:[%s6 + $0x4c8] sm:$0xff]
        %v3349 = vld [vmem:[%s6 + $0x4d0] sm:$0xff]
        %v3350 = vld [vmem:[%s6 + $0x4d8] sm:$0xff]
        %v3351 = vld [vmem:[%s6 + $0x4e0] sm:$0xff]
        %v3352 = vld [vmem:[%s6 + $0x4e8] sm:$0xff]
        %v3353 = vld [vmem:[%s6 + $0x4f0] sm:$0xff]
        %v3354 = vld [vmem:[%s6 + $0x4f8] sm:$0xff]
        %v3355 = vld [vmem:[%s6 + $0x500] sm:$0xff]
        %v3356 = vld [vmem:[%s6 + $0x508] sm:$0xff]
        %v3357 = vld [vmem:[%s6 + $0x510] sm:$0xff]
        %v3358 = vld [vmem:[%s6 + $0x518] sm:$0xff]
        %v3359 = vld [vmem:[%s6 + $0x520] sm:$0xff]
        %v3360 = vld [vmem:[%s6 + $0x528] sm:$0xff]
        %v3361 = vld [vmem:[%s6 + $0x530] sm:$0xff]
        %v3362 = vld [vmem:[%s6 + $0x538] sm:$0xff]
        %v3363 = vld [vmem:[%s6 + $0x540] sm:$0xff]
        %v3364 = vld [vmem:[%s6 + $0x548] sm:$0xff]
        %v3365 = vld [vmem:[%s6 + $0x550] sm:$0xff]
        %v3366 = vld [vmem:[%s6 + $0x558] sm:$0xff]
        %v3367 = vld [vmem:[%s6 + $0x560] sm:$0xff]
        %v3368 = vld [vmem:[%s6 + $0x568] sm:$0xff]
        %v3369 = vld [vmem:[%s6 + $0x570] sm:$0xff]
        %v3370 = vld [vmem:[%s6 + $0x578] sm:$0xff]
        %v3371 = vld [vmem:[%s6 + $0x580] sm:$0xff]
        %v3372 = vld [vmem:[%s6 + $0x588] sm:$0xff]
        %v3373 = vld [vmem:[%s6 + $0x590] sm:$0xff]
        %v3374 = vld [vmem:[%s6 + $0x598] sm:$0xff]
        %v3375 = vld [vmem:[%s6 + $0x5a0] sm:$0xff]
        %v3376 = vld [vmem:[%s6 + $0x5a8] sm:$0xff]
        %v3377 = vld [vmem:[%s6 + $0x5b0] sm:$0xff]
        %v3378 = vld [vmem:[%s6 + $0x5b8] sm:$0xff]
        %v3379 = vld [vmem:[%s6 + $0x5c0] sm:$0xff]
        %v3380 = vld [vmem:[%s6 + $0x5c8] sm:$0xff]
        %v3381 = vld [vmem:[%s6 + $0x5d0] sm:$0xff]
        %v3382 = vld [vmem:[%s6 + $0x5d8] sm:$0xff]
        %v3383 = vld [vmem:[%s6 + $0x5e0] sm:$0xff]
        %v3384 = vld [vmem:[%s6 + $0x5e8] sm:$0xff]
        %v3385 = vld [vmem:[%s6 + $0x5f0] sm:$0xff]
        %v3386 = vld [vmem:[%s6 + $0x5f8] sm:$0xff]
        %v3387 = vld [vmem:[%s6 + $0x600] sm:$0xff]
        %v3388 = vld [vmem:[%s6 + $0x608] sm:$0xff]
        %v3389 = vld [vmem:[%s6 + $0x610] sm:$0xff]
        %v3390 = vld [vmem:[%s6 + $0x618] sm:$0xff]
        %v3391 = vld [vmem:[%s6 + $0x620] sm:$0xff]
        %v3392 = vld [vmem:[%s6 + $0x628] sm:$0xff]
        %v3393 = vld [vmem:[%s6 + $0x630] sm:$0xff]
        %v3394 = vld [vmem:[%s6 + $0x638] sm:$0xff]
        %v3395 = vld [vmem:[%s6 + $0x640] sm:$0xff]
        %v3396 = vld [vmem:[%s6 + $0x648] sm:$0xff]
        %v3397 = vld [vmem:[%s6 + $0x650] sm:$0xff]
        %v3398 = vld [vmem:[%s6 + $0x658] sm:$0xff]
        %v3399 = vld [vmem:[%s6 + $0x660] sm:$0xff]
        %v3400 = vld [vmem:[%s6 + $0x668] sm:$0xff]
        %v3401 = vld [vmem:[%s6 + $0x670] sm:$0xff]
        %v3402 = vld [vmem:[%s6 + $0x678] sm:$0xff]
        %v3403 = vld [vmem:[%s6 + $0x680] sm:$0xff]
        %v3404 = vld [vmem:[%s6 + $0x688] sm:$0xff]
        %v3405 = vld [vmem:[%s6 + $0x690] sm:$0xff]
        %v3406 = vld [vmem:[%s6 + $0x698] sm:$0xff]
        %v3407 = vld [vmem:[%s6 + $0x6a0] sm:$0xff]
        %v3408 = vld [vmem:[%s6 + $0x6a8] sm:$0xff]
        %v3409 = vld [vmem:[%s6 + $0x6b0] sm:$0xff]
        %v3410 = vld [vmem:[%s6 + $0x6b8] sm:$0xff]
        %v3411 = vld [vmem:[%s6 + $0x6c0] sm:$0xff]
        %v3412 = vld [vmem:[%s6 + $0x6c8] sm:$0xff]
        %v3413 = vld [vmem:[%s6 + $0x6d0] sm:$0xff]
        %v3414 = vld [vmem:[%s6 + $0x6d8] sm:$0xff]
        %v3415 = vld [vmem:[%s6 + $0x6e0] sm:$0xff]
        %v3416 = vld [vmem:[%s6 + $0x6e8] sm:$0xff]
        %v3417 = vld [vmem:[%s6 + $0x6f0] sm:$0xff]
        %v3418 = vld [vmem:[%s6 + $0x6f8] sm:$0xff]
        %v3419 = vld [vmem:[%s6 + $0x700] sm:$0xff]
        %v3420 = vld [vmem:[%s6 + $0x708] sm:$0xff]
        %v3421 = vld [vmem:[%s6 + $0x710] sm:$0xff]
        %v3422 = vld [vmem:[%s6 + $0x718] sm:$0xff]
        %v3423 = vld [vmem:[%s6 + $0x720] sm:$0xff]
        %v3424 = vld [vmem:[%s6 + $0x728] sm:$0xff]
        %v3425 = vld [vmem:[%s6 + $0x730] sm:$0xff]
        %v3426 = vld [vmem:[%s6 + $0x738] sm:$0xff]
        %v3427 = vld [vmem:[%s6 + $0x740] sm:$0xff]
        %v3428 = vld [vmem:[%s6 + $0x748] sm:$0xff]
        %v3429 = vld [vmem:[%s6 + $0x750] sm:$0xff]
        %v3430 = vld [vmem:[%s6 + $0x758] sm:$0xff]
        %v3431 = vld [vmem:[%s6 + $0x760] sm:$0xff]
        %v3432 = vld [vmem:[%s6 + $0x768] sm:$0xff]
        %v3433 = vld [vmem:[%s6 + $0x770] sm:$0xff]
        %v3434 = vld [vmem:[%s6 + $0x778] sm:$0xff]
        %v3435 = vld [vmem:[%s6 + $0x780] sm:$0xff]
        %v3436 = vld [vmem:[%s6 + $0x788] sm:$0xff]
        %v3437 = vld [vmem:[%s6 + $0x790] sm:$0xff]
        %v3438 = vld [vmem:[%s6 + $0x798] sm:$0xff]
        %v3439 = vld [vmem:[%s6 + $0x7a0] sm:$0xff]
        %v3440 = vld [vmem:[%s6 + $0x7a8] sm:$0xff]
        %v3441 = vld [vmem:[%s6 + $0x7b0] sm:$0xff]
        %v3442 = vld [vmem:[%s6 + $0x7b8] sm:$0xff]
        %v3443 = vld [vmem:[%s6 + $0x7c0] sm:$0xff]
        %v3444 = vld [vmem:[%s6 + $0x7c8] sm:$0xff]
        %v3445 = vld [vmem:[%s6 + $0x7d0] sm:$0xff]
        %v3446 = vld [vmem:[%s6 + $0x7d8] sm:$0xff]
        %v3447 = vld [vmem:[%s6 + $0x7e0] sm:$0xff]
        %v3448 = vld [vmem:[%s6 + $0x7e8] sm:$0xff]
        %v3449 = vld [vmem:[%s6 + $0x7f0] sm:$0xff]
        %v3450 = vld [vmem:[%s6 + $0x7f8] sm:$0xff]
        %v3451 = vld [vmem:[#allocation5] sm:$0xff]
        %v3452 = vld [vmem:[#allocation5 + $0x8] sm:$0xff]
        %v3455 = vlaneseq
        %v3456 = vshrl.u32 %v3455, 7
        %v3457 = vsub.s32 0, %v3456
        %v3458 = vrot.slane %v3451, %v3457
        %v3459 = vlaneseq
        %v3460 = vshrl.u32 %v3459, 7
        %v3461 = vsub.s32 1, %v3460
        %v3462 = vrot.slane %v3451, %v3461
        %v3463 = vlaneseq
        %v3464 = vshrl.u32 %v3463, 7
        %v3465 = vsub.s32 2, %v3464
        %v3466 = vrot.slane %v3451, %v3465
        %v3467 = vlaneseq
        %v3468 = vshrl.u32 %v3467, 7
        %v3469 = vsub.s32 3, %v3468
        %v3470 = vrot.slane %v3451, %v3469
        %v3471 = vlaneseq
        %v3472 = vshrl.u32 %v3471, 7
        %v3473 = vsub.s32 4, %v3472
        %v3474 = vrot.slane %v3451, %v3473
        %v3475 = vlaneseq
        %v3476 = vshrl.u32 %v3475, 7
        %v3477 = vsub.s32 5, %v3476
        %v3478 = vrot.slane %v3451, %v3477
        %v3479 = vlaneseq
        %v3480 = vshrl.u32 %v3479, 7
        %v3481 = vsub.s32 6, %v3480
        %v3482 = vrot.slane %v3451, %v3481
        %v3483 = vlaneseq
        %v3484 = vshrl.u32 %v3483, 7
        %v3485 = vsub.s32 7, %v3484
        %v3486 = vrot.slane %v3451, %v3485
        %v3487 = vlaneseq
        %v3488 = vshrl.u32 %v3487, 7
        %v3489 = vsub.s32 0, %v3488
        %v3490 = vrot.slane %v3452, %v3489
        %v3491 = vlaneseq
        %v3492 = vshrl.u32 %v3491, 7
        %v3493 = vsub.s32 1, %v3492
        %v3494 = vrot.slane %v3452, %v3493
        %v3495 = vlaneseq
        %v3496 = vshrl.u32 %v3495, 7
        %v3497 = vsub.s32 2, %v3496
        %v3498 = vrot.slane %v3452, %v3497
        %v3499 = vlaneseq
        %v3500 = vshrl.u32 %v3499, 7
        %v3501 = vsub.s32 3, %v3500
        %v3502 = vrot.slane %v3452, %v3501
        %v3503 = vlaneseq
        %v3504 = vshrl.u32 %v3503, 7
        %v3505 = vsub.s32 4, %v3504
        %v3506 = vrot.slane %v3452, %v3505
        %v3507 = vlaneseq
        %v3508 = vshrl.u32 %v3507, 7
        %v3509 = vsub.s32 5, %v3508
        %v3510 = vrot.slane %v3452, %v3509
        %v3511 = vlaneseq
        %v3512 = vshrl.u32 %v3511, 7
        %v3513 = vsub.s32 6, %v3512
        %v3514 = vrot.slane %v3452, %v3513
        %v3515 = vlaneseq
        %v3516 = vshrl.u32 %v3515, 7
        %v3517 = vsub.s32 7, %v3516
        %v3518 = vrot.slane %v3452, %v3517
        %3535 = vmatprep.subr.mxu0 %v3196
        %3536 = vmatpush1.msra.mxu0 %v3195
        %3537 = vmatprep.subr.mxu0 %v3212
        %3538 = vmatpush1.msra.mxu0 %v3211
        %3539 = vmatprep.subr.mxu0 %v3228
        %3540 = vmatpush1.msra.mxu0 %v3227
        %3541 = vmatprep.subr.mxu0 %v3244
        %3542 = vmatpush1.msra.mxu0 %v3243
        %3543 = vmatprep.subr.mxu0 %v3260
        %3544 = vmatpush1.msra.mxu0 %v3259
        %3545 = vmatprep.subr.mxu0 %v3276
        %3546 = vmatpush1.msra.mxu0 %v3275
        %3547 = vmatprep.subr.mxu0 %v3292
        %3548 = vmatpush1.msra.mxu0 %v3291
        %3549 = vmatprep.subr.mxu0 %v3308
        %3550 = vmatpush1.msra.mxu0 %v3307
        %3551 = vmatprep.subr.mxu0 %v3324
        %3552 = vmatpush1.msra.mxu0 %v3323
        %3553 = vmatprep.subr.mxu0 %v3340
        %3554 = vmatpush1.msra.mxu0 %v3339
        %3555 = vmatprep.subr.mxu0 %v3356
        %3556 = vmatpush1.msra.mxu0 %v3355
        %3557 = vmatprep.subr.mxu0 %v3372
        %3558 = vmatpush1.msra.mxu0 %v3371
        %3559 = vmatprep.subr.mxu0 %v3388
        %3560 = vmatpush1.msra.mxu0 %v3387
        %3561 = vmatprep.subr.mxu0 %v3404
        %3562 = vmatpush1.msra.mxu0 %v3403
        %3563 = vmatprep.subr.mxu0 %v3420
        %3564 = vmatpush1.msra.mxu0 %v3419
        %3565 = vmatprep.subr.mxu0 %v3436
        %3566 = vmatpush1.msra.mxu0 %v3435
        %3567 = vmatprep.subr.mxu0 0.0
        %3568 = vmatpush1.msra.mxu0 0.0
        %3569 = vmatprep.subr.mxu0 0.0
        %3570 = vmatpush1.msra.mxu0 0.0
        %3571 = vmatprep.subr.mxu0 0.0
        %3572 = vmatpush1.msra.mxu0 0.0
        %3573 = vmatprep.subr.mxu0 0.0
        %3574 = vmatpush1.msra.mxu0 0.0
        %3575 = vmatprep.subr.mxu0 0.0
        %3576 = vmatpush1.msra.mxu0 0.0
        %3577 = vmatprep.subr.mxu0 0.0
        %3578 = vmatpush1.msra.mxu0 0.0
        %3579 = vmatprep.subr.mxu0 0.0
        %3580 = vmatpush1.msra.mxu0 0.0
        %3581 = vmatprep.subr.mxu0 0.0
        %3582 = vmatpush1.msra.mxu0 0.0
        %3583 = vmatprep.subr.mxu0 0.0
        %3584 = vmatpush1.msra.mxu0 0.0
        %3585 = vmatprep.subr.mxu0 0.0
        %3586 = vmatpush1.msra.mxu0 0.0
        %3587 = vmatprep.subr.mxu0 0.0
        %3588 = vmatpush1.msra.mxu0 0.0
        %3589 = vmatprep.subr.mxu0 0.0
        %3590 = vmatpush1.msra.mxu0 0.0
        %3591 = vmatprep.subr.mxu0 0.0
        %3592 = vmatpush1.msra.mxu0 0.0
        %3593 = vmatprep.subr.mxu0 0.0
        %3594 = vmatpush1.msra.mxu0 0.0
        %3595 = vmatprep.subr.mxu0 0.0
        %3596 = vmatpush1.msra.mxu0 0.0
        %3597 = vmatprep.subr.mxu0 0.0
        %3598 = vmatpush1.msra.mxu0 0.0
        %3599 = vmatprep.mubr.f32.mxu0 0.0
        %3600 = vmatmul.mubr.f32.gmra.mrb[0].mxu0 %v3194
        %v3601 = vpop.f32.mrb[0].mxu0
        %v3602 = vadd.f32 %v3458, %v3601
        %v3603 = vpop.f32.mrb[0].mxu0
        %v3604 = vadd.f32 %v3462, %v3603
        %3605 = vdwg.mxu0
        %3606 = vmatprep.subr.mxu0 %v3198
        %3607 = vmatpush1.msra.mxu0 %v3197
        %3608 = vmatprep.subr.mxu0 %v3214
        %3609 = vmatpush1.msra.mxu0 %v3213
        %3610 = vmatprep.subr.mxu0 %v3230
        %3611 = vmatpush1.msra.mxu0 %v3229
        %3612 = vmatprep.subr.mxu0 %v3246
        %3613 = vmatpush1.msra.mxu0 %v3245
        %3614 = vmatprep.subr.mxu0 %v3262
        %3615 = vmatpush1.msra.mxu0 %v3261
        %3616 = vmatprep.subr.mxu0 %v3278
        %3617 = vmatpush1.msra.mxu0 %v3277
        %3618 = vmatprep.subr.mxu0 %v3294
        %3619 = vmatpush1.msra.mxu0 %v3293
        %3620 = vmatprep.subr.mxu0 %v3310
        %3621 = vmatpush1.msra.mxu0 %v3309
        %3622 = vmatprep.subr.mxu0 %v3326
        %3623 = vmatpush1.msra.mxu0 %v3325
        %3624 = vmatprep.subr.mxu0 %v3342
        %3625 = vmatpush1.msra.mxu0 %v3341
        %3626 = vmatprep.subr.mxu0 %v3358
        %3627 = vmatpush1.msra.mxu0 %v3357
        %3628 = vmatprep.subr.mxu0 %v3374
        %3629 = vmatpush1.msra.mxu0 %v3373
        %3630 = vmatprep.subr.mxu0 %v3390
        %3631 = vmatpush1.msra.mxu0 %v3389
        %3632 = vmatprep.subr.mxu0 %v3406
        %3633 = vmatpush1.msra.mxu0 %v3405
        %3634 = vmatprep.subr.mxu0 %v3422
        %3635 = vmatpush1.msra.mxu0 %v3421
        %3636 = vmatprep.subr.mxu0 %v3438
        %3637 = vmatpush1.msra.mxu0 %v3437
        %3638 = vmatprep.subr.mxu0 0.0
        %3639 = vmatpush1.msra.mxu0 0.0
        %3640 = vmatprep.subr.mxu0 0.0
        %3641 = vmatpush1.msra.mxu0 0.0
        %3642 = vmatprep.subr.mxu0 0.0
        %3643 = vmatpush1.msra.mxu0 0.0
        %3644 = vmatprep.subr.mxu0 0.0
        %3645 = vmatpush1.msra.mxu0 0.0
        %3646 = vmatprep.subr.mxu0 0.0
        %3647 = vmatpush1.msra.mxu0 0.0
        %3648 = vmatprep.subr.mxu0 0.0
        %3649 = vmatpush1.msra.mxu0 0.0
        %3650 = vmatprep.subr.mxu0 0.0
        %3651 = vmatpush1.msra.mxu0 0.0
        %3652 = vmatprep.subr.mxu0 0.0
        %3653 = vmatpush1.msra.mxu0 0.0
        %3654 = vmatprep.subr.mxu0 0.0
        %3655 = vmatpush1.msra.mxu0 0.0
        %3656 = vmatprep.subr.mxu0 0.0
        %3657 = vmatpush1.msra.mxu0 0.0
        %3658 = vmatprep.subr.mxu0 0.0
        %3659 = vmatpush1.msra.mxu0 0.0
        %3660 = vmatprep.subr.mxu0 0.0
        %3661 = vmatpush1.msra.mxu0 0.0
        %3662 = vmatprep.subr.mxu0 0.0
        %3663 = vmatpush1.msra.mxu0 0.0
        %3664 = vmatprep.subr.mxu0 0.0
        %3665 = vmatpush1.msra.mxu0 0.0
        %3666 = vmatprep.subr.mxu0 0.0
        %3667 = vmatpush1.msra.mxu0 0.0
        %3668 = vmatprep.subr.mxu0 0.0
        %3669 = vmatpush1.msra.mxu0 0.0
        %3670 = vmatprep.mubr.f32.mxu0 0.0
        %3671 = vmatmul.mubr.f32.gmra.mrb[0].mxu0 %v3194
        %v3672 = vpop.f32.mrb[0].mxu0
        %v3673 = vadd.f32 %v3466, %v3672
        %v3674 = vpop.f32.mrb[0].mxu0
        %v3675 = vadd.f32 %v3470, %v3674
        %3676 = vdwg.mxu0
        %3677 = vmatprep.subr.mxu0 %v3200
        %3678 = vmatpush1.msra.mxu0 %v3199
        %3679 = vmatprep.subr.mxu0 %v3216
        %3680 = vmatpush1.msra.mxu0 %v3215
        %3681 = vmatprep.subr.mxu0 %v3232
        %3682 = vmatpush1.msra.mxu0 %v3231
        %3683 = vmatprep.subr.mxu0 %v3248
        %3684 = vmatpush1.msra.mxu0 %v3247
        %3685 = vmatprep.subr.mxu0 %v3264
        %3686 = vmatpush1.msra.mxu0 %v3263
        %3687 = vmatprep.subr.mxu0 %v3280
        %3688 = vmatpush1.msra.mxu0 %v3279
        %3689 = vmatprep.subr.mxu0 %v3296
        %3690 = vmatpush1.msra.mxu0 %v3295
        %3691 = vmatprep.subr.mxu0 %v3312
        %3692 = vmatpush1.msra.mxu0 %v3311
        %3693 = vmatprep.subr.mxu0 %v3328
        %3694 = vmatpush1.msra.mxu0 %v3327
        %3695 = vmatprep.subr.mxu0 %v3344
        %3696 = vmatpush1.msra.mxu0 %v3343
        %3697 = vmatprep.subr.mxu0 %v3360
        %3698 = vmatpush1.msra.mxu0 %v3359
        %3699 = vmatprep.subr.mxu0 %v3376
        %3700 = vmatpush1.msra.mxu0 %v3375
        %3701 = vmatprep.subr.mxu0 %v3392
        %3702 = vmatpush1.msra.mxu0 %v3391
        %3703 = vmatprep.subr.mxu0 %v3408
        %3704 = vmatpush1.msra.mxu0 %v3407
        %3705 = vmatprep.subr.mxu0 %v3424
        %3706 = vmatpush1.msra.mxu0 %v3423
        %3707 = vmatprep.subr.mxu0 %v3440
        %3708 = vmatpush1.msra.mxu0 %v3439
        %3709 = vmatprep.subr.mxu0 0.0
        %3710 = vmatpush1.msra.mxu0 0.0
        %3711 = vmatprep.subr.mxu0 0.0
        %3712 = vmatpush1.msra.mxu0 0.0
        %3713 = vmatprep.subr.mxu0 0.0
        %3714 = vmatpush1.msra.mxu0 0.0
        %3715 = vmatprep.subr.mxu0 0.0
        %3716 = vmatpush1.msra.mxu0 0.0
        %3717 = vmatprep.subr.mxu0 0.0
        %3718 = vmatpush1.msra.mxu0 0.0
        %3719 = vmatprep.subr.mxu0 0.0
        %3720 = vmatpush1.msra.mxu0 0.0
        %3721 = vmatprep.subr.mxu0 0.0
        %3722 = vmatpush1.msra.mxu0 0.0
        %3723 = vmatprep.subr.mxu0 0.0
        %3724 = vmatpush1.msra.mxu0 0.0
        %3725 = vmatprep.subr.mxu0 0.0
        %3726 = vmatpush1.msra.mxu0 0.0
        %3727 = vmatprep.subr.mxu0 0.0
        %3728 = vmatpush1.msra.mxu0 0.0
        %3729 = vmatprep.subr.mxu0 0.0
        %3730 = vmatpush1.msra.mxu0 0.0
        %3731 = vmatprep.subr.mxu0 0.0
        %3732 = vmatpush1.msra.mxu0 0.0
        %3733 = vmatprep.subr.mxu0 0.0
        %3734 = vmatpush1.msra.mxu0 0.0
        %3735 = vmatprep.subr.mxu0 0.0
        %3736 = vmatpush1.msra.mxu0 0.0
        %3737 = vmatprep.subr.mxu0 0.0
        %3738 = vmatpush1.msra.mxu0 0.0
        %3739 = vmatprep.subr.mxu0 0.0
        %3740 = vmatpush1.msra.mxu0 0.0
        %3741 = vmatprep.mubr.f32.mxu0 0.0
        %3742 = vmatmul.mubr.f32.gmra.mrb[0].mxu0 %v3194
        %v3743 = vpop.f32.mrb[0].mxu0
        %v3744 = vadd.f32 %v3474, %v3743
        %v3745 = vpop.f32.mrb[0].mxu0
        %v3746 = vadd.f32 %v3478, %v3745
        %3747 = vdwg.mxu0
        %3748 = vmatprep.subr.mxu0 %v3202
        %3749 = vmatpush1.msra.mxu0 %v3201
        %3750 = vmatprep.subr.mxu0 %v3218
        %3751 = vmatpush1.msra.mxu0 %v3217
        %3752 = vmatprep.subr.mxu0 %v3234
        %3753 = vmatpush1.msra.mxu0 %v3233
        %3754 = vmatprep.subr.mxu0 %v3250
        %3755 = vmatpush1.msra.mxu0 %v3249
        %3756 = vmatprep.subr.mxu0 %v3266
        %3757 = vmatpush1.msra.mxu0 %v3265
        %3758 = vmatprep.subr.mxu0 %v3282
        %3759 = vmatpush1.msra.mxu0 %v3281
        %3760 = vmatprep.subr.mxu0 %v3298
        %3761 = vmatpush1.msra.mxu0 %v3297
        %3762 = vmatprep.subr.mxu0 %v3314
        %3763 = vmatpush1.msra.mxu0 %v3313
        %3764 = vmatprep.subr.mxu0 %v3330
        %3765 = vmatpush1.msra.mxu0 %v3329
        %3766 = vmatprep.subr.mxu0 %v3346
        %3767 = vmatpush1.msra.mxu0 %v3345
        %3768 = vmatprep.subr.mxu0 %v3362
        %3769 = vmatpush1.msra.mxu0 %v3361
        %3770 = vmatprep.subr.mxu0 %v3378
        %3771 = vmatpush1.msra.mxu0 %v3377
        %3772 = vmatprep.subr.mxu0 %v3394
        %3773 = vmatpush1.msra.mxu0 %v3393
        %3774 = vmatprep.subr.mxu0 %v3410
        %3775 = vmatpush1.msra.mxu0 %v3409
        %3776 = vmatprep.subr.mxu0 %v3426
        %3777 = vmatpush1.msra.mxu0 %v3425
        %3778 = vmatprep.subr.mxu0 %v3442
        %3779 = vmatpush1.msra.mxu0 %v3441
        %3780 = vmatprep.subr.mxu0 0.0
        %3781 = vmatpush1.msra.mxu0 0.0
        %3782 = vmatprep.subr.mxu0 0.0
        %3783 = vmatpush1.msra.mxu0 0.0
        %3784 = vmatprep.subr.mxu0 0.0
        %3785 = vmatpush1.msra.mxu0 0.0
        %3786 = vmatprep.subr.mxu0 0.0
        %3787 = vmatpush1.msra.mxu0 0.0
        %3788 = vmatprep.subr.mxu0 0.0
        %3789 = vmatpush1.msra.mxu0 0.0
        %3790 = vmatprep.subr.mxu0 0.0
        %3791 = vmatpush1.msra.mxu0 0.0
        %3792 = vmatprep.subr.mxu0 0.0
        %3793 = vmatpush1.msra.mxu0 0.0
        %3794 = vmatprep.subr.mxu0 0.0
        %3795 = vmatpush1.msra.mxu0 0.0
        %3796 = vmatprep.subr.mxu0 0.0
        %3797 = vmatpush1.msra.mxu0 0.0
        %3798 = vmatprep.subr.mxu0 0.0
        %3799 = vmatpush1.msra.mxu0 0.0
        %3800 = vmatprep.subr.mxu0 0.0
        %3801 = vmatpush1.msra.mxu0 0.0
        %3802 = vmatprep.subr.mxu0 0.0
        %3803 = vmatpush1.msra.mxu0 0.0
        %3804 = vmatprep.subr.mxu0 0.0
        %3805 = vmatpush1.msra.mxu0 0.0
        %3806 = vmatprep.subr.mxu0 0.0
        %3807 = vmatpush1.msra.mxu0 0.0
        %3808 = vmatprep.subr.mxu0 0.0
        %3809 = vmatpush1.msra.mxu0 0.0
        %3810 = vmatprep.subr.mxu0 0.0
        %3811 = vmatpush1.msra.mxu0 0.0
        %3812 = vmatprep.mubr.f32.mxu0 0.0
        %3813 = vmatmul.mubr.f32.gmra.mrb[0].mxu0 %v3194
        %v3814 = vpop.f32.mrb[0].mxu0
        %v3815 = vadd.f32 %v3482, %v3814
        %v3816 = vpop.f32.mrb[0].mxu0
        %v3817 = vadd.f32 %v3486, %v3816
        %3818 = vdwg.mxu0
        %3819 = vmatprep.subr.mxu0 %v3204
        %3820 = vmatpush1.msra.mxu0 %v3203
        %3821 = vmatprep.subr.mxu0 %v3220
        %3822 = vmatpush1.msra.mxu0 %v3219
        %3823 = vmatprep.subr.mxu0 %v3236
        %3824 = vmatpush1.msra.mxu0 %v3235
        %3825 = vmatprep.subr.mxu0 %v3252
        %3826 = vmatpush1.msra.mxu0 %v3251
        %3827 = vmatprep.subr.mxu0 %v3268
        %3828 = vmatpush1.msra.mxu0 %v3267
        %3829 = vmatprep.subr.mxu0 %v3284
        %3830 = vmatpush1.msra.mxu0 %v3283
        %3831 = vmatprep.subr.mxu0 %v3300
        %3832 = vmatpush1.msra.mxu0 %v3299
        %3833 = vmatprep.subr.mxu0 %v3316
        %3834 = vmatpush1.msra.mxu0 %v3315
        %3835 = vmatprep.subr.mxu0 %v3332
        %3836 = vmatpush1.msra.mxu0 %v3331
        %3837 = vmatprep.subr.mxu0 %v3348
        %3838 = vmatpush1.msra.mxu0 %v3347
        %3839 = vmatprep.subr.mxu0 %v3364
        %3840 = vmatpush1.msra.mxu0 %v3363
        %3841 = vmatprep.subr.mxu0 %v3380
        %3842 = vmatpush1.msra.mxu0 %v3379
        %3843 = vmatprep.subr.mxu0 %v3396
        %3844 = vmatpush1.msra.mxu0 %v3395
        %3845 = vmatprep.subr.mxu0 %v3412
        %3846 = vmatpush1.msra.mxu0 %v3411
        %3847 = vmatprep.subr.mxu0 %v3428
        %3848 = vmatpush1.msra.mxu0 %v3427
        %3849 = vmatprep.subr.mxu0 %v3444
        %3850 = vmatpush1.msra.mxu0 %v3443
        %3851 = vmatprep.subr.mxu0 0.0
        %3852 = vmatpush1.msra.mxu0 0.0
        %3853 = vmatprep.subr.mxu0 0.0
        %3854 = vmatpush1.msra.mxu0 0.0
        %3855 = vmatprep.subr.mxu0 0.0
        %3856 = vmatpush1.msra.mxu0 0.0
        %3857 = vmatprep.subr.mxu0 0.0
        %3858 = vmatpush1.msra.mxu0 0.0
        %3859 = vmatprep.subr.mxu0 0.0
        %3860 = vmatpush1.msra.mxu0 0.0
        %3861 = vmatprep.subr.mxu0 0.0
        %3862 = vmatpush1.msra.mxu0 0.0
        %3863 = vmatprep.subr.mxu0 0.0
        %3864 = vmatpush1.msra.mxu0 0.0
        %3865 = vmatprep.subr.mxu0 0.0
        %3866 = vmatpush1.msra.mxu0 0.0
        %3867 = vmatprep.subr.mxu0 0.0
        %3868 = vmatpush1.msra.mxu0 0.0
        %3869 = vmatprep.subr.mxu0 0.0
        %3870 = vmatpush1.msra.mxu0 0.0
        %3871 = vmatprep.subr.mxu0 0.0
        %3872 = vmatpush1.msra.mxu0 0.0
        %3873 = vmatprep.subr.mxu0 0.0
        %3874 = vmatpush1.msra.mxu0 0.0
        %3875 = vmatprep.subr.mxu0 0.0
        %3876 = vmatpush1.msra.mxu0 0.0
        %3877 = vmatprep.subr.mxu0 0.0
        %3878 = vmatpush1.msra.mxu0 0.0
        %3879 = vmatprep.subr.mxu0 0.0
        %3880 = vmatpush1.msra.mxu0 0.0
        %3881 = vmatprep.subr.mxu0 0.0
        %3882 = vmatpush1.msra.mxu0 0.0
        %3883 = vmatprep.mubr.f32.mxu0 0.0
        %3884 = vmatmul.mubr.f32.gmra.mrb[0].mxu0 %v3194
        %v3885 = vpop.f32.mrb[0].mxu0
        %v3886 = vadd.f32 %v3490, %v3885
        %v3887 = vpop.f32.mrb[0].mxu0
        %v3888 = vadd.f32 %v3494, %v3887
        %3889 = vdwg.mxu0
        %3890 = vmatprep.subr.mxu0 %v3206
        %3891 = vmatpush1.msra.mxu0 %v3205
        %3892 = vmatprep.subr.mxu0 %v3222
        %3893 = vmatpush1.msra.mxu0 %v3221
        %3894 = vmatprep.subr.mxu0 %v3238
        %3895 = vmatpush1.msra.mxu0 %v3237
        %3896 = vmatprep.subr.mxu0 %v3254
        %3897 = vmatpush1.msra.mxu0 %v3253
        %3898 = vmatprep.subr.mxu0 %v3270
        %3899 = vmatpush1.msra.mxu0 %v3269
        %3900 = vmatprep.subr.mxu0 %v3286
        %3901 = vmatpush1.msra.mxu0 %v3285
        %3902 = vmatprep.subr.mxu0 %v3302
        %3903 = vmatpush1.msra.mxu0 %v3301
        %3904 = vmatprep.subr.mxu0 %v3318
        %3905 = vmatpush1.msra.mxu0 %v3317
        %3906 = vmatprep.subr.mxu0 %v3334
        %3907 = vmatpush1.msra.mxu0 %v3333
        %3908 = vmatprep.subr.mxu0 %v3350
        %3909 = vmatpush1.msra.mxu0 %v3349
        %3910 = vmatprep.subr.mxu0 %v3366
        %3911 = vmatpush1.msra.mxu0 %v3365
        %3912 = vmatprep.subr.mxu0 %v3382
        %3913 = vmatpush1.msra.mxu0 %v3381
        %3914 = vmatprep.subr.mxu0 %v3398
        %3915 = vmatpush1.msra.mxu0 %v3397
        %3916 = vmatprep.subr.mxu0 %v3414
        %3917 = vmatpush1.msra.mxu0 %v3413
        %3918 = vmatprep.subr.mxu0 %v3430
        %3919 = vmatpush1.msra.mxu0 %v3429
        %3920 = vmatprep.subr.mxu0 %v3446
        %3921 = vmatpush1.msra.mxu0 %v3445
        %3922 = vmatprep.subr.mxu0 0.0
        %3923 = vmatpush1.msra.mxu0 0.0
        %3924 = vmatprep.subr.mxu0 0.0
        %3925 = vmatpush1.msra.mxu0 0.0
        %3926 = vmatprep.subr.mxu0 0.0
        %3927 = vmatpush1.msra.mxu0 0.0
        %3928 = vmatprep.subr.mxu0 0.0
        %3929 = vmatpush1.msra.mxu0 0.0
        %3930 = vmatprep.subr.mxu0 0.0
        %3931 = vmatpush1.msra.mxu0 0.0
        %3932 = vmatprep.subr.mxu0 0.0
        %3933 = vmatpush1.msra.mxu0 0.0
        %3934 = vmatprep.subr.mxu0 0.0
        %3935 = vmatpush1.msra.mxu0 0.0
        %3936 = vmatprep.subr.mxu0 0.0
        %3937 = vmatpush1.msra.mxu0 0.0
        %3938 = vmatprep.subr.mxu0 0.0
        %3939 = vmatpush1.msra.mxu0 0.0
        %3940 = vmatprep.subr.mxu0 0.0
        %3941 = vmatpush1.msra.mxu0 0.0
        %3942 = vmatprep.subr.mxu0 0.0
        %3943 = vmatpush1.msra.mxu0 0.0
        %3944 = vmatprep.subr.mxu0 0.0
        %3945 = vmatpush1.msra.mxu0 0.0
        %3946 = vmatprep.subr.mxu0 0.0
        %3947 = vmatpush1.msra.mxu0 0.0
        %3948 = vmatprep.subr.mxu0 0.0
        %3949 = vmatpush1.msra.mxu0 0.0
        %3950 = vmatprep.subr.mxu0 0.0
        %3951 = vmatpush1.msra.mxu0 0.0
        %3952 = vmatprep.subr.mxu0 0.0
        %3953 = vmatpush1.msra.mxu0 0.0
        %3954 = vmatprep.mubr.f32.mxu0 0.0
        %3955 = vmatmul.mubr.f32.gmra.mrb[0].mxu0 %v3194
        %v3956 = vpop.f32.mrb[0].mxu0
        %v3957 = vadd.f32 %v3498, %v3956
        %v3958 = vpop.f32.mrb[0].mxu0
        %v3959 = vadd.f32 %v3502, %v3958
        %3960 = vdwg.mxu0
        %3961 = vmatprep.subr.mxu0 %v3208
        %3962 = vmatpush1.msra.mxu0 %v3207
        %3963 = vmatprep.subr.mxu0 %v3224
        %3964 = vmatpush1.msra.mxu0 %v3223
        %3965 = vmatprep.subr.mxu0 %v3240
        %3966 = vmatpush1.msra.mxu0 %v3239
        %3967 = vmatprep.subr.mxu0 %v3256
        %3968 = vmatpush1.msra.mxu0 %v3255
        %3969 = vmatprep.subr.mxu0 %v3272
        %3970 = vmatpush1.msra.mxu0 %v3271
        %3971 = vmatprep.subr.mxu0 %v3288
        %3972 = vmatpush1.msra.mxu0 %v3287
        %3973 = vmatprep.subr.mxu0 %v3304
        %3974 = vmatpush1.msra.mxu0 %v3303
        %3975 = vmatprep.subr.mxu0 %v3320
        %3976 = vmatpush1.msra.mxu0 %v3319
        %3977 = vmatprep.subr.mxu0 %v3336
        %3978 = vmatpush1.msra.mxu0 %v3335
        %3979 = vmatprep.subr.mxu0 %v3352
        %3980 = vmatpush1.msra.mxu0 %v3351
        %3981 = vmatprep.subr.mxu0 %v3368
        %3982 = vmatpush1.msra.mxu0 %v3367
        %3983 = vmatprep.subr.mxu0 %v3384
        %3984 = vmatpush1.msra.mxu0 %v3383
        %3985 = vmatprep.subr.mxu0 %v3400
        %3986 = vmatpush1.msra.mxu0 %v3399
        %3987 = vmatprep.subr.mxu0 %v3416
        %3988 = vmatpush1.msra.mxu0 %v3415
        %3989 = vmatprep.subr.mxu0 %v3432
        %3990 = vmatpush1.msra.mxu0 %v3431
        %3991 = vmatprep.subr.mxu0 %v3448
        %3992 = vmatpush1.msra.mxu0 %v3447
        %3993 = vmatprep.subr.mxu0 0.0
        %3994 = vmatpush1.msra.mxu0 0.0
        %3995 = vmatprep.subr.mxu0 0.0
        %3996 = vmatpush1.msra.mxu0 0.0
        %3997 = vmatprep.subr.mxu0 0.0
        %3998 = vmatpush1.msra.mxu0 0.0
        %3999 = vmatprep.subr.mxu0 0.0
        %4000 = vmatpush1.msra.mxu0 0.0
        %4001 = vmatprep.subr.mxu0 0.0
        %4002 = vmatpush1.msra.mxu0 0.0
        %4003 = vmatprep.subr.mxu0 0.0
        %4004 = vmatpush1.msra.mxu0 0.0
        %4005 = vmatprep.subr.mxu0 0.0
        %4006 = vmatpush1.msra.mxu0 0.0
        %4007 = vmatprep.subr.mxu0 0.0
        %4008 = vmatpush1.msra.mxu0 0.0
        %4009 = vmatprep.subr.mxu0 0.0
        %4010 = vmatpush1.msra.mxu0 0.0
        %4011 = vmatprep.subr.mxu0 0.0
        %4012 = vmatpush1.msra.mxu0 0.0
        %4013 = vmatprep.subr.mxu0 0.0
        %4014 = vmatpush1.msra.mxu0 0.0
        %4015 = vmatprep.subr.mxu0 0.0
        %4016 = vmatpush1.msra.mxu0 0.0
        %4017 = vmatprep.subr.mxu0 0.0
        %4018 = vmatpush1.msra.mxu0 0.0
        %4019 = vmatprep.subr.mxu0 0.0
        %4020 = vmatpush1.msra.mxu0 0.0
        %4021 = vmatprep.subr.mxu0 0.0
        %4022 = vmatpush1.msra.mxu0 0.0
        %4023 = vmatprep.subr.mxu0 0.0
        %4024 = vmatpush1.msra.mxu0 0.0
        %4025 = vmatprep.mubr.f32.mxu0 0.0
        %4026 = vmatmul.mubr.f32.gmra.mrb[0].mxu0 %v3194
        %v4027 = vpop.f32.mrb[0].mxu0
        %v4028 = vadd.f32 %v3506, %v4027
        %v4029 = vpop.f32.mrb[0].mxu0
        %v4030 = vadd.f32 %v3510, %v4029
        %4031 = vdwg.mxu0
        %4032 = vmatprep.subr.mxu0 %v3210
        %4033 = vmatpush1.msra.mxu0 %v3209
        %4034 = vmatprep.subr.mxu0 %v3226
        %4035 = vmatpush1.msra.mxu0 %v3225
        %4036 = vmatprep.subr.mxu0 %v3242
        %4037 = vmatpush1.msra.mxu0 %v3241
        %4038 = vmatprep.subr.mxu0 %v3258
        %4039 = vmatpush1.msra.mxu0 %v3257
        %4040 = vmatprep.subr.mxu0 %v3274
        %4041 = vmatpush1.msra.mxu0 %v3273
        %4042 = vmatprep.subr.mxu0 %v3290
        %4043 = vmatpush1.msra.mxu0 %v3289
        %4044 = vmatprep.subr.mxu0 %v3306
        %4045 = vmatpush1.msra.mxu0 %v3305
        %4046 = vmatprep.subr.mxu0 %v3322
        %4047 = vmatpush1.msra.mxu0 %v3321
        %4048 = vmatprep.subr.mxu0 %v3338
        %4049 = vmatpush1.msra.mxu0 %v3337
        %4050 = vmatprep.subr.mxu0 %v3354
        %4051 = vmatpush1.msra.mxu0 %v3353
        %4052 = vmatprep.subr.mxu0 %v3370
        %4053 = vmatpush1.msra.mxu0 %v3369
        %4054 = vmatprep.subr.mxu0 %v3386
        %4055 = vmatpush1.msra.mxu0 %v3385
        %4056 = vmatprep.subr.mxu0 %v3402
        %4057 = vmatpush1.msra.mxu0 %v3401
        %4058 = vmatprep.subr.mxu0 %v3418
        %4059 = vmatpush1.msra.mxu0 %v3417
        %4060 = vmatprep.subr.mxu0 %v3434
        %4061 = vmatpush1.msra.mxu0 %v3433
        %4062 = vmatprep.subr.mxu0 %v3450
        %4063 = vmatpush1.msra.mxu0 %v3449
        %4064 = vmatprep.subr.mxu0 0.0
        %4065 = vmatpush1.msra.mxu0 0.0
        %4066 = vmatprep.subr.mxu0 0.0
        %4067 = vmatpush1.msra.mxu0 0.0
        %4068 = vmatprep.subr.mxu0 0.0
        %4069 = vmatpush1.msra.mxu0 0.0
        %4070 = vmatprep.subr.mxu0 0.0
        %4071 = vmatpush1.msra.mxu0 0.0
        %4072 = vmatprep.subr.mxu0 0.0
        %4073 = vmatpush1.msra.mxu0 0.0
        %4074 = vmatprep.subr.mxu0 0.0
        %4075 = vmatpush1.msra.mxu0 0.0
        %4076 = vmatprep.subr.mxu0 0.0
        %4077 = vmatpush1.msra.mxu0 0.0
        %4078 = vmatprep.subr.mxu0 0.0
        %4079 = vmatpush1.msra.mxu0 0.0
        %4080 = vmatprep.subr.mxu0 0.0
        %4081 = vmatpush1.msra.mxu0 0.0
        %4082 = vmatprep.subr.mxu0 0.0
        %4083 = vmatpush1.msra.mxu0 0.0
        %4084 = vmatprep.subr.mxu0 0.0
        %4085 = vmatpush1.msra.mxu0 0.0
        %4086 = vmatprep.subr.mxu0 0.0
        %4087 = vmatpush1.msra.mxu0 0.0
        %4088 = vmatprep.subr.mxu0 0.0
        %4089 = vmatpush1.msra.mxu0 0.0
        %4090 = vmatprep.subr.mxu0 0.0
        %4091 = vmatpush1.msra.mxu0 0.0
        %4092 = vmatprep.subr.mxu0 0.0
        %4093 = vmatpush1.msra.mxu0 0.0
        %4094 = vmatprep.subr.mxu0 0.0
        %4095 = vmatpush1.msra.mxu0 0.0
        %4096 = vmatprep.mubr.f32.mxu0 0.0
        %4097 = vmatmul.mubr.f32.gmra.mrb[0].mxu0 %v3194
        %v4098 = vpop.f32.mrb[0].mxu0
        %v4099 = vadd.f32 %v3514, %v4098
        %v4100 = vpop.f32.mrb[0].mxu0
        %v4101 = vadd.f32 %v3518, %v4100
        %4102 = vdwg.mxu0
        %v4103 = vmax.f32 %v3602, 0.0
        %v4104 = vmax.f32 %v3604, 0.0
        %v4105 = vmax.f32 %v3673, 0.0
        %v4106 = vmax.f32 %v3675, 0.0
        %v4107 = vmax.f32 %v3744, 0.0
        %v4108 = vmax.f32 %v3746, 0.0
        %v4109 = vmax.f32 %v3815, 0.0
        %v4110 = vmax.f32 %v3817, 0.0
        %v4111 = vmax.f32 %v3886, 0.0
        %v4112 = vmax.f32 %v3888, 0.0
        %v4113 = vmax.f32 %v3957, 0.0
        %v4114 = vmax.f32 %v3959, 0.0
        %v4115 = vmax.f32 %v4028, 0.0
        %v4116 = vmax.f32 %v4030, 0.0
        %v4117 = vmax.f32 %v4099, 0.0
        %v4118 = vmax.f32 %v4101, 0.0
        %v4119 = vld [vmem:[#allocation7] sm:$0xff]
        %v4120 = vld [vmem:[#allocation7 + $0x8] sm:$0xff]
        %v4121 = vld [vmem:[#allocation7 + $0x10] sm:$0xff]
        %v4122 = vld [vmem:[#allocation7 + $0x18] sm:$0xff]
        %v4123 = vld [vmem:[#allocation7 + $0x20] sm:$0xff]
        %v4124 = vld [vmem:[#allocation7 + $0x28] sm:$0xff]
        %v4125 = vld [vmem:[#allocation7 + $0x30] sm:$0xff]
        %v4126 = vld [vmem:[#allocation7 + $0x38] sm:$0xff]
        %v4127 = vld [vmem:[#allocation7 + $0x40] sm:$0xff]
        %v4128 = vld [vmem:[#allocation7 + $0x48] sm:$0xff]
        %v4129 = vld [vmem:[#allocation7 + $0x50] sm:$0xff]
        %v4130 = vld [vmem:[#allocation7 + $0x58] sm:$0xff]
        %v4131 = vld [vmem:[#allocation7 + $0x60] sm:$0xff]
        %v4132 = vld [vmem:[#allocation7 + $0x68] sm:$0xff]
        %v4133 = vld [vmem:[#allocation7 + $0x70] sm:$0xff]
        %v4134 = vld [vmem:[#allocation7 + $0x78] sm:$0xff]
        %v4135 = vld [vmem:[#allocation7 + $0x80] sm:$0xff]
        %v4136 = vld [vmem:[#allocation7 + $0x88] sm:$0xff]
        %v4137 = vld [vmem:[#allocation7 + $0x90] sm:$0xff]
        %v4138 = vld [vmem:[#allocation7 + $0x98] sm:$0xff]
        %v4139 = vld [vmem:[#allocation7 + $0xa0] sm:$0xff]
        %v4140 = vld [vmem:[#allocation7 + $0xa8] sm:$0xff]
        %v4141 = vld [vmem:[#allocation7 + $0xb0] sm:$0xff]
        %v4142 = vld [vmem:[#allocation7 + $0xb8] sm:$0xff]
        %v4143 = vld [vmem:[#allocation7 + $0xc0] sm:$0xff]
        %v4144 = vld [vmem:[#allocation7 + $0xc8] sm:$0xff]
        %v4145 = vld [vmem:[#allocation7 + $0xd0] sm:$0xff]
        %v4146 = vld [vmem:[#allocation7 + $0xd8] sm:$0xff]
        %v4147 = vld [vmem:[#allocation7 + $0xe0] sm:$0xff]
        %v4148 = vld [vmem:[#allocation7 + $0xe8] sm:$0xff]
        %v4149 = vld [vmem:[#allocation7 + $0xf0] sm:$0xff]
        %v4150 = vld [vmem:[#allocation7 + $0xf8] sm:$0xff]
        %v4151 = vld [vmem:[#allocation7 + $0x100] sm:$0xff]
        %v4152 = vld [vmem:[#allocation7 + $0x108] sm:$0xff]
        %v4153 = vld [vmem:[#allocation7 + $0x110] sm:$0xff]
        %v4154 = vld [vmem:[#allocation7 + $0x118] sm:$0xff]
        %v4155 = vld [vmem:[#allocation7 + $0x120] sm:$0xff]
        %v4156 = vld [vmem:[#allocation7 + $0x128] sm:$0xff]
        %v4157 = vld [vmem:[#allocation7 + $0x130] sm:$0xff]
        %v4158 = vld [vmem:[#allocation7 + $0x138] sm:$0xff]
        %v4159 = vld [vmem:[#allocation7 + $0x140] sm:$0xff]
        %v4160 = vld [vmem:[#allocation7 + $0x148] sm:$0xff]
        %v4161 = vld [vmem:[#allocation7 + $0x150] sm:$0xff]
        %v4162 = vld [vmem:[#allocation7 + $0x158] sm:$0xff]
        %v4163 = vld [vmem:[#allocation7 + $0x160] sm:$0xff]
        %v4164 = vld [vmem:[#allocation7 + $0x168] sm:$0xff]
        %v4165 = vld [vmem:[#allocation7 + $0x170] sm:$0xff]
        %v4166 = vld [vmem:[#allocation7 + $0x178] sm:$0xff]
        %v4167 = vld [vmem:[#allocation7 + $0x180] sm:$0xff]
        %v4168 = vld [vmem:[#allocation7 + $0x188] sm:$0xff]
        %v4169 = vld [vmem:[#allocation7 + $0x190] sm:$0xff]
        %v4170 = vld [vmem:[#allocation7 + $0x198] sm:$0xff]
        %v4171 = vld [vmem:[#allocation7 + $0x1a0] sm:$0xff]
        %v4172 = vld [vmem:[#allocation7 + $0x1a8] sm:$0xff]
        %v4173 = vld [vmem:[#allocation7 + $0x1b0] sm:$0xff]
        %v4174 = vld [vmem:[#allocation7 + $0x1b8] sm:$0xff]
        %v4175 = vld [vmem:[#allocation7 + $0x1c0] sm:$0xff]
        %v4176 = vld [vmem:[#allocation7 + $0x1c8] sm:$0xff]
        %v4177 = vld [vmem:[#allocation7 + $0x1d0] sm:$0xff]
        %v4178 = vld [vmem:[#allocation7 + $0x1d8] sm:$0xff]
        %v4179 = vld [vmem:[#allocation7 + $0x1e0] sm:$0xff]
        %v4180 = vld [vmem:[#allocation7 + $0x1e8] sm:$0xff]
        %v4181 = vld [vmem:[#allocation7 + $0x1f0] sm:$0xff]
        %v4182 = vld [vmem:[#allocation7 + $0x1f8] sm:$0xff]
        %v4183 = vld [vmem:[#allocation7 + $0x200] sm:$0xff]
        %v4184 = vld [vmem:[#allocation7 + $0x208] sm:$0xff]
        %v4185 = vld [vmem:[#allocation7 + $0x210] sm:$0xff]
        %v4186 = vld [vmem:[#allocation7 + $0x218] sm:$0xff]
        %v4187 = vld [vmem:[#allocation7 + $0x220] sm:$0xff]
        %v4188 = vld [vmem:[#allocation7 + $0x228] sm:$0xff]
        %v4189 = vld [vmem:[#allocation7 + $0x230] sm:$0xff]
        %v4190 = vld [vmem:[#allocation7 + $0x238] sm:$0xff]
        %v4191 = vld [vmem:[#allocation7 + $0x240] sm:$0xff]
        %v4192 = vld [vmem:[#allocation7 + $0x248] sm:$0xff]
        %v4193 = vld [vmem:[#allocation7 + $0x250] sm:$0xff]
        %v4194 = vld [vmem:[#allocation7 + $0x258] sm:$0xff]
        %v4195 = vld [vmem:[#allocation7 + $0x260] sm:$0xff]
        %v4196 = vld [vmem:[#allocation7 + $0x268] sm:$0xff]
        %v4197 = vld [vmem:[#allocation7 + $0x270] sm:$0xff]
        %v4198 = vld [vmem:[#allocation7 + $0x278] sm:$0xff]
        %v4199 = vld [vmem:[#allocation7 + $0x280] sm:$0xff]
        %v4200 = vld [vmem:[#allocation7 + $0x288] sm:$0xff]
        %v4201 = vld [vmem:[#allocation7 + $0x290] sm:$0xff]
        %v4202 = vld [vmem:[#allocation7 + $0x298] sm:$0xff]
        %v4203 = vld [vmem:[#allocation7 + $0x2a0] sm:$0xff]
        %v4204 = vld [vmem:[#allocation7 + $0x2a8] sm:$0xff]
        %v4205 = vld [vmem:[#allocation7 + $0x2b0] sm:$0xff]
        %v4206 = vld [vmem:[#allocation7 + $0x2b8] sm:$0xff]
        %v4207 = vld [vmem:[#allocation7 + $0x2c0] sm:$0xff]
        %v4208 = vld [vmem:[#allocation7 + $0x2c8] sm:$0xff]
        %v4209 = vld [vmem:[#allocation7 + $0x2d0] sm:$0xff]
        %v4210 = vld [vmem:[#allocation7 + $0x2d8] sm:$0xff]
        %v4211 = vld [vmem:[#allocation7 + $0x2e0] sm:$0xff]
        %v4212 = vld [vmem:[#allocation7 + $0x2e8] sm:$0xff]
        %v4213 = vld [vmem:[#allocation7 + $0x2f0] sm:$0xff]
        %v4214 = vld [vmem:[#allocation7 + $0x2f8] sm:$0xff]
        %v4215 = vld [vmem:[#allocation7 + $0x300] sm:$0xff]
        %v4216 = vld [vmem:[#allocation7 + $0x308] sm:$0xff]
        %v4217 = vld [vmem:[#allocation7 + $0x310] sm:$0xff]
        %v4218 = vld [vmem:[#allocation7 + $0x318] sm:$0xff]
        %v4219 = vld [vmem:[#allocation7 + $0x320] sm:$0xff]
        %v4220 = vld [vmem:[#allocation7 + $0x328] sm:$0xff]
        %v4221 = vld [vmem:[#allocation7 + $0x330] sm:$0xff]
        %v4222 = vld [vmem:[#allocation7 + $0x338] sm:$0xff]
        %v4223 = vld [vmem:[#allocation7 + $0x340] sm:$0xff]
        %v4224 = vld [vmem:[#allocation7 + $0x348] sm:$0xff]
        %v4225 = vld [vmem:[#allocation7 + $0x350] sm:$0xff]
        %v4226 = vld [vmem:[#allocation7 + $0x358] sm:$0xff]
        %v4227 = vld [vmem:[#allocation7 + $0x360] sm:$0xff]
        %v4228 = vld [vmem:[#allocation7 + $0x368] sm:$0xff]
        %v4229 = vld [vmem:[#allocation7 + $0x370] sm:$0xff]
        %v4230 = vld [vmem:[#allocation7 + $0x378] sm:$0xff]
        %v4231 = vld [vmem:[#allocation7 + $0x380] sm:$0xff]
        %v4232 = vld [vmem:[#allocation7 + $0x388] sm:$0xff]
        %v4233 = vld [vmem:[#allocation7 + $0x390] sm:$0xff]
        %v4234 = vld [vmem:[#allocation7 + $0x398] sm:$0xff]
        %v4235 = vld [vmem:[#allocation7 + $0x3a0] sm:$0xff]
        %v4236 = vld [vmem:[#allocation7 + $0x3a8] sm:$0xff]
        %v4237 = vld [vmem:[#allocation7 + $0x3b0] sm:$0xff]
        %v4238 = vld [vmem:[#allocation7 + $0x3b8] sm:$0xff]
        %v4239 = vld [vmem:[#allocation7 + $0x3c0] sm:$0xff]
        %v4240 = vld [vmem:[#allocation7 + $0x3c8] sm:$0xff]
        %v4241 = vld [vmem:[#allocation7 + $0x3d0] sm:$0xff]
        %v4242 = vld [vmem:[#allocation7 + $0x3d8] sm:$0xff]
        %v4243 = vld [vmem:[#allocation7 + $0x3e0] sm:$0xff]
        %v4244 = vld [vmem:[#allocation7 + $0x3e8] sm:$0xff]
        %v4245 = vld [vmem:[#allocation7 + $0x3f0] sm:$0xff]
        %v4246 = vld [vmem:[#allocation7 + $0x3f8] sm:$0xff]
        %v4247 = vld [vmem:[#allocation7 + $0x400] sm:$0xff]
        %v4248 = vld [vmem:[#allocation7 + $0x408] sm:$0xff]
        %v4249 = vld [vmem:[#allocation7 + $0x410] sm:$0xff]
        %v4250 = vld [vmem:[#allocation7 + $0x418] sm:$0xff]
        %v4251 = vld [vmem:[#allocation7 + $0x420] sm:$0xff]
        %v4252 = vld [vmem:[#allocation7 + $0x428] sm:$0xff]
        %v4253 = vld [vmem:[#allocation7 + $0x430] sm:$0xff]
        %v4254 = vld [vmem:[#allocation7 + $0x438] sm:$0xff]
        %v4255 = vld [vmem:[#allocation7 + $0x440] sm:$0xff]
        %v4256 = vld [vmem:[#allocation7 + $0x448] sm:$0xff]
        %v4257 = vld [vmem:[#allocation7 + $0x450] sm:$0xff]
        %v4258 = vld [vmem:[#allocation7 + $0x458] sm:$0xff]
        %v4259 = vld [vmem:[#allocation7 + $0x460] sm:$0xff]
        %v4260 = vld [vmem:[#allocation7 + $0x468] sm:$0xff]
        %v4261 = vld [vmem:[#allocation7 + $0x470] sm:$0xff]
        %v4262 = vld [vmem:[#allocation7 + $0x478] sm:$0xff]
        %v4263 = vld [vmem:[#allocation7 + $0x480] sm:$0xff]
        %v4264 = vld [vmem:[#allocation7 + $0x488] sm:$0xff]
        %v4265 = vld [vmem:[#allocation7 + $0x490] sm:$0xff]
        %v4266 = vld [vmem:[#allocation7 + $0x498] sm:$0xff]
        %v4267 = vld [vmem:[#allocation7 + $0x4a0] sm:$0xff]
        %v4268 = vld [vmem:[#allocation7 + $0x4a8] sm:$0xff]
        %v4269 = vld [vmem:[#allocation7 + $0x4b0] sm:$0xff]
        %v4270 = vld [vmem:[#allocation7 + $0x4b8] sm:$0xff]
        %v4271 = vld [vmem:[#allocation7 + $0x4c0] sm:$0xff]
        %v4272 = vld [vmem:[#allocation7 + $0x4c8] sm:$0xff]
        %v4273 = vld [vmem:[#allocation7 + $0x4d0] sm:$0xff]
        %v4274 = vld [vmem:[#allocation7 + $0x4d8] sm:$0xff]
        %v4275 = vld [vmem:[#allocation7 + $0x4e0] sm:$0xff]
        %v4276 = vld [vmem:[#allocation7 + $0x4e8] sm:$0xff]
        %v4277 = vld [vmem:[#allocation7 + $0x4f0] sm:$0xff]
        %v4278 = vld [vmem:[#allocation7 + $0x4f8] sm:$0xff]
        %v4279 = vld [vmem:[#allocation7 + $0x500] sm:$0xff]
        %v4280 = vld [vmem:[#allocation7 + $0x508] sm:$0xff]
        %v4281 = vld [vmem:[#allocation7 + $0x510] sm:$0xff]
        %v4282 = vld [vmem:[#allocation7 + $0x518] sm:$0xff]
        %v4283 = vld [vmem:[#allocation7 + $0x520] sm:$0xff]
        %v4284 = vld [vmem:[#allocation7 + $0x528] sm:$0xff]
        %v4285 = vld [vmem:[#allocation7 + $0x530] sm:$0xff]
        %v4286 = vld [vmem:[#allocation7 + $0x538] sm:$0xff]
        %v4287 = vld [vmem:[#allocation7 + $0x540] sm:$0xff]
        %v4288 = vld [vmem:[#allocation7 + $0x548] sm:$0xff]
        %v4289 = vld [vmem:[#allocation7 + $0x550] sm:$0xff]
        %v4290 = vld [vmem:[#allocation7 + $0x558] sm:$0xff]
        %v4291 = vld [vmem:[#allocation7 + $0x560] sm:$0xff]
        %v4292 = vld [vmem:[#allocation7 + $0x568] sm:$0xff]
        %v4293 = vld [vmem:[#allocation7 + $0x570] sm:$0xff]
        %v4294 = vld [vmem:[#allocation7 + $0x578] sm:$0xff]
        %v4295 = vld [vmem:[#allocation7 + $0x580] sm:$0xff]
        %v4296 = vld [vmem:[#allocation7 + $0x588] sm:$0xff]
        %v4297 = vld [vmem:[#allocation7 + $0x590] sm:$0xff]
        %v4298 = vld [vmem:[#allocation7 + $0x598] sm:$0xff]
        %v4299 = vld [vmem:[#allocation7 + $0x5a0] sm:$0xff]
        %v4300 = vld [vmem:[#allocation7 + $0x5a8] sm:$0xff]
        %v4301 = vld [vmem:[#allocation7 + $0x5b0] sm:$0xff]
        %v4302 = vld [vmem:[#allocation7 + $0x5b8] sm:$0xff]
        %v4303 = vld [vmem:[#allocation7 + $0x5c0] sm:$0xff]
        %v4304 = vld [vmem:[#allocation7 + $0x5c8] sm:$0xff]
        %v4305 = vld [vmem:[#allocation7 + $0x5d0] sm:$0xff]
        %v4306 = vld [vmem:[#allocation7 + $0x5d8] sm:$0xff]
        %v4307 = vld [vmem:[#allocation7 + $0x5e0] sm:$0xff]
        %v4308 = vld [vmem:[#allocation7 + $0x5e8] sm:$0xff]
        %v4309 = vld [vmem:[#allocation7 + $0x5f0] sm:$0xff]
        %v4310 = vld [vmem:[#allocation7 + $0x5f8] sm:$0xff]
        %v4311 = vld [vmem:[#allocation7 + $0x600] sm:$0xff]
        %v4312 = vld [vmem:[#allocation7 + $0x608] sm:$0xff]
        %v4313 = vld [vmem:[#allocation7 + $0x610] sm:$0xff]
        %v4314 = vld [vmem:[#allocation7 + $0x618] sm:$0xff]
        %v4315 = vld [vmem:[#allocation7 + $0x620] sm:$0xff]
        %v4316 = vld [vmem:[#allocation7 + $0x628] sm:$0xff]
        %v4317 = vld [vmem:[#allocation7 + $0x630] sm:$0xff]
        %v4318 = vld [vmem:[#allocation7 + $0x638] sm:$0xff]
        %v4319 = vld [vmem:[#allocation7 + $0x640] sm:$0xff]
        %v4320 = vld [vmem:[#allocation7 + $0x648] sm:$0xff]
        %v4321 = vld [vmem:[#allocation7 + $0x650] sm:$0xff]
        %v4322 = vld [vmem:[#allocation7 + $0x658] sm:$0xff]
        %v4323 = vld [vmem:[#allocation7 + $0x660] sm:$0xff]
        %v4324 = vld [vmem:[#allocation7 + $0x668] sm:$0xff]
        %v4325 = vld [vmem:[#allocation7 + $0x670] sm:$0xff]
        %v4326 = vld [vmem:[#allocation7 + $0x678] sm:$0xff]
        %v4327 = vld [vmem:[#allocation7 + $0x680] sm:$0xff]
        %v4328 = vld [vmem:[#allocation7 + $0x688] sm:$0xff]
        %v4329 = vld [vmem:[#allocation7 + $0x690] sm:$0xff]
        %v4330 = vld [vmem:[#allocation7 + $0x698] sm:$0xff]
        %v4331 = vld [vmem:[#allocation7 + $0x6a0] sm:$0xff]
        %v4332 = vld [vmem:[#allocation7 + $0x6a8] sm:$0xff]
        %v4333 = vld [vmem:[#allocation7 + $0x6b0] sm:$0xff]
        %v4334 = vld [vmem:[#allocation7 + $0x6b8] sm:$0xff]
        %v4335 = vld [vmem:[#allocation7 + $0x6c0] sm:$0xff]
        %v4336 = vld [vmem:[#allocation7 + $0x6c8] sm:$0xff]
        %v4337 = vld [vmem:[#allocation7 + $0x6d0] sm:$0xff]
        %v4338 = vld [vmem:[#allocation7 + $0x6d8] sm:$0xff]
        %v4339 = vld [vmem:[#allocation7 + $0x6e0] sm:$0xff]
        %v4340 = vld [vmem:[#allocation7 + $0x6e8] sm:$0xff]
        %v4341 = vld [vmem:[#allocation7 + $0x6f0] sm:$0xff]
        %v4342 = vld [vmem:[#allocation7 + $0x6f8] sm:$0xff]
        %v4343 = vld [vmem:[#allocation7 + $0x700] sm:$0xff]
        %v4344 = vld [vmem:[#allocation7 + $0x708] sm:$0xff]
        %v4345 = vld [vmem:[#allocation7 + $0x710] sm:$0xff]
        %v4346 = vld [vmem:[#allocation7 + $0x718] sm:$0xff]
        %v4347 = vld [vmem:[#allocation7 + $0x720] sm:$0xff]
        %v4348 = vld [vmem:[#allocation7 + $0x728] sm:$0xff]
        %v4349 = vld [vmem:[#allocation7 + $0x730] sm:$0xff]
        %v4350 = vld [vmem:[#allocation7 + $0x738] sm:$0xff]
        %v4351 = vld [vmem:[#allocation7 + $0x740] sm:$0xff]
        %v4352 = vld [vmem:[#allocation7 + $0x748] sm:$0xff]
        %v4353 = vld [vmem:[#allocation7 + $0x750] sm:$0xff]
        %v4354 = vld [vmem:[#allocation7 + $0x758] sm:$0xff]
        %v4355 = vld [vmem:[#allocation7 + $0x760] sm:$0xff]
        %v4356 = vld [vmem:[#allocation7 + $0x768] sm:$0xff]
        %v4357 = vld [vmem:[#allocation7 + $0x770] sm:$0xff]
        %v4358 = vld [vmem:[#allocation7 + $0x778] sm:$0xff]
        %v4359 = vld [vmem:[#allocation7 + $0x780] sm:$0xff]
        %v4360 = vld [vmem:[#allocation7 + $0x788] sm:$0xff]
        %v4361 = vld [vmem:[#allocation7 + $0x790] sm:$0xff]
        %v4362 = vld [vmem:[#allocation7 + $0x798] sm:$0xff]
        %v4363 = vld [vmem:[#allocation7 + $0x7a0] sm:$0xff]
        %v4364 = vld [vmem:[#allocation7 + $0x7a8] sm:$0xff]
        %v4365 = vld [vmem:[#allocation7 + $0x7b0] sm:$0xff]
        %v4366 = vld [vmem:[#allocation7 + $0x7b8] sm:$0xff]
        %v4367 = vld [vmem:[#allocation7 + $0x7c0] sm:$0xff]
        %v4368 = vld [vmem:[#allocation7 + $0x7c8] sm:$0xff]
        %v4369 = vld [vmem:[#allocation7 + $0x7d0] sm:$0xff]
        %v4370 = vld [vmem:[#allocation7 + $0x7d8] sm:$0xff]
        %v4371 = vld [vmem:[#allocation7 + $0x7e0] sm:$0xff]
        %v4372 = vld [vmem:[#allocation7 + $0x7e8] sm:$0xff]
        %v4373 = vld [vmem:[#allocation7 + $0x7f0] sm:$0xff]
        %v4374 = vld [vmem:[#allocation7 + $0x7f8] sm:$0xff]
        %v4375 = vlaneseq
        %v4376 = vshrl.u32 %v4375, 7
        %v4377 = vsub.s32 1, %v4376
        %v4378 = vrot.slane %v559, %v4377
        %4379 = vmatprep.subr.mxu0 0.0
        %4380 = vmatpush1.msra.mxu0 %v4119
        %4381 = vmatprep.subr.mxu0 0.0
        %4382 = vmatpush1.msra.mxu0 %v4120
        %4383 = vmatprep.subr.mxu0 0.0
        %4384 = vmatpush1.msra.mxu0 %v4121
        %4385 = vmatprep.subr.mxu0 0.0
        %4386 = vmatpush1.msra.mxu0 %v4122
        %4387 = vmatprep.subr.mxu0 0.0
        %4388 = vmatpush1.msra.mxu0 %v4123
        %4389 = vmatprep.subr.mxu0 0.0
        %4390 = vmatpush1.msra.mxu0 %v4124
        %4391 = vmatprep.subr.mxu0 0.0
        %4392 = vmatpush1.msra.mxu0 %v4125
        %4393 = vmatprep.subr.mxu0 0.0
        %4394 = vmatpush1.msra.mxu0 %v4126
        %4395 = vmatprep.subr.mxu0 0.0
        %4396 = vmatpush1.msra.mxu0 %v4127
        %4397 = vmatprep.subr.mxu0 0.0
        %4398 = vmatpush1.msra.mxu0 %v4128
        %4399 = vmatprep.subr.mxu0 0.0
        %4400 = vmatpush1.msra.mxu0 %v4129
        %4401 = vmatprep.subr.mxu0 0.0
        %4402 = vmatpush1.msra.mxu0 %v4130
        %4403 = vmatprep.subr.mxu0 0.0
        %4404 = vmatpush1.msra.mxu0 %v4131
        %4405 = vmatprep.subr.mxu0 0.0
        %4406 = vmatpush1.msra.mxu0 %v4132
        %4407 = vmatprep.subr.mxu0 0.0
        %4408 = vmatpush1.msra.mxu0 %v4133
        %4409 = vmatprep.subr.mxu0 0.0
        %4410 = vmatpush1.msra.mxu0 %v4134
        %4411 = vmatprep.subr.mxu0 0.0
        %4412 = vmatpush1.msra.mxu0 %v4135
        %4413 = vmatprep.subr.mxu0 0.0
        %4414 = vmatpush1.msra.mxu0 %v4136
        %4415 = vmatprep.subr.mxu0 0.0
        %4416 = vmatpush1.msra.mxu0 %v4137
        %4417 = vmatprep.subr.mxu0 0.0
        %4418 = vmatpush1.msra.mxu0 %v4138
        %4419 = vmatprep.subr.mxu0 0.0
        %4420 = vmatpush1.msra.mxu0 %v4139
        %4421 = vmatprep.subr.mxu0 0.0
        %4422 = vmatpush1.msra.mxu0 %v4140
        %4423 = vmatprep.subr.mxu0 0.0
        %4424 = vmatpush1.msra.mxu0 %v4141
        %4425 = vmatprep.subr.mxu0 0.0
        %4426 = vmatpush1.msra.mxu0 %v4142
        %4427 = vmatprep.subr.mxu0 0.0
        %4428 = vmatpush1.msra.mxu0 %v4143
        %4429 = vmatprep.subr.mxu0 0.0
        %4430 = vmatpush1.msra.mxu0 %v4144
        %4431 = vmatprep.subr.mxu0 0.0
        %4432 = vmatpush1.msra.mxu0 %v4145
        %4433 = vmatprep.subr.mxu0 0.0
        %4434 = vmatpush1.msra.mxu0 %v4146
        %4435 = vmatprep.subr.mxu0 0.0
        %4436 = vmatpush1.msra.mxu0 %v4147
        %4437 = vmatprep.subr.mxu0 0.0
        %4438 = vmatpush1.msra.mxu0 %v4148
        %4439 = vmatprep.subr.mxu0 0.0
        %4440 = vmatpush1.msra.mxu0 %v4149
        %4441 = vmatprep.subr.mxu0 0.0
        %4442 = vmatpush1.msra.mxu0 %v4150
        %4443 = vmatprep.mubr.f32.mxu0 %v4104
        %4444 = vmatmul.mubr.f32.gmra.mrb[0].mxu0 %v4103
        %v4445 = vpop.f32.mrb[0].mxu0
        %v4446 = vadd.f32 %v4378, %v4445
        %v4447 = vpop.f32.mrb[0].mxu0
        %4448 = vdwg.mxu0
        %4449 = vmatprep.subr.mxu0 0.0
        %4450 = vmatpush1.msra.mxu0 %v4151
        %4451 = vmatprep.subr.mxu0 0.0
        %4452 = vmatpush1.msra.mxu0 %v4152
        %4453 = vmatprep.subr.mxu0 0.0
        %4454 = vmatpush1.msra.mxu0 %v4153
        %4455 = vmatprep.subr.mxu0 0.0
        %4456 = vmatpush1.msra.mxu0 %v4154
        %4457 = vmatprep.subr.mxu0 0.0
        %4458 = vmatpush1.msra.mxu0 %v4155
        %4459 = vmatprep.subr.mxu0 0.0
        %4460 = vmatpush1.msra.mxu0 %v4156
        %4461 = vmatprep.subr.mxu0 0.0
        %4462 = vmatpush1.msra.mxu0 %v4157
        %4463 = vmatprep.subr.mxu0 0.0
        %4464 = vmatpush1.msra.mxu0 %v4158
        %4465 = vmatprep.subr.mxu0 0.0
        %4466 = vmatpush1.msra.mxu0 %v4159
        %4467 = vmatprep.subr.mxu0 0.0
        %4468 = vmatpush1.msra.mxu0 %v4160
        %4469 = vmatprep.subr.mxu0 0.0
        %4470 = vmatpush1.msra.mxu0 %v4161
        %4471 = vmatprep.subr.mxu0 0.0
        %4472 = vmatpush1.msra.mxu0 %v4162
        %4473 = vmatprep.subr.mxu0 0.0
        %4474 = vmatpush1.msra.mxu0 %v4163
        %4475 = vmatprep.subr.mxu0 0.0
        %4476 = vmatpush1.msra.mxu0 %v4164
        %4477 = vmatprep.subr.mxu0 0.0
        %4478 = vmatpush1.msra.mxu0 %v4165
        %4479 = vmatprep.subr.mxu0 0.0
        %4480 = vmatpush1.msra.mxu0 %v4166
        %4481 = vmatprep.subr.mxu0 0.0
        %4482 = vmatpush1.msra.mxu0 %v4167
        %4483 = vmatprep.subr.mxu0 0.0
        %4484 = vmatpush1.msra.mxu0 %v4168
        %4485 = vmatprep.subr.mxu0 0.0
        %4486 = vmatpush1.msra.mxu0 %v4169
        %4487 = vmatprep.subr.mxu0 0.0
        %4488 = vmatpush1.msra.mxu0 %v4170
        %4489 = vmatprep.subr.mxu0 0.0
        %4490 = vmatpush1.msra.mxu0 %v4171
        %4491 = vmatprep.subr.mxu0 0.0
        %4492 = vmatpush1.msra.mxu0 %v4172
        %4493 = vmatprep.subr.mxu0 0.0
        %4494 = vmatpush1.msra.mxu0 %v4173
        %4495 = vmatprep.subr.mxu0 0.0
        %4496 = vmatpush1.msra.mxu0 %v4174
        %4497 = vmatprep.subr.mxu0 0.0
        %4498 = vmatpush1.msra.mxu0 %v4175
        %4499 = vmatprep.subr.mxu0 0.0
        %4500 = vmatpush1.msra.mxu0 %v4176
        %4501 = vmatprep.subr.mxu0 0.0
        %4502 = vmatpush1.msra.mxu0 %v4177
        %4503 = vmatprep.subr.mxu0 0.0
        %4504 = vmatpush1.msra.mxu0 %v4178
        %4505 = vmatprep.subr.mxu0 0.0
        %4506 = vmatpush1.msra.mxu0 %v4179
        %4507 = vmatprep.subr.mxu0 0.0
        %4508 = vmatpush1.msra.mxu0 %v4180
        %4509 = vmatprep.subr.mxu0 0.0
        %4510 = vmatpush1.msra.mxu0 %v4181
        %4511 = vmatprep.subr.mxu0 0.0
        %4512 = vmatpush1.msra.mxu0 %v4182
        %4513 = vmatprep.mubr.f32.mxu0 %v4106
        %4514 = vmatmul.mubr.f32.gmra.mrb[0].mxu0 %v4105
        %v4515 = vpop.f32.mrb[0].mxu0
        %v4516 = vadd.f32 %v4446, %v4515
        %v4517 = vpop.f32.mrb[0].mxu0
        %4518 = vdwg.mxu0
        %4519 = vmatprep.subr.mxu0 0.0
        %4520 = vmatpush1.msra.mxu0 %v4183
        %4521 = vmatprep.subr.mxu0 0.0
        %4522 = vmatpush1.msra.mxu0 %v4184
        %4523 = vmatprep.subr.mxu0 0.0
        %4524 = vmatpush1.msra.mxu0 %v4185
        %4525 = vmatprep.subr.mxu0 0.0
        %4526 = vmatpush1.msra.mxu0 %v4186
        %4527 = vmatprep.subr.mxu0 0.0
        %4528 = vmatpush1.msra.mxu0 %v4187
        %4529 = vmatprep.subr.mxu0 0.0
        %4530 = vmatpush1.msra.mxu0 %v4188
        %4531 = vmatprep.subr.mxu0 0.0
        %4532 = vmatpush1.msra.mxu0 %v4189
        %4533 = vmatprep.subr.mxu0 0.0
        %4534 = vmatpush1.msra.mxu0 %v4190
        %4535 = vmatprep.subr.mxu0 0.0
        %4536 = vmatpush1.msra.mxu0 %v4191
        %4537 = vmatprep.subr.mxu0 0.0
        %4538 = vmatpush1.msra.mxu0 %v4192
        %4539 = vmatprep.subr.mxu0 0.0
        %4540 = vmatpush1.msra.mxu0 %v4193
        %4541 = vmatprep.subr.mxu0 0.0
        %4542 = vmatpush1.msra.mxu0 %v4194
        %4543 = vmatprep.subr.mxu0 0.0
        %4544 = vmatpush1.msra.mxu0 %v4195
        %4545 = vmatprep.subr.mxu0 0.0
        %4546 = vmatpush1.msra.mxu0 %v4196
        %4547 = vmatprep.subr.mxu0 0.0
        %4548 = vmatpush1.msra.mxu0 %v4197
        %4549 = vmatprep.subr.mxu0 0.0
        %4550 = vmatpush1.msra.mxu0 %v4198
        %4551 = vmatprep.subr.mxu0 0.0
        %4552 = vmatpush1.msra.mxu0 %v4199
        %4553 = vmatprep.subr.mxu0 0.0
        %4554 = vmatpush1.msra.mxu0 %v4200
        %4555 = vmatprep.subr.mxu0 0.0
        %4556 = vmatpush1.msra.mxu0 %v4201
        %4557 = vmatprep.subr.mxu0 0.0
        %4558 = vmatpush1.msra.mxu0 %v4202
        %4559 = vmatprep.subr.mxu0 0.0
        %4560 = vmatpush1.msra.mxu0 %v4203
        %4561 = vmatprep.subr.mxu0 0.0
        %4562 = vmatpush1.msra.mxu0 %v4204
        %4563 = vmatprep.subr.mxu0 0.0
        %4564 = vmatpush1.msra.mxu0 %v4205
        %4565 = vmatprep.subr.mxu0 0.0
        %4566 = vmatpush1.msra.mxu0 %v4206
        %4567 = vmatprep.subr.mxu0 0.0
        %4568 = vmatpush1.msra.mxu0 %v4207
        %4569 = vmatprep.subr.mxu0 0.0
        %4570 = vmatpush1.msra.mxu0 %v4208
        %4571 = vmatprep.subr.mxu0 0.0
        %4572 = vmatpush1.msra.mxu0 %v4209
        %4573 = vmatprep.subr.mxu0 0.0
        %4574 = vmatpush1.msra.mxu0 %v4210
        %4575 = vmatprep.subr.mxu0 0.0
        %4576 = vmatpush1.msra.mxu0 %v4211
        %4577 = vmatprep.subr.mxu0 0.0
        %4578 = vmatpush1.msra.mxu0 %v4212
        %4579 = vmatprep.subr.mxu0 0.0
        %4580 = vmatpush1.msra.mxu0 %v4213
        %4581 = vmatprep.subr.mxu0 0.0
        %4582 = vmatpush1.msra.mxu0 %v4214
        %4583 = vmatprep.mubr.f32.mxu0 %v4108
        %4584 = vmatmul.mubr.f32.gmra.mrb[0].mxu0 %v4107
        %v4585 = vpop.f32.mrb[0].mxu0
        %v4586 = vadd.f32 %v4516, %v4585
        %v4587 = vpop.f32.mrb[0].mxu0
        %4588 = vdwg.mxu0
        %4589 = vmatprep.subr.mxu0 0.0
        %4590 = vmatpush1.msra.mxu0 %v4215
        %4591 = vmatprep.subr.mxu0 0.0
        %4592 = vmatpush1.msra.mxu0 %v4216
        %4593 = vmatprep.subr.mxu0 0.0
        %4594 = vmatpush1.msra.mxu0 %v4217
        %4595 = vmatprep.subr.mxu0 0.0
        %4596 = vmatpush1.msra.mxu0 %v4218
        %4597 = vmatprep.subr.mxu0 0.0
        %4598 = vmatpush1.msra.mxu0 %v4219
        %4599 = vmatprep.subr.mxu0 0.0
        %4600 = vmatpush1.msra.mxu0 %v4220
        %4601 = vmatprep.subr.mxu0 0.0
        %4602 = vmatpush1.msra.mxu0 %v4221
        %4603 = vmatprep.subr.mxu0 0.0
        %4604 = vmatpush1.msra.mxu0 %v4222
        %4605 = vmatprep.subr.mxu0 0.0
        %4606 = vmatpush1.msra.mxu0 %v4223
        %4607 = vmatprep.subr.mxu0 0.0
        %4608 = vmatpush1.msra.mxu0 %v4224
        %4609 = vmatprep.subr.mxu0 0.0
        %4610 = vmatpush1.msra.mxu0 %v4225
        %4611 = vmatprep.subr.mxu0 0.0
        %4612 = vmatpush1.msra.mxu0 %v4226
        %4613 = vmatprep.subr.mxu0 0.0
        %4614 = vmatpush1.msra.mxu0 %v4227
        %4615 = vmatprep.subr.mxu0 0.0
        %4616 = vmatpush1.msra.mxu0 %v4228
        %4617 = vmatprep.subr.mxu0 0.0
        %4618 = vmatpush1.msra.mxu0 %v4229
        %4619 = vmatprep.subr.mxu0 0.0
        %4620 = vmatpush1.msra.mxu0 %v4230
        %4621 = vmatprep.subr.mxu0 0.0
        %4622 = vmatpush1.msra.mxu0 %v4231
        %4623 = vmatprep.subr.mxu0 0.0
        %4624 = vmatpush1.msra.mxu0 %v4232
        %4625 = vmatprep.subr.mxu0 0.0
        %4626 = vmatpush1.msra.mxu0 %v4233
        %4627 = vmatprep.subr.mxu0 0.0
        %4628 = vmatpush1.msra.mxu0 %v4234
        %4629 = vmatprep.subr.mxu0 0.0
        %4630 = vmatpush1.msra.mxu0 %v4235
        %4631 = vmatprep.subr.mxu0 0.0
        %4632 = vmatpush1.msra.mxu0 %v4236
        %4633 = vmatprep.subr.mxu0 0.0
        %4634 = vmatpush1.msra.mxu0 %v4237
        %4635 = vmatprep.subr.mxu0 0.0
        %4636 = vmatpush1.msra.mxu0 %v4238
        %4637 = vmatprep.subr.mxu0 0.0
        %4638 = vmatpush1.msra.mxu0 %v4239
        %4639 = vmatprep.subr.mxu0 0.0
        %4640 = vmatpush1.msra.mxu0 %v4240
        %4641 = vmatprep.subr.mxu0 0.0
        %4642 = vmatpush1.msra.mxu0 %v4241
        %4643 = vmatprep.subr.mxu0 0.0
        %4644 = vmatpush1.msra.mxu0 %v4242
        %4645 = vmatprep.subr.mxu0 0.0
        %4646 = vmatpush1.msra.mxu0 %v4243
        %4647 = vmatprep.subr.mxu0 0.0
        %4648 = vmatpush1.msra.mxu0 %v4244
        %4649 = vmatprep.subr.mxu0 0.0
        %4650 = vmatpush1.msra.mxu0 %v4245
        %4651 = vmatprep.subr.mxu0 0.0
        %4652 = vmatpush1.msra.mxu0 %v4246
        %4653 = vmatprep.mubr.f32.mxu0 %v4110
        %4654 = vmatmul.mubr.f32.gmra.mrb[0].mxu0 %v4109
        %v4655 = vpop.f32.mrb[0].mxu0
        %v4656 = vadd.f32 %v4586, %v4655
        %v4657 = vpop.f32.mrb[0].mxu0
        %4658 = vdwg.mxu0
        %4659 = vmatprep.subr.mxu0 0.0
        %4660 = vmatpush1.msra.mxu0 %v4247
        %4661 = vmatprep.subr.mxu0 0.0
        %4662 = vmatpush1.msra.mxu0 %v4248
        %4663 = vmatprep.subr.mxu0 0.0
        %4664 = vmatpush1.msra.mxu0 %v4249
        %4665 = vmatprep.subr.mxu0 0.0
        %4666 = vmatpush1.msra.mxu0 %v4250
        %4667 = vmatprep.subr.mxu0 0.0
        %4668 = vmatpush1.msra.mxu0 %v4251
        %4669 = vmatprep.subr.mxu0 0.0
        %4670 = vmatpush1.msra.mxu0 %v4252
        %4671 = vmatprep.subr.mxu0 0.0
        %4672 = vmatpush1.msra.mxu0 %v4253
        %4673 = vmatprep.subr.mxu0 0.0
        %4674 = vmatpush1.msra.mxu0 %v4254
        %4675 = vmatprep.subr.mxu0 0.0
        %4676 = vmatpush1.msra.mxu0 %v4255
        %4677 = vmatprep.subr.mxu0 0.0
        %4678 = vmatpush1.msra.mxu0 %v4256
        %4679 = vmatprep.subr.mxu0 0.0
        %4680 = vmatpush1.msra.mxu0 %v4257
        %4681 = vmatprep.subr.mxu0 0.0
        %4682 = vmatpush1.msra.mxu0 %v4258
        %4683 = vmatprep.subr.mxu0 0.0
        %4684 = vmatpush1.msra.mxu0 %v4259
        %4685 = vmatprep.subr.mxu0 0.0
        %4686 = vmatpush1.msra.mxu0 %v4260
        %4687 = vmatprep.subr.mxu0 0.0
        %4688 = vmatpush1.msra.mxu0 %v4261
        %4689 = vmatprep.subr.mxu0 0.0
        %4690 = vmatpush1.msra.mxu0 %v4262
        %4691 = vmatprep.subr.mxu0 0.0
        %4692 = vmatpush1.msra.mxu0 %v4263
        %4693 = vmatprep.subr.mxu0 0.0
        %4694 = vmatpush1.msra.mxu0 %v4264
        %4695 = vmatprep.subr.mxu0 0.0
        %4696 = vmatpush1.msra.mxu0 %v4265
        %4697 = vmatprep.subr.mxu0 0.0
        %4698 = vmatpush1.msra.mxu0 %v4266
        %4699 = vmatprep.subr.mxu0 0.0
        %4700 = vmatpush1.msra.mxu0 %v4267
        %4701 = vmatprep.subr.mxu0 0.0
        %4702 = vmatpush1.msra.mxu0 %v4268
        %4703 = vmatprep.subr.mxu0 0.0
        %4704 = vmatpush1.msra.mxu0 %v4269
        %4705 = vmatprep.subr.mxu0 0.0
        %4706 = vmatpush1.msra.mxu0 %v4270
        %4707 = vmatprep.subr.mxu0 0.0
        %4708 = vmatpush1.msra.mxu0 %v4271
        %4709 = vmatprep.subr.mxu0 0.0
        %4710 = vmatpush1.msra.mxu0 %v4272
        %4711 = vmatprep.subr.mxu0 0.0
        %4712 = vmatpush1.msra.mxu0 %v4273
        %4713 = vmatprep.subr.mxu0 0.0
        %4714 = vmatpush1.msra.mxu0 %v4274
        %4715 = vmatprep.subr.mxu0 0.0
        %4716 = vmatpush1.msra.mxu0 %v4275
        %4717 = vmatprep.subr.mxu0 0.0
        %4718 = vmatpush1.msra.mxu0 %v4276
        %4719 = vmatprep.subr.mxu0 0.0
        %4720 = vmatpush1.msra.mxu0 %v4277
        %4721 = vmatprep.subr.mxu0 0.0
        %4722 = vmatpush1.msra.mxu0 %v4278
        %4723 = vmatprep.mubr.f32.mxu0 %v4112
        %4724 = vmatmul.mubr.f32.gmra.mrb[0].mxu0 %v4111
        %v4725 = vpop.f32.mrb[0].mxu0
        %v4726 = vadd.f32 %v4656, %v4725
        %v4727 = vpop.f32.mrb[0].mxu0
        %4728 = vdwg.mxu0
        %4729 = vmatprep.subr.mxu0 0.0
        %4730 = vmatpush1.msra.mxu0 %v4279
        %4731 = vmatprep.subr.mxu0 0.0
        %4732 = vmatpush1.msra.mxu0 %v4280
        %4733 = vmatprep.subr.mxu0 0.0
        %4734 = vmatpush1.msra.mxu0 %v4281
        %4735 = vmatprep.subr.mxu0 0.0
        %4736 = vmatpush1.msra.mxu0 %v4282
        %4737 = vmatprep.subr.mxu0 0.0
        %4738 = vmatpush1.msra.mxu0 %v4283
        %4739 = vmatprep.subr.mxu0 0.0
        %4740 = vmatpush1.msra.mxu0 %v4284
        %4741 = vmatprep.subr.mxu0 0.0
        %4742 = vmatpush1.msra.mxu0 %v4285
        %4743 = vmatprep.subr.mxu0 0.0
        %4744 = vmatpush1.msra.mxu0 %v4286
        %4745 = vmatprep.subr.mxu0 0.0
        %4746 = vmatpush1.msra.mxu0 %v4287
        %4747 = vmatprep.subr.mxu0 0.0
        %4748 = vmatpush1.msra.mxu0 %v4288
        %4749 = vmatprep.subr.mxu0 0.0
        %4750 = vmatpush1.msra.mxu0 %v4289
        %4751 = vmatprep.subr.mxu0 0.0
        %4752 = vmatpush1.msra.mxu0 %v4290
        %4753 = vmatprep.subr.mxu0 0.0
        %4754 = vmatpush1.msra.mxu0 %v4291
        %4755 = vmatprep.subr.mxu0 0.0
        %4756 = vmatpush1.msra.mxu0 %v4292
        %4757 = vmatprep.subr.mxu0 0.0
        %4758 = vmatpush1.msra.mxu0 %v4293
        %4759 = vmatprep.subr.mxu0 0.0
        %4760 = vmatpush1.msra.mxu0 %v4294
        %4761 = vmatprep.subr.mxu0 0.0
        %4762 = vmatpush1.msra.mxu0 %v4295
        %4763 = vmatprep.subr.mxu0 0.0
        %4764 = vmatpush1.msra.mxu0 %v4296
        %4765 = vmatprep.subr.mxu0 0.0
        %4766 = vmatpush1.msra.mxu0 %v4297
        %4767 = vmatprep.subr.mxu0 0.0
        %4768 = vmatpush1.msra.mxu0 %v4298
        %4769 = vmatprep.subr.mxu0 0.0
        %4770 = vmatpush1.msra.mxu0 %v4299
        %4771 = vmatprep.subr.mxu0 0.0
        %4772 = vmatpush1.msra.mxu0 %v4300
        %4773 = vmatprep.subr.mxu0 0.0
        %4774 = vmatpush1.msra.mxu0 %v4301
        %4775 = vmatprep.subr.mxu0 0.0
        %4776 = vmatpush1.msra.mxu0 %v4302
        %4777 = vmatprep.subr.mxu0 0.0
        %4778 = vmatpush1.msra.mxu0 %v4303
        %4779 = vmatprep.subr.mxu0 0.0
        %4780 = vmatpush1.msra.mxu0 %v4304
        %4781 = vmatprep.subr.mxu0 0.0
        %4782 = vmatpush1.msra.mxu0 %v4305
        %4783 = vmatprep.subr.mxu0 0.0
        %4784 = vmatpush1.msra.mxu0 %v4306
        %4785 = vmatprep.subr.mxu0 0.0
        %4786 = vmatpush1.msra.mxu0 %v4307
        %4787 = vmatprep.subr.mxu0 0.0
        %4788 = vmatpush1.msra.mxu0 %v4308
        %4789 = vmatprep.subr.mxu0 0.0
        %4790 = vmatpush1.msra.mxu0 %v4309
        %4791 = vmatprep.subr.mxu0 0.0
        %4792 = vmatpush1.msra.mxu0 %v4310
        %4793 = vmatprep.mubr.f32.mxu0 %v4114
        %4794 = vmatmul.mubr.f32.gmra.mrb[0].mxu0 %v4113
        %v4795 = vpop.f32.mrb[0].mxu0
        %v4796 = vadd.f32 %v4726, %v4795
        %v4797 = vpop.f32.mrb[0].mxu0
        %4798 = vdwg.mxu0
        %4799 = vmatprep.subr.mxu0 0.0
        %4800 = vmatpush1.msra.mxu0 %v4311
        %4801 = vmatprep.subr.mxu0 0.0
        %4802 = vmatpush1.msra.mxu0 %v4312
        %4803 = vmatprep.subr.mxu0 0.0
        %4804 = vmatpush1.msra.mxu0 %v4313
        %4805 = vmatprep.subr.mxu0 0.0
        %4806 = vmatpush1.msra.mxu0 %v4314
        %4807 = vmatprep.subr.mxu0 0.0
        %4808 = vmatpush1.msra.mxu0 %v4315
        %4809 = vmatprep.subr.mxu0 0.0
        %4810 = vmatpush1.msra.mxu0 %v4316
        %4811 = vmatprep.subr.mxu0 0.0
        %4812 = vmatpush1.msra.mxu0 %v4317
        %4813 = vmatprep.subr.mxu0 0.0
        %4814 = vmatpush1.msra.mxu0 %v4318
        %4815 = vmatprep.subr.mxu0 0.0
        %4816 = vmatpush1.msra.mxu0 %v4319
        %4817 = vmatprep.subr.mxu0 0.0
        %4818 = vmatpush1.msra.mxu0 %v4320
        %4819 = vmatprep.subr.mxu0 0.0
        %4820 = vmatpush1.msra.mxu0 %v4321
        %4821 = vmatprep.subr.mxu0 0.0
        %4822 = vmatpush1.msra.mxu0 %v4322
        %4823 = vmatprep.subr.mxu0 0.0
        %4824 = vmatpush1.msra.mxu0 %v4323
        %4825 = vmatprep.subr.mxu0 0.0
        %4826 = vmatpush1.msra.mxu0 %v4324
        %4827 = vmatprep.subr.mxu0 0.0
        %4828 = vmatpush1.msra.mxu0 %v4325
        %4829 = vmatprep.subr.mxu0 0.0
        %4830 = vmatpush1.msra.mxu0 %v4326
        %4831 = vmatprep.subr.mxu0 0.0
        %4832 = vmatpush1.msra.mxu0 %v4327
        %4833 = vmatprep.subr.mxu0 0.0
        %4834 = vmatpush1.msra.mxu0 %v4328
        %4835 = vmatprep.subr.mxu0 0.0
        %4836 = vmatpush1.msra.mxu0 %v4329
        %4837 = vmatprep.subr.mxu0 0.0
        %4838 = vmatpush1.msra.mxu0 %v4330
        %4839 = vmatprep.subr.mxu0 0.0
        %4840 = vmatpush1.msra.mxu0 %v4331
        %4841 = vmatprep.subr.mxu0 0.0
        %4842 = vmatpush1.msra.mxu0 %v4332
        %4843 = vmatprep.subr.mxu0 0.0
        %4844 = vmatpush1.msra.mxu0 %v4333
        %4845 = vmatprep.subr.mxu0 0.0
        %4846 = vmatpush1.msra.mxu0 %v4334
        %4847 = vmatprep.subr.mxu0 0.0
        %4848 = vmatpush1.msra.mxu0 %v4335
        %4849 = vmatprep.subr.mxu0 0.0
        %4850 = vmatpush1.msra.mxu0 %v4336
        %4851 = vmatprep.subr.mxu0 0.0
        %4852 = vmatpush1.msra.mxu0 %v4337
        %4853 = vmatprep.subr.mxu0 0.0
        %4854 = vmatpush1.msra.mxu0 %v4338
        %4855 = vmatprep.subr.mxu0 0.0
        %4856 = vmatpush1.msra.mxu0 %v4339
        %4857 = vmatprep.subr.mxu0 0.0
        %4858 = vmatpush1.msra.mxu0 %v4340
        %4859 = vmatprep.subr.mxu0 0.0
        %4860 = vmatpush1.msra.mxu0 %v4341
        %4861 = vmatprep.subr.mxu0 0.0
        %4862 = vmatpush1.msra.mxu0 %v4342
        %4863 = vmatprep.mubr.f32.mxu0 %v4116
        %4864 = vmatmul.mubr.f32.gmra.mrb[0].mxu0 %v4115
        %v4865 = vpop.f32.mrb[0].mxu0
        %v4866 = vadd.f32 %v4796, %v4865
        %v4867 = vpop.f32.mrb[0].mxu0
        %4868 = vdwg.mxu0
        %4869 = vmatprep.subr.mxu0 0.0
        %4870 = vmatpush1.msra.mxu0 %v4343
        %4871 = vmatprep.subr.mxu0 0.0
        %4872 = vmatpush1.msra.mxu0 %v4344
        %4873 = vmatprep.subr.mxu0 0.0
        %4874 = vmatpush1.msra.mxu0 %v4345
        %4875 = vmatprep.subr.mxu0 0.0
        %4876 = vmatpush1.msra.mxu0 %v4346
        %4877 = vmatprep.subr.mxu0 0.0
        %4878 = vmatpush1.msra.mxu0 %v4347
        %4879 = vmatprep.subr.mxu0 0.0
        %4880 = vmatpush1.msra.mxu0 %v4348
        %4881 = vmatprep.subr.mxu0 0.0
        %4882 = vmatpush1.msra.mxu0 %v4349
        %4883 = vmatprep.subr.mxu0 0.0
        %4884 = vmatpush1.msra.mxu0 %v4350
        %4885 = vmatprep.subr.mxu0 0.0
        %4886 = vmatpush1.msra.mxu0 %v4351
        %4887 = vmatprep.subr.mxu0 0.0
        %4888 = vmatpush1.msra.mxu0 %v4352
        %4889 = vmatprep.subr.mxu0 0.0
        %4890 = vmatpush1.msra.mxu0 %v4353
        %4891 = vmatprep.subr.mxu0 0.0
        %4892 = vmatpush1.msra.mxu0 %v4354
        %4893 = vmatprep.subr.mxu0 0.0
        %4894 = vmatpush1.msra.mxu0 %v4355
        %4895 = vmatprep.subr.mxu0 0.0
        %4896 = vmatpush1.msra.mxu0 %v4356
        %4897 = vmatprep.subr.mxu0 0.0
        %4898 = vmatpush1.msra.mxu0 %v4357
        %4899 = vmatprep.subr.mxu0 0.0
        %4900 = vmatpush1.msra.mxu0 %v4358
        %4901 = vmatprep.subr.mxu0 0.0
        %4902 = vmatpush1.msra.mxu0 %v4359
        %4903 = vmatprep.subr.mxu0 0.0
        %4904 = vmatpush1.msra.mxu0 %v4360
        %4905 = vmatprep.subr.mxu0 0.0
        %4906 = vmatpush1.msra.mxu0 %v4361
        %4907 = vmatprep.subr.mxu0 0.0
        %4908 = vmatpush1.msra.mxu0 %v4362
        %4909 = vmatprep.subr.mxu0 0.0
        %4910 = vmatpush1.msra.mxu0 %v4363
        %4911 = vmatprep.subr.mxu0 0.0
        %4912 = vmatpush1.msra.mxu0 %v4364
        %4913 = vmatprep.subr.mxu0 0.0
        %4914 = vmatpush1.msra.mxu0 %v4365
        %4915 = vmatprep.subr.mxu0 0.0
        %4916 = vmatpush1.msra.mxu0 %v4366
        %4917 = vmatprep.subr.mxu0 0.0
        %4918 = vmatpush1.msra.mxu0 %v4367
        %4919 = vmatprep.subr.mxu0 0.0
        %4920 = vmatpush1.msra.mxu0 %v4368
        %4921 = vmatprep.subr.mxu0 0.0
        %4922 = vmatpush1.msra.mxu0 %v4369
        %4923 = vmatprep.subr.mxu0 0.0
        %4924 = vmatpush1.msra.mxu0 %v4370
        %4925 = vmatprep.subr.mxu0 0.0
        %4926 = vmatpush1.msra.mxu0 %v4371
        %4927 = vmatprep.subr.mxu0 0.0
        %4928 = vmatpush1.msra.mxu0 %v4372
        %4929 = vmatprep.subr.mxu0 0.0
        %4930 = vmatpush1.msra.mxu0 %v4373
        %4931 = vmatprep.subr.mxu0 0.0
        %4932 = vmatpush1.msra.mxu0 %v4374
        %4933 = vmatprep.mubr.f32.mxu0 %v4118
        %4934 = vmatmul.mubr.f32.gmra.mrb[0].mxu0 %v4117
        %v4935 = vpop.f32.mrb[0].mxu0
        %v4936 = vadd.f32 %v4866, %v4935
        %v4937 = vpop.f32.mrb[0].mxu0
        %4938 = vdwg.mxu0
        %v4939 = vadd.f32 %v3194, %v4936
        %4940 = vadd.xlane.f32.xlu0 %v4939
        %v4941 = vpop.xlane.xlu0 %4940
        %v4942 = vmul.f32 %v4941, 0.025
        %v4943 = vsub.f32 %v4939, %v4942
        %v4944 = vmul.f32 %v4943, %v474
        %v4945 = vmul.f32 %v4944, %v4944
        %4946 = vadd.xlane.f32.xlu0 %v4945
        %v4947 = vpop.xlane.xlu0 %4946
        %v4948 = vmul.f32 %v4947, 0.025
        %v4949 = vadd.f32 %v4948, 1e-05
        %v4950 = vrsqrt.pop %v4949
        %v4951 = vmul.f32 %v4944, %v4950
        %v4952 = vlaneseq
        %v4953 = vshrl.u32 %v4952, 7
        %v4954 = vsub.s32 4, %v4953
        %v4955 = vrot.slane %v559, %v4954
        %v4956 = vmul.f32 %v4951, %v4955
        %v4957 = vlaneseq
        %v4958 = vshrl.u32 %v4957, 7
        %v4959 = vsub.s32 5, %v4958
        %v4960 = vrot.slane %v559, %v4959
        %v4961 = vadd.f32 %v4956, %v4960
        %v4962 = vld [vmem:[#allocation8] sm:$0xff]
        %v4963 = vld [vmem:[#allocation8 + $0x8] sm:$0xff]
        %v4964 = vld [vmem:[#allocation8 + $0x10] sm:$0xff]
        %v4965 = vld [vmem:[#allocation8 + $0x18] sm:$0xff]
        %v4966 = vld [vmem:[#allocation8 + $0x20] sm:$0xff]
        %v4967 = vld [vmem:[#allocation8 + $0x28] sm:$0xff]
        %v4968 = vld [vmem:[#allocation8 + $0x30] sm:$0xff]
        %v4969 = vld [vmem:[#allocation8 + $0x38] sm:$0xff]
        %v4970 = vld [vmem:[#allocation8 + $0x40] sm:$0xff]
        %v4971 = vld [vmem:[#allocation8 + $0x48] sm:$0xff]
        %v4972 = vld [vmem:[#allocation8 + $0x50] sm:$0xff]
        %v4973 = vld [vmem:[#allocation8 + $0x58] sm:$0xff]
        %v4974 = vld [vmem:[#allocation8 + $0x60] sm:$0xff]
        %v4975 = vld [vmem:[#allocation8 + $0x68] sm:$0xff]
        %v4976 = vld [vmem:[#allocation8 + $0x70] sm:$0xff]
        %v4977 = vld [vmem:[#allocation8 + $0x78] sm:$0xff]
        %v4978 = vld [vmem:[%s11] sm:$0x1]
        %v4980 = vrot.slane %v4961, 7
        %4982 = vmatprep.subr.mxu0 0.0
        %4983 = vmatpush1.msra.mxu0 %v4962
        %4984 = vmatprep.subr.mxu0 0.0
        %4985 = vmatpush1.msra.mxu0 %v4963
        %4986 = vmatprep.subr.mxu0 0.0
        %4987 = vmatpush1.msra.mxu0 %v4964
        %4988 = vmatprep.subr.mxu0 0.0
        %4989 = vmatpush1.msra.mxu0 %v4965
        %4990 = vmatprep.subr.mxu0 0.0
        %4991 = vmatpush1.msra.mxu0 %v4966
        %4992 = vmatprep.subr.mxu0 0.0
        %4993 = vmatpush1.msra.mxu0 %v4967
        %4994 = vmatprep.subr.mxu0 0.0
        %4995 = vmatpush1.msra.mxu0 %v4968
        %4996 = vmatprep.subr.mxu0 0.0
        %4997 = vmatpush1.msra.mxu0 %v4969
        %4998 = vmatprep.subr.mxu0 0.0
        %4999 = vmatpush1.msra.mxu0 %v4970
        %5000 = vmatprep.subr.mxu0 0.0
        %5001 = vmatpush1.msra.mxu0 %v4971
        %5002 = vmatprep.subr.mxu0 0.0
        %5003 = vmatpush1.msra.mxu0 %v4972
        %5004 = vmatprep.subr.mxu0 0.0
        %5005 = vmatpush1.msra.mxu0 %v4973
        %5006 = vmatprep.subr.mxu0 0.0
        %5007 = vmatpush1.msra.mxu0 %v4974
        %5008 = vmatprep.subr.mxu0 0.0
        %5009 = vmatpush1.msra.mxu0 %v4975
        %5010 = vmatprep.subr.mxu0 0.0
        %5011 = vmatpush1.msra.mxu0 %v4976
        %5012 = vmatprep.subr.mxu0 0.0
        %5013 = vmatpush1.msra.mxu0 %v4977
        %5014 = vmatprep.subr.mxu0 0.0
        %5015 = vmatpush1.msra.mxu0 0.0
        %5016 = vmatprep.subr.mxu0 0.0
        %5017 = vmatpush1.msra.mxu0 0.0
        %5018 = vmatprep.subr.mxu0 0.0
        %5019 = vmatpush1.msra.mxu0 0.0
        %5020 = vmatprep.subr.mxu0 0.0
        %5021 = vmatpush1.msra.mxu0 0.0
        %5022 = vmatprep.subr.mxu0 0.0
        %5023 = vmatpush1.msra.mxu0 0.0
        %5024 = vmatprep.subr.mxu0 0.0
        %5025 = vmatpush1.msra.mxu0 0.0
        %5026 = vmatprep.subr.mxu0 0.0
        %5027 = vmatpush1.msra.mxu0 0.0
        %5028 = vmatprep.subr.mxu0 0.0
        %5029 = vmatpush1.msra.mxu0 0.0
        %5030 = vmatprep.subr.mxu0 0.0
        %5031 = vmatpush1.msra.mxu0 0.0
        %5032 = vmatprep.subr.mxu0 0.0
        %5033 = vmatpush1.msra.mxu0 0.0
        %5034 = vmatprep.subr.mxu0 0.0
        %5035 = vmatpush1.msra.mxu0 0.0
        %5036 = vmatprep.subr.mxu0 0.0
        %5037 = vmatpush1.msra.mxu0 0.0
        %5038 = vmatprep.subr.mxu0 0.0
        %5039 = vmatpush1.msra.mxu0 0.0
        %5040 = vmatprep.subr.mxu0 0.0
        %5041 = vmatpush1.msra.mxu0 0.0
        %5042 = vmatprep.subr.mxu0 0.0
        %5043 = vmatpush1.msra.mxu0 0.0
        %5044 = vmatprep.subr.mxu0 0.0
        %5045 = vmatpush1.msra.mxu0 0.0
        %5046 = vmatprep.mubr.f32.mxu0 0.0
        %5047 = vmatmul.mubr.f32.gmra.mrb[0].mxu0 %v4980
        %v5048 = vpop.f32.mrb[0].mxu0
        %v5049 = vadd.f32 %v4978, %v5048
        %v5050 = vpop.f32.mrb[0].mxu0
        %5051 = vdwg.mxu0
        %5052 = vst [vmem:[%s469] sm:$0x1] %v5049
        %s5053 = sand.u32 %s296, 1
        %s5054 = scalar_lea.sflag [#allocation4], %s5053
        %s5055 = sand.u32 %s296, 1
        %s5056 = scalar_lea.vmem [#allocation10], %s5055
        // Predicated region
        $region85: #{rowwise_transformer_forward.1} parent=67 // pred_check
          %p5057 = pneg %p306
        $region86: #{rowwise_transformer_forward.1} parent=67 // pred_check_branch
          %5059 = sbr.rel (%p5057) target = $region88
        $region87: #{rowwise_transformer_forward.1} parent=67 // pred_region
          %s5061 = ssub.s32 16, 16
          %5062 = vsyncadd %s5054, %s5061
          %s5063 = smul.addr %s31, 16
          %s5064 = scalar_lea.hbm %s12, %s5063
          %s5066 = sshll.u32 %s5056, 4
          %s5067 = int_to_ptr.vmem [resolvable:$true] %s5066
          %5069 = dma.vmem_to_hbm [thread:$0]  %s5067, 16, %s5064, %s5054
        $region88: #{rowwise_transformer_forward.1} parent=67 // pred_fallthru
          _
      $region68: #{rowwise_transformer_forward.1} parent=5 // pred_fallthru
        _
      %p5070 = scmp.le.s32.totalorder 2, %s26
      // Predicated region
      $region89: #{rowwise_transformer_forward.1} parent=5 // pred_check
        %p5071 = pneg %p5070
      $region90: #{rowwise_transformer_forward.1} parent=5 // pred_check_branch
        %5073 = sbr.rel (%p5071) target = $region92
      $region91: #{rowwise_transformer_forward.1} parent=5 // pred_region
        %s5074 = ssub.s32 %s26, 2
        // Predicated region
        $region93: #{rowwise_transformer_forward.1} parent=91 // pred_check
          %p5075 = pneg %p312
        $region94: #{rowwise_transformer_forward.1} parent=91 // pred_check_branch
          %5077 = sbr.rel (%p5075) target = $region96
        $region95: #{rowwise_transformer_forward.1} parent=91 // pred_region
          %s5078 = sand.u32 %s297, 1
          %s5079 = scalar_lea.sflag [#allocation4], %s5078
          %s5080 = sand.u32 %s297, 1
          %s5081 = scalar_lea.vmem [#allocation10], %s5080
          %5082 = dma.done %s5079, 16
        $region96: #{rowwise_transformer_forward.1} parent=91 // pred_fallthru
          _
      $region92: #{rowwise_transformer_forward.1} parent=5 // pred_fallthru
        _
    $region6: #{rowwise_transformer_forward.1} parent=1 // loop_footer
      %s30 = sadd.s32 1, %s26
    $region7: #{rowwise_transformer_forward.1} parent=1 // loop_footer_branch
      %25 = sbr.rel target = $region3
    $region8: #{rowwise_transformer_forward.1} parent=1 // loop_exit
      _
    %5083 = vsyncpa [#allocation3], 1
    %s5084 = scalar_lea.sflag [#allocation3], 1
    %5085 = vsyncpa %s5084, 1
    %5086 = vsyncpa [#allocation6], 1
    %5087 = vsyncpa [#allocation9], 1
    %5088 = vsyncpa [#allocation4], 1
    %s5089 = scalar_lea.sflag [#allocation4], 1
    %5090 = vsyncpa %s5089, 1

</llo_original>
